<compile_context>
chip_gen: v7x
topology: tpu7x:2x2x1
jax: 0.10.0
libtpu: 0.0.40
codegen_flags: <defaults>
</compile_context>

<pallas_src>
import functools

import jax
import jax.numpy as jnp
from jax import lax
from jax.experimental import pallas as pl
from jax.experimental.pallas import tpu as pltpu


def _round_up(x, m):
    return (x + m - 1) // m * m


def transe_kernel(h_ref, r_ref, t_ref, tabT_ref, o_ref, *, ne_pad):
    """One batch tile of TB triples.

    h/r/t_ref : (1, TB)        int32 indices for this tile
    tabT_ref  : (D_pad, Ntot)  f32 concatenated [entity | relation] table,
                               transposed (embedding dim on sublanes)
    o_ref     : (1, TB)        f32 L1 scores for this tile (lane-dense)
    """
    tb = h_ref.shape[-1]
    ntot = tabT_ref.shape[-1]

    # Build the row-index iota once (JAX does not CSE broadcast_in_dim).
    rows = lax.broadcasted_iota(jnp.int32, (ntot, tb), 0)

    # Signed selector S = onehot(h) + onehot(Ne_pad + r) - onehot(t).
    # Values are in {-1, 0, +1}; h == t cancels exactly to 0, relation rows
    # live in the [Ne_pad, Ne_pad + Nr_pad) column block so they never collide.
    sel = ((rows == h_ref[...]).astype(jnp.float32)
           + (rows == (r_ref[...] + ne_pad)).astype(jnp.float32)
           - (rows == t_ref[...]).astype(jnp.float32))

    # One MXU matmul produces diff = e[h] + rel[r] - e[t] directly:
    #   (D_pad, Ntot) @ (Ntot, TB) -> (D_pad, TB)
    # HIGHEST precision keeps the f32 table exact through the MXU (the
    # selector operand is exactly representable), so this matches a true
    # gather; the MXU is otherwise idle in this kernel so the extra passes
    # are off the critical path.
    diff = jnp.dot(tabT_ref[...], sel,
                   preferred_element_type=jnp.float32,
                   precision=lax.Precision.HIGHEST)

    # L1 norm over the embedding (sublane) axis -> lane-dense (1, TB).
    o_ref[...] = jnp.sum(jnp.abs(diff), axis=0, keepdims=True)


def prepare_transe_tables(entity_emb, relation_emb):
    """Pad + transpose + concatenate the embedding tables ONCE (hoisted out of
    the per-call forward; do this at parameter-init / update time)."""
    Ne, D = entity_emb.shape
    Nr, Dr = relation_emb.shape
    assert Dr == D

    D_pad = _round_up(D, 8)        # embedding dim on sublanes
    Ne_pad = _round_up(Ne, 128)    # table rows on lanes
    Nr_pad = _round_up(Nr, 128)

    ent_T = jnp.pad(entity_emb.astype(jnp.float32).T,
                    ((0, D_pad - D), (0, Ne_pad - Ne)))
    rel_T = jnp.pad(relation_emb.astype(jnp.float32).T,
                    ((0, D_pad - D), (0, Nr_pad - Nr)))
    tab_T = jnp.concatenate([ent_T, rel_T], axis=1)   # (D_pad, Ne_pad + Nr_pad)
    return tab_T, Ne_pad


def transe_forward_prepared(tab_T, ne_pad, h, r, t, *, tile_b=256):
    """tab_T: (D_pad, Ntot) prepared table, h/r/t: (B,) int -> (B,) f32."""
    B = h.shape[0]
    D_pad, Ntot = tab_T.shape

    B_pad = _round_up(B, tile_b)
    n_tiles = B_pad // tile_b

    # VMEM budget: single-buffered resident table + one (Ntot, TB) selector
    # + (D_pad, TB) diff + double-buffered index/output tiles.
    table_bytes = D_pad * Ntot * 4
    sel_bytes = Ntot * tile_b * 4
    vmem_needed = (table_bytes
                   + sel_bytes
                   + D_pad * tile_b * 4
                   + 16 * tile_b * 4)
    if vmem_needed > 40 * 1024 * 1024:
        # TODO(synk): large tables need the DMA-gather path (memory_space=pl.ANY
        # tables + scalar-prefetched indices + per-row make_async_copy gathers).
        raise NotImplementedError("embedding tables too large for VMEM-resident path")
    vmem_limit = int(min(max(2 * vmem_needed + (4 << 20), 16 << 20), 48 << 20))

    def pad_idx(x):
        return jnp.pad(x.astype(jnp.int32), (0, B_pad - B)).reshape(1, B_pad)

    h2, r2, t2 = pad_idx(h), pad_idx(r), pad_idx(t)

    idx_spec = pl.BlockSpec((1, tile_b), lambda i: (0, i))

    cost = pl.CostEstimate(
        flops=2 * D_pad * Ntot * tile_b * n_tiles,
        transcendentals=0,
        bytes_accessed=table_bytes + 3 * B_pad * 4 + B_pad * 4,
    )

    def build(table_spec):
        return pl.pallas_call(
            functools.partial(transe_kernel, ne_pad=ne_pad),
            out_shape=jax.ShapeDtypeStruct((1, B_pad), jnp.float32),
            grid_spec=pltpu.PrefetchScalarGridSpec(
                num_scalar_prefetch=0,
                grid=(n_tiles,),
                in_specs=[
                    idx_spec,     # h indices
                    idx_spec,     # r indices
                    idx_spec,     # t indices
                    table_spec,   # resident concatenated table
                ],
                out_specs=pl.BlockSpec((1, tile_b), lambda i: (0, i)),
            ),
            compiler_params=pltpu.CompilerParams(
                dimension_semantics=("parallel",),   # independent batch tiles
                vmem_limit_bytes=vmem_limit,
            ),
            cost_estimate=cost,
        )

    try:
        # Constant index_map -> single-buffer the resident table (halves its
        # VMEM reservation; double-buffering buys nothing here).
        tab_spec = pl.BlockSpec((D_pad, Ntot), lambda i: (0, 0),
                                pipeline_mode=pl.Buffered(1))
        out = build(tab_spec)(h2, r2, t2, tab_T)
    except Exception:  # fallback if this JAX build rejects pipeline_mode here
        tab_spec = pl.BlockSpec((D_pad, Ntot), lambda i: (0, 0))
        out = build(tab_spec)(h2, r2, t2, tab_T)

    return out[0, :B]


def transe_forward(entity_emb, relation_emb, h, r, t, *, tile_b=256):
    """Convenience wrapper matching the original API (prefer preparing the
    table once via prepare_transe_tables for repeated calls)."""
    tab_T, ne_pad = prepare_transe_tables(entity_emb, relation_emb)
    return transe_forward_prepared(tab_T, ne_pad, h, r, t, tile_b=tile_b)


if __name__ == "__main__":
    num_entities, num_relations, emb_dim = 32, 16, 128
    batch = 8

    key = jax.random.PRNGKey(0)
    k_ent, k_rel, k_h, k_r, k_t = jax.random.split(key, 5)

    # nn.Embedding default init: N(0, 1)
    entity_emb = jax.random.normal(k_ent, (num_entities, emb_dim), jnp.float32)
    relation_emb = jax.random.normal(k_rel, (num_relations, emb_dim), jnp.float32)

    h = jax.random.randint(k_h, (batch,), 0, num_entities, jnp.int32)
    r = jax.random.randint(k_r, (batch,), 0, num_relations, jnp.int32)
    t = jax.random.randint(k_t, (batch,), 0, num_entities, jnp.int32)

    # Hoisted out of the forward: pad + transpose + concat the tables once.
    tab_T, ne_pad = prepare_transe_tables(entity_emb, relation_emb)

    score = jax.block_until_ready(
        transe_forward_prepared(tab_T, ne_pad, h, r, t))

    # Pure-JAX reference for correctness.
    ref = jnp.sum(
        jnp.abs(entity_emb[h] + relation_emb[r] - entity_emb[t]), axis=1)

    assert score.shape == (batch,)
    # HIGHEST-precision MXU gather keeps the f32 table exact, so the
    # tolerance is tight again.
    assert jnp.allclose(score, ref, rtol=1e-5, atol=1e-4), (score, ref)
    print("KERNEL_OK")
</pallas_src>

<mosaic_0001>
module attributes {stable_mosaic.version = 11 : i64} {
  func.func @transe_kernel(%arg0: i32, %arg1: memref<1x256xi32, #tpu.memory_space<vmem>>, %arg2: memref<1x256xi32, #tpu.memory_space<vmem>>, %arg3: memref<1x256xi32, #tpu.memory_space<vmem>>, %arg4: memref<128x256xf32, #tpu.memory_space<vmem>>, %arg5: memref<1x256xf32, #tpu.memory_space<vmem>>) attributes {dimension_semantics = [#tpu.dimension_semantics<parallel>], iteration_bounds = array<i64: 1>, scalar_prefetch = 0 : i64, scratch_operands = 0 : i64, tpu.core_type = #tpu.core_type<tc>, window_params = [{transform_indices = @transform_0, window_bounds = array<i64: 1, 256>}, {transform_indices = @transform_1, window_bounds = array<i64: 1, 256>}, {transform_indices = @transform_2, window_bounds = array<i64: 1, 256>}, {pipeline_mode = #tpu.pipeline_mode<synchronous>, transform_indices = @transform_3, window_bounds = array<i64: 128, 256>}, {transform_indices = @transform_4, window_bounds = array<i64: 1, 256>}]} {
    %0 = tpu.iota {dimensions = array<i32: 0>} : vector<256x256xi32>
    %c0 = arith.constant 0 : index
    %c0_0 = arith.constant 0 : index
    %1 = vector.load %arg1[%c0, %c0_0] : memref<1x256xi32, #tpu.memory_space<vmem>>, vector<1x256xi32>
    %2 = vector.broadcast %1 : vector<1x256xi32> to vector<256x256xi32>
    %3 = arith.cmpi eq, %0, %2 : vector<256x256xi32>
    %4 = arith.extui %3 : vector<256x256xi1> to vector<256x256xi32>
    %5 = arith.sitofp %4 : vector<256x256xi32> to vector<256x256xf32>
    %c0_1 = arith.constant 0 : index
    %c0_2 = arith.constant 0 : index
    %6 = vector.load %arg2[%c0_1, %c0_2] : memref<1x256xi32, #tpu.memory_space<vmem>>, vector<1x256xi32>
    %c128_i32 = arith.constant 128 : i32
    %7 = vector.broadcast %c128_i32 : i32 to vector<1x256xi32>
    %8 = arith.addi %6, %7 : vector<1x256xi32>
    %9 = vector.broadcast %8 : vector<1x256xi32> to vector<256x256xi32>
    %10 = arith.cmpi eq, %0, %9 : vector<256x256xi32>
    %11 = arith.extui %10 : vector<256x256xi1> to vector<256x256xi32>
    %12 = arith.sitofp %11 : vector<256x256xi32> to vector<256x256xf32>
    %13 = arith.addf %5, %12 : vector<256x256xf32>
    %c0_3 = arith.constant 0 : index
    %c0_4 = arith.constant 0 : index
    %14 = vector.load %arg3[%c0_3, %c0_4] : memref<1x256xi32, #tpu.memory_space<vmem>>, vector<1x256xi32>
    %15 = vector.broadcast %14 : vector<1x256xi32> to vector<256x256xi32>
    %16 = arith.cmpi eq, %0, %15 : vector<256x256xi32>
    %17 = arith.extui %16 : vector<256x256xi1> to vector<256x256xi32>
    %18 = arith.sitofp %17 : vector<256x256xi32> to vector<256x256xf32>
    %19 = arith.subf %13, %18 : vector<256x256xf32>
    %c0_5 = arith.constant 0 : index
    %c0_6 = arith.constant 0 : index
    %20 = vector.load %arg4[%c0_5, %c0_6] : memref<128x256xf32, #tpu.memory_space<vmem>>, vector<128x256xf32>
    %cst = arith.constant dense<0.000000e+00> : vector<128x256xf32>
    %21 = tpu.matmul %20, %19, %cst {dimension_numbers = #tpu.dot_dimension_numbers<[1], [0], [0], [1], [0, 0, 1, 1], [], []>, precision = #tpu.contract_precision<fp32>} : vector<128x256xf32>, vector<256x256xf32>, vector<128x256xf32> -> vector<128x256xf32>
    %22 = math.absf %21 : vector<128x256xf32>
    %cst_7 = arith.constant dense<0.000000e+00> : vector<256xf32>
    %23 = vector.multi_reduction <add>, %22, %cst_7 [0] : vector<128x256xf32> to vector<256xf32>
    %24 = vector.shape_cast %23 : vector<256xf32> to vector<1x256xf32>
    %c0_8 = arith.constant 0 : index
    %c0_9 = arith.constant 0 : index
    %25 = vector.load %arg5[%c0_8, %c0_9] : memref<1x256xf32, #tpu.memory_space<vmem>>, vector<1x256xf32>
    tpu.vector_store %arg5[%c0_8, %c0_9], %24 {strides = array<i32>} : memref<1x256xf32, #tpu.memory_space<vmem>>, vector<1x256xf32>,
    return
  }
  func.func @transform_0(%arg0: i32) -> (i32, i32) {
    %c0_i32 = arith.constant 0 : i32
    %c0_i32_0 = arith.constant 0 : i32
    return %c0_i32, %arg0 : i32, i32
  }
  func.func @transform_1(%arg0: i32) -> (i32, i32) {
    %c0_i32 = arith.constant 0 : i32
    %c0_i32_0 = arith.constant 0 : i32
    return %c0_i32, %arg0 : i32, i32
  }
  func.func @transform_2(%arg0: i32) -> (i32, i32) {
    %c0_i32 = arith.constant 0 : i32
    %c0_i32_0 = arith.constant 0 : i32
    return %c0_i32, %arg0 : i32, i32
  }
  func.func @transform_3(%arg0: i32) -> (i32, i32) {
    %c0_i32 = arith.constant 0 : i32
    %c0_i32_0 = arith.constant 0 : i32
    %c0_i32_1 = arith.constant 0 : i32
    return %c0_i32, %c0_i32_0 : i32, i32
  }
  func.func @transform_4(%arg0: i32) -> (i32, i32) {
    %c0_i32 = arith.constant 0 : i32
    %c0_i32_0 = arith.constant 0 : i32
    return %c0_i32, %arg0 : i32, i32
  }
}

module attributes {stable_mosaic.version = 11 : i64} {
  func.func @transe_kernel(%arg0: i32, %arg1: memref<1x256xi32, #tpu.memory_space<vmem>>, %arg2: memref<1x256xi32, #tpu.memory_space<vmem>>, %arg3: memref<1x256xi32, #tpu.memory_space<vmem>>, %arg4: memref<128x256xf32, #tpu.memory_space<vmem>>, %arg5: memref<1x256xf32, #tpu.memory_space<vmem>>) attributes {dimension_semantics = [#tpu.dimension_semantics<parallel>], iteration_bounds = array<i64: 1>, scalar_prefetch = 0 : i64, scratch_operands = 0 : i64, tpu.core_type = #tpu.core_type<tc>, window_params = [{transform_indices = @transform_0, window_bounds = array<i64: 1, 256>}, {transform_indices = @transform_1, window_bounds = array<i64: 1, 256>}, {transform_indices = @transform_2, window_bounds = array<i64: 1, 256>}, {pipeline_mode = #tpu.pipeline_mode<synchronous>, transform_indices = @transform_3, window_bounds = array<i64: 128, 256>}, {transform_indices = @transform_4, window_bounds = array<i64: 1, 256>}]} {
    %0 = tpu.iota {dimensions = array<i32: 0>} : vector<256x256xi32>
    %c0 = arith.constant 0 : index
    %c0_0 = arith.constant 0 : index
    %1 = vector.load %arg1[%c0, %c0_0] : memref<1x256xi32, #tpu.memory_space<vmem>>, vector<1x256xi32>
    %2 = vector.broadcast %1 : vector<1x256xi32> to vector<256x256xi32>
    %3 = arith.cmpi eq, %0, %2 : vector<256x256xi32>
    %4 = arith.extui %3 : vector<256x256xi1> to vector<256x256xi32>
    %5 = arith.sitofp %4 : vector<256x256xi32> to vector<256x256xf32>
    %c0_1 = arith.constant 0 : index
    %c0_2 = arith.constant 0 : index
    %6 = vector.load %arg2[%c0_1, %c0_2] : memref<1x256xi32, #tpu.memory_space<vmem>>, vector<1x256xi32>
    %c128_i32 = arith.constant 128 : i32
    %7 = vector.broadcast %c128_i32 : i32 to vector<1x256xi32>
    %8 = arith.addi %6, %7 : vector<1x256xi32>
    %9 = vector.broadcast %8 : vector<1x256xi32> to vector<256x256xi32>
    %10 = arith.cmpi eq, %0, %9 : vector<256x256xi32>
    %11 = arith.extui %10 : vector<256x256xi1> to vector<256x256xi32>
    %12 = arith.sitofp %11 : vector<256x256xi32> to vector<256x256xf32>
    %13 = arith.addf %5, %12 : vector<256x256xf32>
    %c0_3 = arith.constant 0 : index
    %c0_4 = arith.constant 0 : index
    %14 = vector.load %arg3[%c0_3, %c0_4] : memref<1x256xi32, #tpu.memory_space<vmem>>, vector<1x256xi32>
    %15 = vector.broadcast %14 : vector<1x256xi32> to vector<256x256xi32>
    %16 = arith.cmpi eq, %0, %15 : vector<256x256xi32>
    %17 = arith.extui %16 : vector<256x256xi1> to vector<256x256xi32>
    %18 = arith.sitofp %17 : vector<256x256xi32> to vector<256x256xf32>
    %19 = arith.subf %13, %18 : vector<256x256xf32>
    %c0_5 = arith.constant 0 : index
    %c0_6 = arith.constant 0 : index
    %20 = vector.load %arg4[%c0_5, %c0_6] : memref<128x256xf32, #tpu.memory_space<vmem>>, vector<128x256xf32>
    %cst = arith.constant dense<0.000000e+00> : vector<128x256xf32>
    %21 = tpu.matmul %20, %19, %cst {dimension_numbers = #tpu.dot_dimension_numbers<[1], [0], [0], [1], [0, 0, 1, 1], [], []>, precision = #tpu.contract_precision<fp32>} : vector<128x256xf32>, vector<256x256xf32>, vector<128x256xf32> -> vector<128x256xf32>
    %22 = math.absf %21 : vector<128x256xf32>
    %cst_7 = arith.constant dense<0.000000e+00> : vector<256xf32>
    %23 = vector.multi_reduction <add>, %22, %cst_7 [0] : vector<128x256xf32> to vector<256xf32>
    %24 = vector.shape_cast %23 : vector<256xf32> to vector<1x256xf32>
    %c0_8 = arith.constant 0 : index
    %c0_9 = arith.constant 0 : index
    %25 = vector.load %arg5[%c0_8, %c0_9] : memref<1x256xf32, #tpu.memory_space<vmem>>, vector<1x256xf32>
    tpu.vector_store %arg5[%c0_8, %c0_9], %24 {strides = array<i32>} : memref<1x256xf32, #tpu.memory_space<vmem>>, vector<1x256xf32>,
    return
  }
  func.func @transform_0(%arg0: i32) -> (i32, i32) {
    %c0_i32 = arith.constant 0 : i32
    %c0_i32_0 = arith.constant 0 : i32
    return %c0_i32, %arg0 : i32, i32
  }
  func.func @transform_1(%arg0: i32) -> (i32, i32) {
    %c0_i32 = arith.constant 0 : i32
    %c0_i32_0 = arith.constant 0 : i32
    return %c0_i32, %arg0 : i32, i32
  }
  func.func @transform_2(%arg0: i32) -> (i32, i32) {
    %c0_i32 = arith.constant 0 : i32
    %c0_i32_0 = arith.constant 0 : i32
    return %c0_i32, %arg0 : i32, i32
  }
  func.func @transform_3(%arg0: i32) -> (i32, i32) {
    %c0_i32 = arith.constant 0 : i32
    %c0_i32_0 = arith.constant 0 : i32
    %c0_i32_1 = arith.constant 0 : i32
    return %c0_i32, %c0_i32_0 : i32, i32
  }
  func.func @transform_4(%arg0: i32) -> (i32, i32) {
    %c0_i32 = arith.constant 0 : i32
    %c0_i32_0 = arith.constant 0 : i32
    return %c0_i32, %arg0 : i32, i32
  }
}

</mosaic_0001>

<llo_original>
// kernel: tpu_custom_call.1
$region0: #{tpu_custom_call.1}
  #allocation0 [shape = 'u32[]', space=smem, size = 0x4, offset = 0x4, fixed_abs, tag = 'smem constant byte address 0x4 - core index']
  #allocation1 [shape = 'u32[144,128]{1,0:T(1,128)}', space=vmem, size = 0x12000, scoped, tag = 'internal scratch']
  %s0 = inlined_call_operand.hbm [shape: s32[1,256], index: 0, kind: input, shape index: {}]
  %s1 = inlined_call_operand.vmem [shape: s32[1,256], index: 1, kind: input, shape index: {}]
  %s2 = inlined_call_operand.vmem [shape: s32[1,256], index: 2, kind: input, shape index: {}]
  %s3 = inlined_call_operand.hbm [shape: f32[128,256], index: 3, kind: input, shape index: {}]
  %s4 = inlined_call_operand.hbm [shape: f32[1,256], index: 4, kind: output, shape index: {}]
  %s5 = sld [smem:[#allocation0]]
  $region34: #{tpu_custom_call.1} parent=0
    _
  %s7 = ssub.s32 1, %s5
  %s8 = scalar_select 0, %s7, %s5
  $region1: #{tpu_custom_call.1} parent=0
    #allocation2 [shape = 'u8[1024]{0}', space=vmem, size = 0x400, scoped, tag = 'input window, operand 0, single buffered']
    #allocation3 [shape = 's32[1]{0}', space=sflag, size = 0x4, scoped, tag = 'scoped memory for tpu_custom_call.1']
    #allocation4 [shape = 's32[1]{0}', space=sflag, size = 0x4, scoped, tag = 'scoped memory for tpu_custom_call.1']
    #allocation5 [shape = 'u8[131072]{0}', space=vmem, size = 0x20000, scoped, tag = 'input window, operand 3, single buffered']
    #allocation6 [shape = 's32[1]{0}', space=sflag, size = 0x4, scoped, tag = 'scoped memory for tpu_custom_call.1']
    #allocation7 [shape = 'u8[1024]{0}', space=vmem, size = 0x400, scoped, tag = 'output window, operand 0, single buffered']
    %9 = vsyncpa [#allocation3], 0
    %10 = vsyncpa [#allocation6], 0
    %11 = vsyncpa [#allocation4], 0
    // Predicated region
    $region2: #{tpu_custom_call.1} parent=1 // pred_check
      _
    $region3: #{tpu_custom_call.1} parent=1 // pred_check_branch
      %13 = sbr.rel (0) target = $region5
    $region4: #{tpu_custom_call.1} parent=1 // pred_region
      %s15 = ssub.s32 32, 32
      %16 = vsyncadd [#allocation3], %s15
      %s18 = sshll.u32 [#allocation2], 4
      %s19 = int_to_ptr.vmem [resolvable:$true] %s18
      %21 = dma.hbm_to_vmem [thread:$0]  %s0, 32, %s19, [#allocation3]
    $region5: #{tpu_custom_call.1} parent=1 // pred_fallthru
      _
    // Predicated region
    $region6: #{tpu_custom_call.1} parent=1 // pred_check
      _
    $region7: #{tpu_custom_call.1} parent=1 // pred_check_branch
      %23 = sbr.rel (0) target = $region9
    $region8: #{tpu_custom_call.1} parent=1 // pred_region
      _
    $region9: #{tpu_custom_call.1} parent=1 // pred_fallthru
      _
    // Predicated region
    $region10: #{tpu_custom_call.1} parent=1 // pred_check
      _
    $region11: #{tpu_custom_call.1} parent=1 // pred_check_branch
      %25 = sbr.rel (0) target = $region13
    $region12: #{tpu_custom_call.1} parent=1 // pred_region
      _
    $region13: #{tpu_custom_call.1} parent=1 // pred_fallthru
      _
    // Predicated region
    $region14: #{tpu_custom_call.1} parent=1 // pred_check
      _
    $region15: #{tpu_custom_call.1} parent=1 // pred_check_branch
      %27 = sbr.rel (0) target = $region17
    $region16: #{tpu_custom_call.1} parent=1 // pred_region
      %s29 = ssub.s32 4096, 4096
      %30 = vsyncadd [#allocation6], %s29
      %s31 = sshll.u32 [#allocation5], 4
      %s32 = int_to_ptr.vmem [resolvable:$true] %s31
      %37 = dma.hbm_to_vmem [thread:$0]  %s3, 4096, %s32, [#allocation6], 256, 256, 16
    $region17: #{tpu_custom_call.1} parent=1 // pred_fallthru
      _
    // Predicated region
    $region18: #{tpu_custom_call.1} parent=1 // pred_check
      _
    $region19: #{tpu_custom_call.1} parent=1 // pred_check_branch
      %39 = sbr.rel (0) target = $region21
    $region20: #{tpu_custom_call.1} parent=1 // pred_region
      %40 = dma.done [#allocation3], 32
    $region21: #{tpu_custom_call.1} parent=1 // pred_fallthru
      _
    // Predicated region
    $region22: #{tpu_custom_call.1} parent=1 // pred_check
      _
    $region23: #{tpu_custom_call.1} parent=1 // pred_check_branch
      %42 = sbr.rel (0) target = $region25
    $region24: #{tpu_custom_call.1} parent=1 // pred_region
      %43 = dma.done [#allocation6], 4096
    $region25: #{tpu_custom_call.1} parent=1 // pred_fallthru
      _
    %v44 = vlaneseq
    %v45 = vshrl.u32 %v44, 7
    %v46 = vadd.s32 %v45, 8
    %v47 = vadd.s32 %v45, 16
    %v48 = vadd.s32 %v45, 24
    %v49 = vadd.s32 %v45, 32
    %v50 = vadd.s32 %v45, 40
    %v51 = vadd.s32 %v45, 48
    %v52 = vadd.s32 %v45, 56
    %v53 = vadd.s32 %v45, 64
    %v54 = vadd.s32 %v45, 72
    %v55 = vadd.s32 %v45, 80
    %v56 = vadd.s32 %v45, 88
    %v57 = vadd.s32 %v45, 96
    %v58 = vadd.s32 %v45, 104
    %v59 = vadd.s32 %v45, 112
    %v60 = vadd.s32 %v45, 120
    %v61 = vadd.s32 %v45, 128
    %v62 = vadd.s32 %v45, 136
    %v63 = vadd.s32 %v45, 144
    %v64 = vadd.s32 %v45, 152
    %v65 = vadd.s32 %v45, 160
    %v66 = vadd.s32 %v45, 168
    %v67 = vadd.s32 %v45, 176
    %v68 = vadd.s32 %v45, 184
    %v69 = vadd.s32 %v45, 192
    %v70 = vadd.s32 %v45, 200
    %v71 = vadd.s32 %v45, 208
    %v72 = vadd.s32 %v45, 216
    %v73 = vadd.s32 %v45, 224
    %v74 = vadd.s32 %v45, 232
    %v75 = vadd.s32 %v45, 240
    %v76 = vadd.s32 %v45, 248
    %v77 = vld [vmem:[#allocation2] sm:$0x3]
    %v78 = vlaneseq
    %v79 = vshrl.u32 %v78, 7
    %v80 = vsub.s32 0, %v79
    %v81 = vrot.slane %v77, %v80
    %v82 = vlaneseq
    %v83 = vshrl.u32 %v82, 7
    %v84 = vsub.s32 1, %v83
    %v85 = vrot.slane %v77, %v84
    %vm86 = vcmp.eq.s32.totalorder %v45, %v81
    %vm87 = vcmp.eq.s32.totalorder %v45, %v85
    %vm88 = vcmp.eq.s32.totalorder %v46, %v81
    %vm89 = vcmp.eq.s32.totalorder %v46, %v85
    %vm90 = vcmp.eq.s32.totalorder %v47, %v81
    %vm91 = vcmp.eq.s32.totalorder %v47, %v85
    %vm92 = vcmp.eq.s32.totalorder %v48, %v81
    %vm93 = vcmp.eq.s32.totalorder %v48, %v85
    %vm94 = vcmp.eq.s32.totalorder %v49, %v81
    %vm95 = vcmp.eq.s32.totalorder %v49, %v85
    %vm96 = vcmp.eq.s32.totalorder %v50, %v81
    %vm97 = vcmp.eq.s32.totalorder %v50, %v85
    %vm98 = vcmp.eq.s32.totalorder %v51, %v81
    %vm99 = vcmp.eq.s32.totalorder %v51, %v85
    %vm100 = vcmp.eq.s32.totalorder %v52, %v81
    %vm101 = vcmp.eq.s32.totalorder %v52, %v85
    %vm102 = vcmp.eq.s32.totalorder %v53, %v81
    %vm103 = vcmp.eq.s32.totalorder %v53, %v85
    %vm104 = vcmp.eq.s32.totalorder %v54, %v81
    %vm105 = vcmp.eq.s32.totalorder %v54, %v85
    %vm106 = vcmp.eq.s32.totalorder %v55, %v81
    %vm107 = vcmp.eq.s32.totalorder %v55, %v85
    %vm108 = vcmp.eq.s32.totalorder %v56, %v81
    %vm109 = vcmp.eq.s32.totalorder %v56, %v85
    %vm110 = vcmp.eq.s32.totalorder %v57, %v81
    %vm111 = vcmp.eq.s32.totalorder %v57, %v85
    %vm112 = vcmp.eq.s32.totalorder %v58, %v81
    %vm113 = vcmp.eq.s32.totalorder %v58, %v85
    %vm114 = vcmp.eq.s32.totalorder %v59, %v81
    %vm115 = vcmp.eq.s32.totalorder %v59, %v85
    %vm116 = vcmp.eq.s32.totalorder %v60, %v81
    %vm117 = vcmp.eq.s32.totalorder %v60, %v85
    %vm118 = vcmp.eq.s32.totalorder %v61, %v81
    %vm119 = vcmp.eq.s32.totalorder %v61, %v85
    %vm120 = vcmp.eq.s32.totalorder %v62, %v81
    %vm121 = vcmp.eq.s32.totalorder %v62, %v85
    %vm122 = vcmp.eq.s32.totalorder %v63, %v81
    %vm123 = vcmp.eq.s32.totalorder %v63, %v85
    %vm124 = vcmp.eq.s32.totalorder %v64, %v81
    %vm125 = vcmp.eq.s32.totalorder %v64, %v85
    %vm126 = vcmp.eq.s32.totalorder %v65, %v81
    %vm127 = vcmp.eq.s32.totalorder %v65, %v85
    %vm128 = vcmp.eq.s32.totalorder %v66, %v81
    %vm129 = vcmp.eq.s32.totalorder %v66, %v85
    %vm130 = vcmp.eq.s32.totalorder %v67, %v81
    %vm131 = vcmp.eq.s32.totalorder %v67, %v85
    %vm132 = vcmp.eq.s32.totalorder %v68, %v81
    %vm133 = vcmp.eq.s32.totalorder %v68, %v85
    %vm134 = vcmp.eq.s32.totalorder %v69, %v81
    %vm135 = vcmp.eq.s32.totalorder %v69, %v85
    %vm136 = vcmp.eq.s32.totalorder %v70, %v81
    %vm137 = vcmp.eq.s32.totalorder %v70, %v85
    %vm138 = vcmp.eq.s32.totalorder %v71, %v81
    %vm139 = vcmp.eq.s32.totalorder %v71, %v85
    %vm140 = vcmp.eq.s32.totalorder %v72, %v81
    %vm141 = vcmp.eq.s32.totalorder %v72, %v85
    %vm142 = vcmp.eq.s32.totalorder %v73, %v81
    %vm143 = vcmp.eq.s32.totalorder %v73, %v85
    %vm144 = vcmp.eq.s32.totalorder %v74, %v81
    %vm145 = vcmp.eq.s32.totalorder %v74, %v85
    %vm146 = vcmp.eq.s32.totalorder %v75, %v81
    %vm147 = vcmp.eq.s32.totalorder %v75, %v85
    %vm148 = vcmp.eq.s32.totalorder %v76, %v81
    %vm149 = vcmp.eq.s32.totalorder %v76, %v85
    %v150 = vsel %vm86, 1, 0
    %v151 = vsel %vm87, 1, 0
    %v152 = vsel %vm88, 1, 0
    %v153 = vsel %vm89, 1, 0
    %v154 = vsel %vm90, 1, 0
    %v155 = vsel %vm91, 1, 0
    %v156 = vsel %vm92, 1, 0
    %v157 = vsel %vm93, 1, 0
    %v158 = vsel %vm94, 1, 0
    %v159 = vsel %vm95, 1, 0
    %v160 = vsel %vm96, 1, 0
    %v161 = vsel %vm97, 1, 0
    %v162 = vsel %vm98, 1, 0
    %v163 = vsel %vm99, 1, 0
    %v164 = vsel %vm100, 1, 0
    %v165 = vsel %vm101, 1, 0
    %v166 = vsel %vm102, 1, 0
    %v167 = vsel %vm103, 1, 0
    %v168 = vsel %vm104, 1, 0
    %v169 = vsel %vm105, 1, 0
    %v170 = vsel %vm106, 1, 0
    %v171 = vsel %vm107, 1, 0
    %v172 = vsel %vm108, 1, 0
    %v173 = vsel %vm109, 1, 0
    %v174 = vsel %vm110, 1, 0
    %v175 = vsel %vm111, 1, 0
    %v176 = vsel %vm112, 1, 0
    %v177 = vsel %vm113, 1, 0
    %v178 = vsel %vm114, 1, 0
    %v179 = vsel %vm115, 1, 0
    %v180 = vsel %vm116, 1, 0
    %v181 = vsel %vm117, 1, 0
    %v182 = vsel %vm118, 1, 0
    %v183 = vsel %vm119, 1, 0
    %v184 = vsel %vm120, 1, 0
    %v185 = vsel %vm121, 1, 0
    %v186 = vsel %vm122, 1, 0
    %v187 = vsel %vm123, 1, 0
    %v188 = vsel %vm124, 1, 0
    %v189 = vsel %vm125, 1, 0
    %v190 = vsel %vm126, 1, 0
    %v191 = vsel %vm127, 1, 0
    %v192 = vsel %vm128, 1, 0
    %v193 = vsel %vm129, 1, 0
    %v194 = vsel %vm130, 1, 0
    %v195 = vsel %vm131, 1, 0
    %v196 = vsel %vm132, 1, 0
    %v197 = vsel %vm133, 1, 0
    %v198 = vsel %vm134, 1, 0
    %v199 = vsel %vm135, 1, 0
    %v200 = vsel %vm136, 1, 0
    %v201 = vsel %vm137, 1, 0
    %v202 = vsel %vm138, 1, 0
    %v203 = vsel %vm139, 1, 0
    %v204 = vsel %vm140, 1, 0
    %v205 = vsel %vm141, 1, 0
    %v206 = vsel %vm142, 1, 0
    %v207 = vsel %vm143, 1, 0
    %v208 = vsel %vm144, 1, 0
    %v209 = vsel %vm145, 1, 0
    %v210 = vsel %vm146, 1, 0
    %v211 = vsel %vm147, 1, 0
    %v212 = vsel %vm148, 1, 0
    %v213 = vsel %vm149, 1, 0
    %v214 = vcvt.s32.f32 %v150
    %v215 = vcvt.s32.f32 %v151
    %v216 = vcvt.s32.f32 %v152
    %v217 = vcvt.s32.f32 %v153
    %v218 = vcvt.s32.f32 %v154
    %v219 = vcvt.s32.f32 %v155
    %v220 = vcvt.s32.f32 %v156
    %v221 = vcvt.s32.f32 %v157
    %v222 = vcvt.s32.f32 %v158
    %v223 = vcvt.s32.f32 %v159
    %v224 = vcvt.s32.f32 %v160
    %v225 = vcvt.s32.f32 %v161
    %v226 = vcvt.s32.f32 %v162
    %v227 = vcvt.s32.f32 %v163
    %v228 = vcvt.s32.f32 %v164
    %v229 = vcvt.s32.f32 %v165
    %v230 = vcvt.s32.f32 %v166
    %v231 = vcvt.s32.f32 %v167
    %v232 = vcvt.s32.f32 %v168
    %v233 = vcvt.s32.f32 %v169
    %v234 = vcvt.s32.f32 %v170
    %v235 = vcvt.s32.f32 %v171
    %v236 = vcvt.s32.f32 %v172
    %v237 = vcvt.s32.f32 %v173
    %v238 = vcvt.s32.f32 %v174
    %v239 = vcvt.s32.f32 %v175
    %v240 = vcvt.s32.f32 %v176
    %v241 = vcvt.s32.f32 %v177
    %v242 = vcvt.s32.f32 %v178
    %v243 = vcvt.s32.f32 %v179
    %v244 = vcvt.s32.f32 %v180
    %v245 = vcvt.s32.f32 %v181
    %v246 = vcvt.s32.f32 %v182
    %v247 = vcvt.s32.f32 %v183
    %v248 = vcvt.s32.f32 %v184
    %v249 = vcvt.s32.f32 %v185
    %v250 = vcvt.s32.f32 %v186
    %v251 = vcvt.s32.f32 %v187
    %v252 = vcvt.s32.f32 %v188
    %v253 = vcvt.s32.f32 %v189
    %v254 = vcvt.s32.f32 %v190
    %v255 = vcvt.s32.f32 %v191
    %v256 = vcvt.s32.f32 %v192
    %v257 = vcvt.s32.f32 %v193
    %v258 = vcvt.s32.f32 %v194
    %v259 = vcvt.s32.f32 %v195
    %v260 = vcvt.s32.f32 %v196
    %v261 = vcvt.s32.f32 %v197
    %v262 = vcvt.s32.f32 %v198
    %v263 = vcvt.s32.f32 %v199
    %v264 = vcvt.s32.f32 %v200
    %v265 = vcvt.s32.f32 %v201
    %v266 = vcvt.s32.f32 %v202
    %v267 = vcvt.s32.f32 %v203
    %v268 = vcvt.s32.f32 %v204
    %v269 = vcvt.s32.f32 %v205
    %v270 = vcvt.s32.f32 %v206
    %v271 = vcvt.s32.f32 %v207
    %v272 = vcvt.s32.f32 %v208
    %v273 = vcvt.s32.f32 %v209
    %v274 = vcvt.s32.f32 %v210
    %v275 = vcvt.s32.f32 %v211
    %v276 = vcvt.s32.f32 %v212
    %v277 = vcvt.s32.f32 %v213
    %v278 = vld [vmem:[%s1] sm:$0x3]
    %v279 = vadd.s32 %v278, 128
    %v280 = vlaneseq
    %v281 = vshrl.u32 %v280, 7
    %v282 = vsub.s32 0, %v281
    %v283 = vrot.slane %v279, %v282
    %v284 = vlaneseq
    %v285 = vshrl.u32 %v284, 7
    %v286 = vsub.s32 1, %v285
    %v287 = vrot.slane %v279, %v286
    %vm288 = vcmp.eq.s32.totalorder %v45, %v283
    %vm289 = vcmp.eq.s32.totalorder %v45, %v287
    %vm290 = vcmp.eq.s32.totalorder %v46, %v283
    %vm291 = vcmp.eq.s32.totalorder %v46, %v287
    %vm292 = vcmp.eq.s32.totalorder %v47, %v283
    %vm293 = vcmp.eq.s32.totalorder %v47, %v287
    %vm294 = vcmp.eq.s32.totalorder %v48, %v283
    %vm295 = vcmp.eq.s32.totalorder %v48, %v287
    %vm296 = vcmp.eq.s32.totalorder %v49, %v283
    %vm297 = vcmp.eq.s32.totalorder %v49, %v287
    %vm298 = vcmp.eq.s32.totalorder %v50, %v283
    %vm299 = vcmp.eq.s32.totalorder %v50, %v287
    %vm300 = vcmp.eq.s32.totalorder %v51, %v283
    %vm301 = vcmp.eq.s32.totalorder %v51, %v287
    %vm302 = vcmp.eq.s32.totalorder %v52, %v283
    %vm303 = vcmp.eq.s32.totalorder %v52, %v287
    %vm304 = vcmp.eq.s32.totalorder %v53, %v283
    %vm305 = vcmp.eq.s32.totalorder %v53, %v287
    %vm306 = vcmp.eq.s32.totalorder %v54, %v283
    %vm307 = vcmp.eq.s32.totalorder %v54, %v287
    %vm308 = vcmp.eq.s32.totalorder %v55, %v283
    %vm309 = vcmp.eq.s32.totalorder %v55, %v287
    %vm310 = vcmp.eq.s32.totalorder %v56, %v283
    %vm311 = vcmp.eq.s32.totalorder %v56, %v287
    %vm312 = vcmp.eq.s32.totalorder %v57, %v283
    %vm313 = vcmp.eq.s32.totalorder %v57, %v287
    %vm314 = vcmp.eq.s32.totalorder %v58, %v283
    %vm315 = vcmp.eq.s32.totalorder %v58, %v287
    %vm316 = vcmp.eq.s32.totalorder %v59, %v283
    %vm317 = vcmp.eq.s32.totalorder %v59, %v287
    %vm318 = vcmp.eq.s32.totalorder %v60, %v283
    %vm319 = vcmp.eq.s32.totalorder %v60, %v287
    %vm320 = vcmp.eq.s32.totalorder %v61, %v283
    %vm321 = vcmp.eq.s32.totalorder %v61, %v287
    %vm322 = vcmp.eq.s32.totalorder %v62, %v283
    %vm323 = vcmp.eq.s32.totalorder %v62, %v287
    %vm324 = vcmp.eq.s32.totalorder %v63, %v283
    %vm325 = vcmp.eq.s32.totalorder %v63, %v287
    %vm326 = vcmp.eq.s32.totalorder %v64, %v283
    %vm327 = vcmp.eq.s32.totalorder %v64, %v287
    %vm328 = vcmp.eq.s32.totalorder %v65, %v283
    %vm329 = vcmp.eq.s32.totalorder %v65, %v287
    %vm330 = vcmp.eq.s32.totalorder %v66, %v283
    %vm331 = vcmp.eq.s32.totalorder %v66, %v287
    %vm332 = vcmp.eq.s32.totalorder %v67, %v283
    %vm333 = vcmp.eq.s32.totalorder %v67, %v287
    %vm334 = vcmp.eq.s32.totalorder %v68, %v283
    %vm335 = vcmp.eq.s32.totalorder %v68, %v287
    %vm336 = vcmp.eq.s32.totalorder %v69, %v283
    %vm337 = vcmp.eq.s32.totalorder %v69, %v287
    %vm338 = vcmp.eq.s32.totalorder %v70, %v283
    %vm339 = vcmp.eq.s32.totalorder %v70, %v287
    %vm340 = vcmp.eq.s32.totalorder %v71, %v283
    %vm341 = vcmp.eq.s32.totalorder %v71, %v287
    %vm342 = vcmp.eq.s32.totalorder %v72, %v283
    %vm343 = vcmp.eq.s32.totalorder %v72, %v287
    %vm344 = vcmp.eq.s32.totalorder %v73, %v283
    %vm345 = vcmp.eq.s32.totalorder %v73, %v287
    %vm346 = vcmp.eq.s32.totalorder %v74, %v283
    %vm347 = vcmp.eq.s32.totalorder %v74, %v287
    %vm348 = vcmp.eq.s32.totalorder %v75, %v283
    %vm349 = vcmp.eq.s32.totalorder %v75, %v287
    %vm350 = vcmp.eq.s32.totalorder %v76, %v283
    %vm351 = vcmp.eq.s32.totalorder %v76, %v287
    %v352 = vsel %vm288, 1, 0
    %v353 = vsel %vm289, 1, 0
    %v354 = vsel %vm290, 1, 0
    %v355 = vsel %vm291, 1, 0
    %v356 = vsel %vm292, 1, 0
    %v357 = vsel %vm293, 1, 0
    %v358 = vsel %vm294, 1, 0
    %v359 = vsel %vm295, 1, 0
    %v360 = vsel %vm296, 1, 0
    %v361 = vsel %vm297, 1, 0
    %v362 = vsel %vm298, 1, 0
    %v363 = vsel %vm299, 1, 0
    %v364 = vsel %vm300, 1, 0
    %v365 = vsel %vm301, 1, 0
    %v366 = vsel %vm302, 1, 0
    %v367 = vsel %vm303, 1, 0
    %v368 = vsel %vm304, 1, 0
    %v369 = vsel %vm305, 1, 0
    %v370 = vsel %vm306, 1, 0
    %v371 = vsel %vm307, 1, 0
    %v372 = vsel %vm308, 1, 0
    %v373 = vsel %vm309, 1, 0
    %v374 = vsel %vm310, 1, 0
    %v375 = vsel %vm311, 1, 0
    %v376 = vsel %vm312, 1, 0
    %v377 = vsel %vm313, 1, 0
    %v378 = vsel %vm314, 1, 0
    %v379 = vsel %vm315, 1, 0
    %v380 = vsel %vm316, 1, 0
    %v381 = vsel %vm317, 1, 0
    %v382 = vsel %vm318, 1, 0
    %v383 = vsel %vm319, 1, 0
    %v384 = vsel %vm320, 1, 0
    %v385 = vsel %vm321, 1, 0
    %v386 = vsel %vm322, 1, 0
    %v387 = vsel %vm323, 1, 0
    %v388 = vsel %vm324, 1, 0
    %v389 = vsel %vm325, 1, 0
    %v390 = vsel %vm326, 1, 0
    %v391 = vsel %vm327, 1, 0
    %v392 = vsel %vm328, 1, 0
    %v393 = vsel %vm329, 1, 0
    %v394 = vsel %vm330, 1, 0
    %v395 = vsel %vm331, 1, 0
    %v396 = vsel %vm332, 1, 0
    %v397 = vsel %vm333, 1, 0
    %v398 = vsel %vm334, 1, 0
    %v399 = vsel %vm335, 1, 0
    %v400 = vsel %vm336, 1, 0
    %v401 = vsel %vm337, 1, 0
    %v402 = vsel %vm338, 1, 0
    %v403 = vsel %vm339, 1, 0
    %v404 = vsel %vm340, 1, 0
    %v405 = vsel %vm341, 1, 0
    %v406 = vsel %vm342, 1, 0
    %v407 = vsel %vm343, 1, 0
    %v408 = vsel %vm344, 1, 0
    %v409 = vsel %vm345, 1, 0
    %v410 = vsel %vm346, 1, 0
    %v411 = vsel %vm347, 1, 0
    %v412 = vsel %vm348, 1, 0
    %v413 = vsel %vm349, 1, 0
    %v414 = vsel %vm350, 1, 0
    %v415 = vsel %vm351, 1, 0
    %v416 = vcvt.s32.f32 %v352
    %v417 = vcvt.s32.f32 %v353
    %v418 = vcvt.s32.f32 %v354
    %v419 = vcvt.s32.f32 %v355
    %v420 = vcvt.s32.f32 %v356
    %v421 = vcvt.s32.f32 %v357
    %v422 = vcvt.s32.f32 %v358
    %v423 = vcvt.s32.f32 %v359
    %v424 = vcvt.s32.f32 %v360
    %v425 = vcvt.s32.f32 %v361
    %v426 = vcvt.s32.f32 %v362
    %v427 = vcvt.s32.f32 %v363
    %v428 = vcvt.s32.f32 %v364
    %v429 = vcvt.s32.f32 %v365
    %v430 = vcvt.s32.f32 %v366
    %v431 = vcvt.s32.f32 %v367
    %v432 = vcvt.s32.f32 %v368
    %v433 = vcvt.s32.f32 %v369
    %v434 = vcvt.s32.f32 %v370
    %v435 = vcvt.s32.f32 %v371
    %v436 = vcvt.s32.f32 %v372
    %v437 = vcvt.s32.f32 %v373
    %v438 = vcvt.s32.f32 %v374
    %v439 = vcvt.s32.f32 %v375
    %v440 = vcvt.s32.f32 %v376
    %v441 = vcvt.s32.f32 %v377
    %v442 = vcvt.s32.f32 %v378
    %v443 = vcvt.s32.f32 %v379
    %v444 = vcvt.s32.f32 %v380
    %v445 = vcvt.s32.f32 %v381
    %v446 = vcvt.s32.f32 %v382
    %v447 = vcvt.s32.f32 %v383
    %v448 = vcvt.s32.f32 %v384
    %v449 = vcvt.s32.f32 %v385
    %v450 = vcvt.s32.f32 %v386
    %v451 = vcvt.s32.f32 %v387
    %v452 = vcvt.s32.f32 %v388
    %v453 = vcvt.s32.f32 %v389
    %v454 = vcvt.s32.f32 %v390
    %v455 = vcvt.s32.f32 %v391
    %v456 = vcvt.s32.f32 %v392
    %v457 = vcvt.s32.f32 %v393
    %v458 = vcvt.s32.f32 %v394
    %v459 = vcvt.s32.f32 %v395
    %v460 = vcvt.s32.f32 %v396
    %v461 = vcvt.s32.f32 %v397
    %v462 = vcvt.s32.f32 %v398
    %v463 = vcvt.s32.f32 %v399
    %v464 = vcvt.s32.f32 %v400
    %v465 = vcvt.s32.f32 %v401
    %v466 = vcvt.s32.f32 %v402
    %v467 = vcvt.s32.f32 %v403
    %v468 = vcvt.s32.f32 %v404
    %v469 = vcvt.s32.f32 %v405
    %v470 = vcvt.s32.f32 %v406
    %v471 = vcvt.s32.f32 %v407
    %v472 = vcvt.s32.f32 %v408
    %v473 = vcvt.s32.f32 %v409
    %v474 = vcvt.s32.f32 %v410
    %v475 = vcvt.s32.f32 %v411
    %v476 = vcvt.s32.f32 %v412
    %v477 = vcvt.s32.f32 %v413
    %v478 = vcvt.s32.f32 %v414
    %v479 = vcvt.s32.f32 %v415
    %v480 = vadd.f32 %v214, %v416
    %v481 = vadd.f32 %v215, %v417
    %v482 = vadd.f32 %v216, %v418
    %v483 = vadd.f32 %v217, %v419
    %v484 = vadd.f32 %v218, %v420
    %v485 = vadd.f32 %v219, %v421
    %v486 = vadd.f32 %v220, %v422
    %v487 = vadd.f32 %v221, %v423
    %v488 = vadd.f32 %v222, %v424
    %v489 = vadd.f32 %v223, %v425
    %v490 = vadd.f32 %v224, %v426
    %v491 = vadd.f32 %v225, %v427
    %v492 = vadd.f32 %v226, %v428
    %v493 = vadd.f32 %v227, %v429
    %v494 = vadd.f32 %v228, %v430
    %v495 = vadd.f32 %v229, %v431
    %v496 = vadd.f32 %v230, %v432
    %v497 = vadd.f32 %v231, %v433
    %v498 = vadd.f32 %v232, %v434
    %v499 = vadd.f32 %v233, %v435
    %v500 = vadd.f32 %v234, %v436
    %v501 = vadd.f32 %v235, %v437
    %v502 = vadd.f32 %v236, %v438
    %v503 = vadd.f32 %v237, %v439
    %v504 = vadd.f32 %v238, %v440
    %v505 = vadd.f32 %v239, %v441
    %v506 = vadd.f32 %v240, %v442
    %v507 = vadd.f32 %v241, %v443
    %v508 = vadd.f32 %v242, %v444
    %v509 = vadd.f32 %v243, %v445
    %v510 = vadd.f32 %v244, %v446
    %v511 = vadd.f32 %v245, %v447
    %v512 = vadd.f32 %v246, %v448
    %v513 = vadd.f32 %v247, %v449
    %v514 = vadd.f32 %v248, %v450
    %v515 = vadd.f32 %v249, %v451
    %v516 = vadd.f32 %v250, %v452
    %v517 = vadd.f32 %v251, %v453
    %v518 = vadd.f32 %v252, %v454
    %v519 = vadd.f32 %v253, %v455
    %v520 = vadd.f32 %v254, %v456
    %v521 = vadd.f32 %v255, %v457
    %v522 = vadd.f32 %v256, %v458
    %v523 = vadd.f32 %v257, %v459
    %v524 = vadd.f32 %v258, %v460
    %v525 = vadd.f32 %v259, %v461
    %v526 = vadd.f32 %v260, %v462
    %v527 = vadd.f32 %v261, %v463
    %v528 = vadd.f32 %v262, %v464
    %v529 = vadd.f32 %v263, %v465
    %v530 = vadd.f32 %v264, %v466
    %v531 = vadd.f32 %v265, %v467
    %v532 = vadd.f32 %v266, %v468
    %v533 = vadd.f32 %v267, %v469
    %v534 = vadd.f32 %v268, %v470
    %v535 = vadd.f32 %v269, %v471
    %v536 = vadd.f32 %v270, %v472
    %v537 = vadd.f32 %v271, %v473
    %v538 = vadd.f32 %v272, %v474
    %v539 = vadd.f32 %v273, %v475
    %v540 = vadd.f32 %v274, %v476
    %v541 = vadd.f32 %v275, %v477
    %v542 = vadd.f32 %v276, %v478
    %v543 = vadd.f32 %v277, %v479
    %v544 = vld [vmem:[%s2] sm:$0x3]
    %v545 = vlaneseq
    %v546 = vshrl.u32 %v545, 7
    %v547 = vsub.s32 0, %v546
    %v548 = vrot.slane %v544, %v547
    %v549 = vlaneseq
    %v550 = vshrl.u32 %v549, 7
    %v551 = vsub.s32 1, %v550
    %v552 = vrot.slane %v544, %v551
    %vm553 = vcmp.eq.s32.totalorder %v45, %v548
    %vm554 = vcmp.eq.s32.totalorder %v45, %v552
    %vm555 = vcmp.eq.s32.totalorder %v46, %v548
    %vm556 = vcmp.eq.s32.totalorder %v46, %v552
    %vm557 = vcmp.eq.s32.totalorder %v47, %v548
    %vm558 = vcmp.eq.s32.totalorder %v47, %v552
    %vm559 = vcmp.eq.s32.totalorder %v48, %v548
    %vm560 = vcmp.eq.s32.totalorder %v48, %v552
    %vm561 = vcmp.eq.s32.totalorder %v49, %v548
    %vm562 = vcmp.eq.s32.totalorder %v49, %v552
    %vm563 = vcmp.eq.s32.totalorder %v50, %v548
    %vm564 = vcmp.eq.s32.totalorder %v50, %v552
    %vm565 = vcmp.eq.s32.totalorder %v51, %v548
    %vm566 = vcmp.eq.s32.totalorder %v51, %v552
    %vm567 = vcmp.eq.s32.totalorder %v52, %v548
    %vm568 = vcmp.eq.s32.totalorder %v52, %v552
    %vm569 = vcmp.eq.s32.totalorder %v53, %v548
    %vm570 = vcmp.eq.s32.totalorder %v53, %v552
    %vm571 = vcmp.eq.s32.totalorder %v54, %v548
    %vm572 = vcmp.eq.s32.totalorder %v54, %v552
    %vm573 = vcmp.eq.s32.totalorder %v55, %v548
    %vm574 = vcmp.eq.s32.totalorder %v55, %v552
    %vm575 = vcmp.eq.s32.totalorder %v56, %v548
    %vm576 = vcmp.eq.s32.totalorder %v56, %v552
    %vm577 = vcmp.eq.s32.totalorder %v57, %v548
    %vm578 = vcmp.eq.s32.totalorder %v57, %v552
    %vm579 = vcmp.eq.s32.totalorder %v58, %v548
    %vm580 = vcmp.eq.s32.totalorder %v58, %v552
    %vm581 = vcmp.eq.s32.totalorder %v59, %v548
    %vm582 = vcmp.eq.s32.totalorder %v59, %v552
    %vm583 = vcmp.eq.s32.totalorder %v60, %v548
    %vm584 = vcmp.eq.s32.totalorder %v60, %v552
    %vm585 = vcmp.eq.s32.totalorder %v61, %v548
    %vm586 = vcmp.eq.s32.totalorder %v61, %v552
    %vm587 = vcmp.eq.s32.totalorder %v62, %v548
    %vm588 = vcmp.eq.s32.totalorder %v62, %v552
    %vm589 = vcmp.eq.s32.totalorder %v63, %v548
    %vm590 = vcmp.eq.s32.totalorder %v63, %v552
    %vm591 = vcmp.eq.s32.totalorder %v64, %v548
    %vm592 = vcmp.eq.s32.totalorder %v64, %v552
    %vm593 = vcmp.eq.s32.totalorder %v65, %v548
    %vm594 = vcmp.eq.s32.totalorder %v65, %v552
    %vm595 = vcmp.eq.s32.totalorder %v66, %v548
    %vm596 = vcmp.eq.s32.totalorder %v66, %v552
    %vm597 = vcmp.eq.s32.totalorder %v67, %v548
    %vm598 = vcmp.eq.s32.totalorder %v67, %v552
    %vm599 = vcmp.eq.s32.totalorder %v68, %v548
    %vm600 = vcmp.eq.s32.totalorder %v68, %v552
    %vm601 = vcmp.eq.s32.totalorder %v69, %v548
    %vm602 = vcmp.eq.s32.totalorder %v69, %v552
    %vm603 = vcmp.eq.s32.totalorder %v70, %v548
    %vm604 = vcmp.eq.s32.totalorder %v70, %v552
    %vm605 = vcmp.eq.s32.totalorder %v71, %v548
    %vm606 = vcmp.eq.s32.totalorder %v71, %v552
    %vm607 = vcmp.eq.s32.totalorder %v72, %v548
    %vm608 = vcmp.eq.s32.totalorder %v72, %v552
    %vm609 = vcmp.eq.s32.totalorder %v73, %v548
    %vm610 = vcmp.eq.s32.totalorder %v73, %v552
    %vm611 = vcmp.eq.s32.totalorder %v74, %v548
    %vm612 = vcmp.eq.s32.totalorder %v74, %v552
    %vm613 = vcmp.eq.s32.totalorder %v75, %v548
    %vm614 = vcmp.eq.s32.totalorder %v75, %v552
    %vm615 = vcmp.eq.s32.totalorder %v76, %v548
    %vm616 = vcmp.eq.s32.totalorder %v76, %v552
    %v617 = vsel %vm553, 1, 0
    %v618 = vsel %vm554, 1, 0
    %v619 = vsel %vm555, 1, 0
    %v620 = vsel %vm556, 1, 0
    %v621 = vsel %vm557, 1, 0
    %v622 = vsel %vm558, 1, 0
    %v623 = vsel %vm559, 1, 0
    %v624 = vsel %vm560, 1, 0
    %v625 = vsel %vm561, 1, 0
    %v626 = vsel %vm562, 1, 0
    %v627 = vsel %vm563, 1, 0
    %v628 = vsel %vm564, 1, 0
    %v629 = vsel %vm565, 1, 0
    %v630 = vsel %vm566, 1, 0
    %v631 = vsel %vm567, 1, 0
    %v632 = vsel %vm568, 1, 0
    %v633 = vsel %vm569, 1, 0
    %v634 = vsel %vm570, 1, 0
    %v635 = vsel %vm571, 1, 0
    %v636 = vsel %vm572, 1, 0
    %v637 = vsel %vm573, 1, 0
    %v638 = vsel %vm574, 1, 0
    %v639 = vsel %vm575, 1, 0
    %v640 = vsel %vm576, 1, 0
    %v641 = vsel %vm577, 1, 0
    %v642 = vsel %vm578, 1, 0
    %v643 = vsel %vm579, 1, 0
    %v644 = vsel %vm580, 1, 0
    %v645 = vsel %vm581, 1, 0
    %v646 = vsel %vm582, 1, 0
    %v647 = vsel %vm583, 1, 0
    %v648 = vsel %vm584, 1, 0
    %v649 = vsel %vm585, 1, 0
    %v650 = vsel %vm586, 1, 0
    %v651 = vsel %vm587, 1, 0
    %v652 = vsel %vm588, 1, 0
    %v653 = vsel %vm589, 1, 0
    %v654 = vsel %vm590, 1, 0
    %v655 = vsel %vm591, 1, 0
    %v656 = vsel %vm592, 1, 0
    %v657 = vsel %vm593, 1, 0
    %v658 = vsel %vm594, 1, 0
    %v659 = vsel %vm595, 1, 0
    %v660 = vsel %vm596, 1, 0
    %v661 = vsel %vm597, 1, 0
    %v662 = vsel %vm598, 1, 0
    %v663 = vsel %vm599, 1, 0
    %v664 = vsel %vm600, 1, 0
    %v665 = vsel %vm601, 1, 0
    %v666 = vsel %vm602, 1, 0
    %v667 = vsel %vm603, 1, 0
    %v668 = vsel %vm604, 1, 0
    %v669 = vsel %vm605, 1, 0
    %v670 = vsel %vm606, 1, 0
    %v671 = vsel %vm607, 1, 0
    %v672 = vsel %vm608, 1, 0
    %v673 = vsel %vm609, 1, 0
    %v674 = vsel %vm610, 1, 0
    %v675 = vsel %vm611, 1, 0
    %v676 = vsel %vm612, 1, 0
    %v677 = vsel %vm613, 1, 0
    %v678 = vsel %vm614, 1, 0
    %v679 = vsel %vm615, 1, 0
    %v680 = vsel %vm616, 1, 0
    %v681 = vcvt.s32.f32 %v617
    %v682 = vcvt.s32.f32 %v618
    %v683 = vcvt.s32.f32 %v619
    %v684 = vcvt.s32.f32 %v620
    %v685 = vcvt.s32.f32 %v621
    %v686 = vcvt.s32.f32 %v622
    %v687 = vcvt.s32.f32 %v623
    %v688 = vcvt.s32.f32 %v624
    %v689 = vcvt.s32.f32 %v625
    %v690 = vcvt.s32.f32 %v626
    %v691 = vcvt.s32.f32 %v627
    %v692 = vcvt.s32.f32 %v628
    %v693 = vcvt.s32.f32 %v629
    %v694 = vcvt.s32.f32 %v630
    %v695 = vcvt.s32.f32 %v631
    %v696 = vcvt.s32.f32 %v632
    %v697 = vcvt.s32.f32 %v633
    %v698 = vcvt.s32.f32 %v634
    %v699 = vcvt.s32.f32 %v635
    %v700 = vcvt.s32.f32 %v636
    %v701 = vcvt.s32.f32 %v637
    %v702 = vcvt.s32.f32 %v638
    %v703 = vcvt.s32.f32 %v639
    %v704 = vcvt.s32.f32 %v640
    %v705 = vcvt.s32.f32 %v641
    %v706 = vcvt.s32.f32 %v642
    %v707 = vcvt.s32.f32 %v643
    %v708 = vcvt.s32.f32 %v644
    %v709 = vcvt.s32.f32 %v645
    %v710 = vcvt.s32.f32 %v646
    %v711 = vcvt.s32.f32 %v647
    %v712 = vcvt.s32.f32 %v648
    %v713 = vcvt.s32.f32 %v649
    %v714 = vcvt.s32.f32 %v650
    %v715 = vcvt.s32.f32 %v651
    %v716 = vcvt.s32.f32 %v652
    %v717 = vcvt.s32.f32 %v653
    %v718 = vcvt.s32.f32 %v654
    %v719 = vcvt.s32.f32 %v655
    %v720 = vcvt.s32.f32 %v656
    %v721 = vcvt.s32.f32 %v657
    %v722 = vcvt.s32.f32 %v658
    %v723 = vcvt.s32.f32 %v659
    %v724 = vcvt.s32.f32 %v660
    %v725 = vcvt.s32.f32 %v661
    %v726 = vcvt.s32.f32 %v662
    %v727 = vcvt.s32.f32 %v663
    %v728 = vcvt.s32.f32 %v664
    %v729 = vcvt.s32.f32 %v665
    %v730 = vcvt.s32.f32 %v666
    %v731 = vcvt.s32.f32 %v667
    %v732 = vcvt.s32.f32 %v668
    %v733 = vcvt.s32.f32 %v669
    %v734 = vcvt.s32.f32 %v670
    %v735 = vcvt.s32.f32 %v671
    %v736 = vcvt.s32.f32 %v672
    %v737 = vcvt.s32.f32 %v673
    %v738 = vcvt.s32.f32 %v674
    %v739 = vcvt.s32.f32 %v675
    %v740 = vcvt.s32.f32 %v676
    %v741 = vcvt.s32.f32 %v677
    %v742 = vcvt.s32.f32 %v678
    %v743 = vcvt.s32.f32 %v679
    %v744 = vcvt.s32.f32 %v680
    %v745 = vsub.f32 %v480, %v681
    %v746 = vsub.f32 %v481, %v682
    %v747 = vsub.f32 %v482, %v683
    %v748 = vsub.f32 %v483, %v684
    %v749 = vsub.f32 %v484, %v685
    %v750 = vsub.f32 %v485, %v686
    %v751 = vsub.f32 %v486, %v687
    %v752 = vsub.f32 %v487, %v688
    %v753 = vsub.f32 %v488, %v689
    %v754 = vsub.f32 %v489, %v690
    %v755 = vsub.f32 %v490, %v691
    %v756 = vsub.f32 %v491, %v692
    %v757 = vsub.f32 %v492, %v693
    %v758 = vsub.f32 %v493, %v694
    %v759 = vsub.f32 %v494, %v695
    %v760 = vsub.f32 %v495, %v696
    %v761 = vsub.f32 %v496, %v697
    %v762 = vsub.f32 %v497, %v698
    %v763 = vsub.f32 %v498, %v699
    %v764 = vsub.f32 %v499, %v700
    %v765 = vsub.f32 %v500, %v701
    %v766 = vsub.f32 %v501, %v702
    %v767 = vsub.f32 %v502, %v703
    %v768 = vsub.f32 %v503, %v704
    %v769 = vsub.f32 %v504, %v705
    %v770 = vsub.f32 %v505, %v706
    %v771 = vsub.f32 %v506, %v707
    %v772 = vsub.f32 %v507, %v708
    %v773 = vsub.f32 %v508, %v709
    %v774 = vsub.f32 %v509, %v710
    %v775 = vsub.f32 %v510, %v711
    %v776 = vsub.f32 %v511, %v712
    %v777 = vsub.f32 %v512, %v713
    %v778 = vsub.f32 %v513, %v714
    %v779 = vsub.f32 %v514, %v715
    %v780 = vsub.f32 %v515, %v716
    %v781 = vsub.f32 %v516, %v717
    %v782 = vsub.f32 %v517, %v718
    %v783 = vsub.f32 %v518, %v719
    %v784 = vsub.f32 %v519, %v720
    %v785 = vsub.f32 %v520, %v721
    %v786 = vsub.f32 %v521, %v722
    %v787 = vsub.f32 %v522, %v723
    %v788 = vsub.f32 %v523, %v724
    %v789 = vsub.f32 %v524, %v725
    %v790 = vsub.f32 %v525, %v726
    %v791 = vsub.f32 %v526, %v727
    %v792 = vsub.f32 %v527, %v728
    %v793 = vsub.f32 %v528, %v729
    %v794 = vsub.f32 %v529, %v730
    %v795 = vsub.f32 %v530, %v731
    %v796 = vsub.f32 %v531, %v732
    %v797 = vsub.f32 %v532, %v733
    %v798 = vsub.f32 %v533, %v734
    %v799 = vsub.f32 %v534, %v735
    %v800 = vsub.f32 %v535, %v736
    %v801 = vsub.f32 %v536, %v737
    %v802 = vsub.f32 %v537, %v738
    %v803 = vsub.f32 %v538, %v739
    %v804 = vsub.f32 %v539, %v740
    %v805 = vsub.f32 %v540, %v741
    %v806 = vsub.f32 %v541, %v742
    %v807 = vsub.f32 %v542, %v743
    %v808 = vsub.f32 %v543, %v744
    %v809 = vld [vmem:[#allocation5] sm:$0xff]
    %v810 = vld [vmem:[#allocation5 + $0x8] sm:$0xff]
    %v811 = vld [vmem:[#allocation5 + $0x10] sm:$0xff]
    %v812 = vld [vmem:[#allocation5 + $0x18] sm:$0xff]
    %v813 = vld [vmem:[#allocation5 + $0x20] sm:$0xff]
    %v814 = vld [vmem:[#allocation5 + $0x28] sm:$0xff]
    %v815 = vld [vmem:[#allocation5 + $0x30] sm:$0xff]
    %v816 = vld [vmem:[#allocation5 + $0x38] sm:$0xff]
    %v817 = vld [vmem:[#allocation5 + $0x40] sm:$0xff]
    %v818 = vld [vmem:[#allocation5 + $0x48] sm:$0xff]
    %v819 = vld [vmem:[#allocation5 + $0x50] sm:$0xff]
    %v820 = vld [vmem:[#allocation5 + $0x58] sm:$0xff]
    %v821 = vld [vmem:[#allocation5 + $0x60] sm:$0xff]
    %v822 = vld [vmem:[#allocation5 + $0x68] sm:$0xff]
    %v823 = vld [vmem:[#allocation5 + $0x70] sm:$0xff]
    %v824 = vld [vmem:[#allocation5 + $0x78] sm:$0xff]
    %v825 = vld [vmem:[#allocation5 + $0x80] sm:$0xff]
    %v826 = vld [vmem:[#allocation5 + $0x88] sm:$0xff]
    %v827 = vld [vmem:[#allocation5 + $0x90] sm:$0xff]
    %v828 = vld [vmem:[#allocation5 + $0x98] sm:$0xff]
    %v829 = vld [vmem:[#allocation5 + $0xa0] sm:$0xff]
    %v830 = vld [vmem:[#allocation5 + $0xa8] sm:$0xff]
    %v831 = vld [vmem:[#allocation5 + $0xb0] sm:$0xff]
    %v832 = vld [vmem:[#allocation5 + $0xb8] sm:$0xff]
    %v833 = vld [vmem:[#allocation5 + $0xc0] sm:$0xff]
    %v834 = vld [vmem:[#allocation5 + $0xc8] sm:$0xff]
    %v835 = vld [vmem:[#allocation5 + $0xd0] sm:$0xff]
    %v836 = vld [vmem:[#allocation5 + $0xd8] sm:$0xff]
    %v837 = vld [vmem:[#allocation5 + $0xe0] sm:$0xff]
    %v838 = vld [vmem:[#allocation5 + $0xe8] sm:$0xff]
    %v839 = vld [vmem:[#allocation5 + $0xf0] sm:$0xff]
    %v840 = vld [vmem:[#allocation5 + $0xf8] sm:$0xff]
    %v841 = vand.u32 %v746, 4294901760
    %842 = vmatprep.subr.mxu0 %v841
    %v843 = vand.u32 %v745, 4294901760
    %844 = vmatpush1.msra.mxu0 %v843
    %v845 = vand.u32 %v748, 4294901760
    %846 = vmatprep.subr.mxu0 %v845
    %v847 = vand.u32 %v747, 4294901760
    %848 = vmatpush1.msra.mxu0 %v847
    %v849 = vand.u32 %v750, 4294901760
    %850 = vmatprep.subr.mxu0 %v849
    %v851 = vand.u32 %v749, 4294901760
    %852 = vmatpush1.msra.mxu0 %v851
    %v853 = vand.u32 %v752, 4294901760
    %854 = vmatprep.subr.mxu0 %v853
    %v855 = vand.u32 %v751, 4294901760
    %856 = vmatpush1.msra.mxu0 %v855
    %v857 = vand.u32 %v754, 4294901760
    %858 = vmatprep.subr.mxu0 %v857
    %v859 = vand.u32 %v753, 4294901760
    %860 = vmatpush1.msra.mxu0 %v859
    %v861 = vand.u32 %v756, 4294901760
    %862 = vmatprep.subr.mxu0 %v861
    %v863 = vand.u32 %v755, 4294901760
    %864 = vmatpush1.msra.mxu0 %v863
    %v865 = vand.u32 %v758, 4294901760
    %866 = vmatprep.subr.mxu0 %v865
    %v867 = vand.u32 %v757, 4294901760
    %868 = vmatpush1.msra.mxu0 %v867
    %v869 = vand.u32 %v760, 4294901760
    %870 = vmatprep.subr.mxu0 %v869
    %v871 = vand.u32 %v759, 4294901760
    %872 = vmatpush1.msra.mxu0 %v871
    %v873 = vand.u32 %v762, 4294901760
    %874 = vmatprep.subr.mxu0 %v873
    %v875 = vand.u32 %v761, 4294901760
    %876 = vmatpush1.msra.mxu0 %v875
    %v877 = vand.u32 %v764, 4294901760
    %878 = vmatprep.subr.mxu0 %v877
    %v879 = vand.u32 %v763, 4294901760
    %880 = vmatpush1.msra.mxu0 %v879
    %v881 = vand.u32 %v766, 4294901760
    %882 = vmatprep.subr.mxu0 %v881
    %v883 = vand.u32 %v765, 4294901760
    %884 = vmatpush1.msra.mxu0 %v883
    %v885 = vand.u32 %v768, 4294901760
    %886 = vmatprep.subr.mxu0 %v885
    %v887 = vand.u32 %v767, 4294901760
    %888 = vmatpush1.msra.mxu0 %v887
    %v889 = vand.u32 %v770, 4294901760
    %890 = vmatprep.subr.mxu0 %v889
    %v891 = vand.u32 %v769, 4294901760
    %892 = vmatpush1.msra.mxu0 %v891
    %v893 = vand.u32 %v772, 4294901760
    %894 = vmatprep.subr.mxu0 %v893
    %v895 = vand.u32 %v771, 4294901760
    %896 = vmatpush1.msra.mxu0 %v895
    %v897 = vand.u32 %v774, 4294901760
    %898 = vmatprep.subr.mxu0 %v897
    %v899 = vand.u32 %v773, 4294901760
    %900 = vmatpush1.msra.mxu0 %v899
    %v901 = vand.u32 %v776, 4294901760
    %902 = vmatprep.subr.mxu0 %v901
    %v903 = vand.u32 %v775, 4294901760
    %904 = vmatpush1.msra.mxu0 %v903
    %v905 = vand.u32 %v778, 4294901760
    %906 = vmatprep.subr.mxu0 %v905
    %v907 = vand.u32 %v777, 4294901760
    %908 = vmatpush1.msra.mxu0 %v907
    %v909 = vand.u32 %v780, 4294901760
    %910 = vmatprep.subr.mxu0 %v909
    %v911 = vand.u32 %v779, 4294901760
    %912 = vmatpush1.msra.mxu0 %v911
    %v913 = vand.u32 %v782, 4294901760
    %914 = vmatprep.subr.mxu0 %v913
    %v915 = vand.u32 %v781, 4294901760
    %916 = vmatpush1.msra.mxu0 %v915
    %v917 = vand.u32 %v784, 4294901760
    %918 = vmatprep.subr.mxu0 %v917
    %v919 = vand.u32 %v783, 4294901760
    %920 = vmatpush1.msra.mxu0 %v919
    %v921 = vand.u32 %v786, 4294901760
    %922 = vmatprep.subr.mxu0 %v921
    %v923 = vand.u32 %v785, 4294901760
    %924 = vmatpush1.msra.mxu0 %v923
    %v925 = vand.u32 %v788, 4294901760
    %926 = vmatprep.subr.mxu0 %v925
    %v927 = vand.u32 %v787, 4294901760
    %928 = vmatpush1.msra.mxu0 %v927
    %v929 = vand.u32 %v790, 4294901760
    %930 = vmatprep.subr.mxu0 %v929
    %v931 = vand.u32 %v789, 4294901760
    %932 = vmatpush1.msra.mxu0 %v931
    %v933 = vand.u32 %v792, 4294901760
    %934 = vmatprep.subr.mxu0 %v933
    %v935 = vand.u32 %v791, 4294901760
    %936 = vmatpush1.msra.mxu0 %v935
    %v937 = vand.u32 %v794, 4294901760
    %938 = vmatprep.subr.mxu0 %v937
    %v939 = vand.u32 %v793, 4294901760
    %940 = vmatpush1.msra.mxu0 %v939
    %v941 = vand.u32 %v796, 4294901760
    %942 = vmatprep.subr.mxu0 %v941
    %v943 = vand.u32 %v795, 4294901760
    %944 = vmatpush1.msra.mxu0 %v943
    %v945 = vand.u32 %v798, 4294901760
    %946 = vmatprep.subr.mxu0 %v945
    %v947 = vand.u32 %v797, 4294901760
    %948 = vmatpush1.msra.mxu0 %v947
    %v949 = vand.u32 %v800, 4294901760
    %950 = vmatprep.subr.mxu0 %v949
    %v951 = vand.u32 %v799, 4294901760
    %952 = vmatpush1.msra.mxu0 %v951
    %v953 = vand.u32 %v802, 4294901760
    %954 = vmatprep.subr.mxu0 %v953
    %v955 = vand.u32 %v801, 4294901760
    %956 = vmatpush1.msra.mxu0 %v955
    %v957 = vand.u32 %v804, 4294901760
    %958 = vmatprep.subr.mxu0 %v957
    %v959 = vand.u32 %v803, 4294901760
    %960 = vmatpush1.msra.mxu0 %v959
    %v961 = vand.u32 %v806, 4294901760
    %962 = vmatprep.subr.mxu0 %v961
    %v963 = vand.u32 %v805, 4294901760
    %964 = vmatpush1.msra.mxu0 %v963
    %v965 = vand.u32 %v808, 4294901760
    %966 = vmatprep.subr.mxu0 %v965
    %v967 = vand.u32 %v807, 4294901760
    %968 = vmatpush1.msra.mxu0 %v967
    %v969 = vand.u32 %v810, 4294901760
    %v970 = vsub.f32 %v810, %v969
    %v971 = vand.u32 %v970, 4294901760
    %v972 = vsub.f32 %v970, %v971
    %v973 = vand.u32 %v972, 4294901760
    %974 = vmatprep.mubr.f32.mxu0 %v973
    %v975 = vand.u32 %v809, 4294901760
    %v976 = vsub.f32 %v809, %v975
    %v977 = vand.u32 %v976, 4294901760
    %v978 = vsub.f32 %v976, %v977
    %v979 = vand.u32 %v978, 4294901760
    %980 = vmatmul.mubr.f32.gmra.mrb[0].mxu0 %v979
    %v981 = vpop.f32.mrb[0].mxu0
    %v982 = vadd.f32 0.0, %v981
    %v983 = vpop.f32.mrb[0].mxu0
    %v984 = vadd.f32 0.0, %v983
    %v985 = vand.u32 %v812, 4294901760
    %v986 = vsub.f32 %v812, %v985
    %v987 = vand.u32 %v986, 4294901760
    %v988 = vsub.f32 %v986, %v987
    %v989 = vand.u32 %v988, 4294901760
    %990 = vmatprep.mubr.f32.mxu0 %v989
    %v991 = vand.u32 %v811, 4294901760
    %v992 = vsub.f32 %v811, %v991
    %v993 = vand.u32 %v992, 4294901760
    %v994 = vsub.f32 %v992, %v993
    %v995 = vand.u32 %v994, 4294901760
    %996 = vmatmul.mubr.f32.gmra.mrb[0].mxu0 %v995
    %v997 = vpop.f32.mrb[0].mxu0
    %v998 = vadd.f32 0.0, %v997
    %v999 = vpop.f32.mrb[0].mxu0
    %v1000 = vadd.f32 0.0, %v999
    %v1001 = vand.u32 %v814, 4294901760
    %v1002 = vsub.f32 %v814, %v1001
    %v1003 = vand.u32 %v1002, 4294901760
    %v1004 = vsub.f32 %v1002, %v1003
    %v1005 = vand.u32 %v1004, 4294901760
    %1006 = vmatprep.mubr.f32.mxu0 %v1005
    %v1007 = vand.u32 %v813, 4294901760
    %v1008 = vsub.f32 %v813, %v1007
    %v1009 = vand.u32 %v1008, 4294901760
    %v1010 = vsub.f32 %v1008, %v1009
    %v1011 = vand.u32 %v1010, 4294901760
    %1012 = vmatmul.mubr.f32.gmra.mrb[0].mxu0 %v1011
    %v1013 = vpop.f32.mrb[0].mxu0
    %v1014 = vadd.f32 0.0, %v1013
    %v1015 = vpop.f32.mrb[0].mxu0
    %v1016 = vadd.f32 0.0, %v1015
    %v1017 = vand.u32 %v816, 4294901760
    %v1018 = vsub.f32 %v816, %v1017
    %v1019 = vand.u32 %v1018, 4294901760
    %v1020 = vsub.f32 %v1018, %v1019
    %v1021 = vand.u32 %v1020, 4294901760
    %1022 = vmatprep.mubr.f32.mxu0 %v1021
    %v1023 = vand.u32 %v815, 4294901760
    %v1024 = vsub.f32 %v815, %v1023
    %v1025 = vand.u32 %v1024, 4294901760
    %v1026 = vsub.f32 %v1024, %v1025
    %v1027 = vand.u32 %v1026, 4294901760
    %1028 = vmatmul.mubr.f32.gmra.mrb[0].mxu0 %v1027
    %v1029 = vpop.f32.mrb[0].mxu0
    %v1030 = vadd.f32 0.0, %v1029
    %v1031 = vpop.f32.mrb[0].mxu0
    %v1032 = vadd.f32 0.0, %v1031
    %v1033 = vand.u32 %v818, 4294901760
    %v1034 = vsub.f32 %v818, %v1033
    %v1035 = vand.u32 %v1034, 4294901760
    %v1036 = vsub.f32 %v1034, %v1035
    %v1037 = vand.u32 %v1036, 4294901760
    %1038 = vmatprep.mubr.f32.mxu0 %v1037
    %v1039 = vand.u32 %v817, 4294901760
    %v1040 = vsub.f32 %v817, %v1039
    %v1041 = vand.u32 %v1040, 4294901760
    %v1042 = vsub.f32 %v1040, %v1041
    %v1043 = vand.u32 %v1042, 4294901760
    %1044 = vmatmul.mubr.f32.gmra.mrb[0].mxu0 %v1043
    %v1045 = vpop.f32.mrb[0].mxu0
    %v1046 = vadd.f32 0.0, %v1045
    %v1047 = vpop.f32.mrb[0].mxu0
    %v1048 = vadd.f32 0.0, %v1047
    %v1049 = vand.u32 %v820, 4294901760
    %v1050 = vsub.f32 %v820, %v1049
    %v1051 = vand.u32 %v1050, 4294901760
    %v1052 = vsub.f32 %v1050, %v1051
    %v1053 = vand.u32 %v1052, 4294901760
    %1054 = vmatprep.mubr.f32.mxu0 %v1053
    %v1055 = vand.u32 %v819, 4294901760
    %v1056 = vsub.f32 %v819, %v1055
    %v1057 = vand.u32 %v1056, 4294901760
    %v1058 = vsub.f32 %v1056, %v1057
    %v1059 = vand.u32 %v1058, 4294901760
    %1060 = vmatmul.mubr.f32.gmra.mrb[0].mxu0 %v1059
    %v1061 = vpop.f32.mrb[0].mxu0
    %v1062 = vadd.f32 0.0, %v1061
    %v1063 = vpop.f32.mrb[0].mxu0
    %v1064 = vadd.f32 0.0, %v1063
    %v1065 = vand.u32 %v822, 4294901760
    %v1066 = vsub.f32 %v822, %v1065
    %v1067 = vand.u32 %v1066, 4294901760
    %v1068 = vsub.f32 %v1066, %v1067
    %v1069 = vand.u32 %v1068, 4294901760
    %1070 = vmatprep.mubr.f32.mxu0 %v1069
    %v1071 = vand.u32 %v821, 4294901760
    %v1072 = vsub.f32 %v821, %v1071
    %v1073 = vand.u32 %v1072, 4294901760
    %v1074 = vsub.f32 %v1072, %v1073
    %v1075 = vand.u32 %v1074, 4294901760
    %1076 = vmatmul.mubr.f32.gmra.mrb[0].mxu0 %v1075
    %v1077 = vpop.f32.mrb[0].mxu0
    %v1078 = vadd.f32 0.0, %v1077
    %v1079 = vpop.f32.mrb[0].mxu0
    %v1080 = vadd.f32 0.0, %v1079
    %v1081 = vand.u32 %v824, 4294901760
    %v1082 = vsub.f32 %v824, %v1081
    %v1083 = vand.u32 %v1082, 4294901760
    %v1084 = vsub.f32 %v1082, %v1083
    %v1085 = vand.u32 %v1084, 4294901760
    %1086 = vmatprep.mubr.f32.mxu0 %v1085
    %v1087 = vand.u32 %v823, 4294901760
    %v1088 = vsub.f32 %v823, %v1087
    %v1089 = vand.u32 %v1088, 4294901760
    %v1090 = vsub.f32 %v1088, %v1089
    %v1091 = vand.u32 %v1090, 4294901760
    %1092 = vmatmul.mubr.f32.gmra.mrb[0].mxu0 %v1091
    %v1093 = vpop.f32.mrb[0].mxu0
    %v1094 = vadd.f32 0.0, %v1093
    %v1095 = vpop.f32.mrb[0].mxu0
    %v1096 = vadd.f32 0.0, %v1095
    %v1097 = vand.u32 %v826, 4294901760
    %v1098 = vsub.f32 %v826, %v1097
    %v1099 = vand.u32 %v1098, 4294901760
    %v1100 = vsub.f32 %v1098, %v1099
    %v1101 = vand.u32 %v1100, 4294901760
    %1102 = vmatprep.mubr.f32.mxu0 %v1101
    %v1103 = vand.u32 %v825, 4294901760
    %v1104 = vsub.f32 %v825, %v1103
    %v1105 = vand.u32 %v1104, 4294901760
    %v1106 = vsub.f32 %v1104, %v1105
    %v1107 = vand.u32 %v1106, 4294901760
    %1108 = vmatmul.mubr.f32.gmra.mrb[0].mxu0 %v1107
    %v1109 = vpop.f32.mrb[0].mxu0
    %v1110 = vadd.f32 0.0, %v1109
    %v1111 = vpop.f32.mrb[0].mxu0
    %v1112 = vadd.f32 0.0, %v1111
    %v1113 = vand.u32 %v828, 4294901760
    %v1114 = vsub.f32 %v828, %v1113
    %v1115 = vand.u32 %v1114, 4294901760
    %v1116 = vsub.f32 %v1114, %v1115
    %v1117 = vand.u32 %v1116, 4294901760
    %1118 = vmatprep.mubr.f32.mxu0 %v1117
    %v1119 = vand.u32 %v827, 4294901760
    %v1120 = vsub.f32 %v827, %v1119
    %v1121 = vand.u32 %v1120, 4294901760
    %v1122 = vsub.f32 %v1120, %v1121
    %v1123 = vand.u32 %v1122, 4294901760
    %1124 = vmatmul.mubr.f32.gmra.mrb[0].mxu0 %v1123
    %v1125 = vpop.f32.mrb[0].mxu0
    %v1126 = vadd.f32 0.0, %v1125
    %v1127 = vpop.f32.mrb[0].mxu0
    %v1128 = vadd.f32 0.0, %v1127
    %v1129 = vand.u32 %v830, 4294901760
    %v1130 = vsub.f32 %v830, %v1129
    %v1131 = vand.u32 %v1130, 4294901760
    %v1132 = vsub.f32 %v1130, %v1131
    %v1133 = vand.u32 %v1132, 4294901760
    %1134 = vmatprep.mubr.f32.mxu0 %v1133
    %v1135 = vand.u32 %v829, 4294901760
    %v1136 = vsub.f32 %v829, %v1135
    %v1137 = vand.u32 %v1136, 4294901760
    %v1138 = vsub.f32 %v1136, %v1137
    %v1139 = vand.u32 %v1138, 4294901760
    %1140 = vmatmul.mubr.f32.gmra.mrb[0].mxu0 %v1139
    %v1141 = vpop.f32.mrb[0].mxu0
    %v1142 = vadd.f32 0.0, %v1141
    %v1143 = vpop.f32.mrb[0].mxu0
    %v1144 = vadd.f32 0.0, %v1143
    %v1145 = vand.u32 %v832, 4294901760
    %v1146 = vsub.f32 %v832, %v1145
    %v1147 = vand.u32 %v1146, 4294901760
    %v1148 = vsub.f32 %v1146, %v1147
    %v1149 = vand.u32 %v1148, 4294901760
    %1150 = vmatprep.mubr.f32.mxu0 %v1149
    %v1151 = vand.u32 %v831, 4294901760
    %v1152 = vsub.f32 %v831, %v1151
    %v1153 = vand.u32 %v1152, 4294901760
    %v1154 = vsub.f32 %v1152, %v1153
    %v1155 = vand.u32 %v1154, 4294901760
    %1156 = vmatmul.mubr.f32.gmra.mrb[0].mxu0 %v1155
    %v1157 = vpop.f32.mrb[0].mxu0
    %v1158 = vadd.f32 0.0, %v1157
    %v1159 = vpop.f32.mrb[0].mxu0
    %v1160 = vadd.f32 0.0, %v1159
    %v1161 = vand.u32 %v834, 4294901760
    %v1162 = vsub.f32 %v834, %v1161
    %v1163 = vand.u32 %v1162, 4294901760
    %v1164 = vsub.f32 %v1162, %v1163
    %v1165 = vand.u32 %v1164, 4294901760
    %1166 = vmatprep.mubr.f32.mxu0 %v1165
    %v1167 = vand.u32 %v833, 4294901760
    %v1168 = vsub.f32 %v833, %v1167
    %v1169 = vand.u32 %v1168, 4294901760
    %v1170 = vsub.f32 %v1168, %v1169
    %v1171 = vand.u32 %v1170, 4294901760
    %1172 = vmatmul.mubr.f32.gmra.mrb[0].mxu0 %v1171
    %v1173 = vpop.f32.mrb[0].mxu0
    %v1174 = vadd.f32 0.0, %v1173
    %v1175 = vpop.f32.mrb[0].mxu0
    %v1176 = vadd.f32 0.0, %v1175
    %v1177 = vand.u32 %v836, 4294901760
    %v1178 = vsub.f32 %v836, %v1177
    %v1179 = vand.u32 %v1178, 4294901760
    %v1180 = vsub.f32 %v1178, %v1179
    %v1181 = vand.u32 %v1180, 4294901760
    %1182 = vmatprep.mubr.f32.mxu0 %v1181
    %v1183 = vand.u32 %v835, 4294901760
    %v1184 = vsub.f32 %v835, %v1183
    %v1185 = vand.u32 %v1184, 4294901760
    %v1186 = vsub.f32 %v1184, %v1185
    %v1187 = vand.u32 %v1186, 4294901760
    %1188 = vmatmul.mubr.f32.gmra.mrb[0].mxu0 %v1187
    %v1189 = vpop.f32.mrb[0].mxu0
    %v1190 = vadd.f32 0.0, %v1189
    %v1191 = vpop.f32.mrb[0].mxu0
    %v1192 = vadd.f32 0.0, %v1191
    %v1193 = vand.u32 %v838, 4294901760
    %v1194 = vsub.f32 %v838, %v1193
    %v1195 = vand.u32 %v1194, 4294901760
    %v1196 = vsub.f32 %v1194, %v1195
    %v1197 = vand.u32 %v1196, 4294901760
    %1198 = vmatprep.mubr.f32.mxu0 %v1197
    %v1199 = vand.u32 %v837, 4294901760
    %v1200 = vsub.f32 %v837, %v1199
    %v1201 = vand.u32 %v1200, 4294901760
    %v1202 = vsub.f32 %v1200, %v1201
    %v1203 = vand.u32 %v1202, 4294901760
    %1204 = vmatmul.mubr.f32.gmra.mrb[0].mxu0 %v1203
    %v1205 = vpop.f32.mrb[0].mxu0
    %v1206 = vadd.f32 0.0, %v1205
    %v1207 = vpop.f32.mrb[0].mxu0
    %v1208 = vadd.f32 0.0, %v1207
    %v1209 = vand.u32 %v840, 4294901760
    %v1210 = vsub.f32 %v840, %v1209
    %v1211 = vand.u32 %v1210, 4294901760
    %v1212 = vsub.f32 %v1210, %v1211
    %v1213 = vand.u32 %v1212, 4294901760
    %1214 = vmatprep.mubr.f32.mxu0 %v1213
    %v1215 = vand.u32 %v839, 4294901760
    %v1216 = vsub.f32 %v839, %v1215
    %v1217 = vand.u32 %v1216, 4294901760
    %v1218 = vsub.f32 %v1216, %v1217
    %v1219 = vand.u32 %v1218, 4294901760
    %1220 = vmatmul.mubr.f32.gmra.mrb[0].mxu0 %v1219
    %v1221 = vpop.f32.mrb[0].mxu0
    %v1222 = vadd.f32 0.0, %v1221
    %v1223 = vpop.f32.mrb[0].mxu0
    %v1224 = vadd.f32 0.0, %v1223
    %1225 = vdwg.mxu0
    %v1226 = vand.u32 %v746, 4294901760
    %v1227 = vsub.f32 %v746, %v1226
    %v1228 = vand.u32 %v1227, 4294901760
    %v1229 = vsub.f32 %v1227, %v1228
    %v1230 = vand.u32 %v1229, 4294901760
    %1231 = vmatprep.subr.mxu0 %v1230
    %v1232 = vand.u32 %v745, 4294901760
    %v1233 = vsub.f32 %v745, %v1232
    %v1234 = vand.u32 %v1233, 4294901760
    %v1235 = vsub.f32 %v1233, %v1234
    %v1236 = vand.u32 %v1235, 4294901760
    %1237 = vmatpush1.msra.mxu0 %v1236
    %v1238 = vand.u32 %v748, 4294901760
    %v1239 = vsub.f32 %v748, %v1238
    %v1240 = vand.u32 %v1239, 4294901760
    %v1241 = vsub.f32 %v1239, %v1240
    %v1242 = vand.u32 %v1241, 4294901760
    %1243 = vmatprep.subr.mxu0 %v1242
    %v1244 = vand.u32 %v747, 4294901760
    %v1245 = vsub.f32 %v747, %v1244
    %v1246 = vand.u32 %v1245, 4294901760
    %v1247 = vsub.f32 %v1245, %v1246
    %v1248 = vand.u32 %v1247, 4294901760
    %1249 = vmatpush1.msra.mxu0 %v1248
    %v1250 = vand.u32 %v750, 4294901760
    %v1251 = vsub.f32 %v750, %v1250
    %v1252 = vand.u32 %v1251, 4294901760
    %v1253 = vsub.f32 %v1251, %v1252
    %v1254 = vand.u32 %v1253, 4294901760
    %1255 = vmatprep.subr.mxu0 %v1254
    %v1256 = vand.u32 %v749, 4294901760
    %v1257 = vsub.f32 %v749, %v1256
    %v1258 = vand.u32 %v1257, 4294901760
    %v1259 = vsub.f32 %v1257, %v1258
    %v1260 = vand.u32 %v1259, 4294901760
    %1261 = vmatpush1.msra.mxu0 %v1260
    %v1262 = vand.u32 %v752, 4294901760
    %v1263 = vsub.f32 %v752, %v1262
    %v1264 = vand.u32 %v1263, 4294901760
    %v1265 = vsub.f32 %v1263, %v1264
    %v1266 = vand.u32 %v1265, 4294901760
    %1267 = vmatprep.subr.mxu0 %v1266
    %v1268 = vand.u32 %v751, 4294901760
    %v1269 = vsub.f32 %v751, %v1268
    %v1270 = vand.u32 %v1269, 4294901760
    %v1271 = vsub.f32 %v1269, %v1270
    %v1272 = vand.u32 %v1271, 4294901760
    %1273 = vmatpush1.msra.mxu0 %v1272
    %v1274 = vand.u32 %v754, 4294901760
    %v1275 = vsub.f32 %v754, %v1274
    %v1276 = vand.u32 %v1275, 4294901760
    %v1277 = vsub.f32 %v1275, %v1276
    %v1278 = vand.u32 %v1277, 4294901760
    %1279 = vmatprep.subr.mxu0 %v1278
    %v1280 = vand.u32 %v753, 4294901760
    %v1281 = vsub.f32 %v753, %v1280
    %v1282 = vand.u32 %v1281, 4294901760
    %v1283 = vsub.f32 %v1281, %v1282
    %v1284 = vand.u32 %v1283, 4294901760
    %1285 = vmatpush1.msra.mxu0 %v1284
    %v1286 = vand.u32 %v756, 4294901760
    %v1287 = vsub.f32 %v756, %v1286
    %v1288 = vand.u32 %v1287, 4294901760
    %v1289 = vsub.f32 %v1287, %v1288
    %v1290 = vand.u32 %v1289, 4294901760
    %1291 = vmatprep.subr.mxu0 %v1290
    %v1292 = vand.u32 %v755, 4294901760
    %v1293 = vsub.f32 %v755, %v1292
    %v1294 = vand.u32 %v1293, 4294901760
    %v1295 = vsub.f32 %v1293, %v1294
    %v1296 = vand.u32 %v1295, 4294901760
    %1297 = vmatpush1.msra.mxu0 %v1296
    %v1298 = vand.u32 %v758, 4294901760
    %v1299 = vsub.f32 %v758, %v1298
    %v1300 = vand.u32 %v1299, 4294901760
    %v1301 = vsub.f32 %v1299, %v1300
    %v1302 = vand.u32 %v1301, 4294901760
    %1303 = vmatprep.subr.mxu0 %v1302
    %v1304 = vand.u32 %v757, 4294901760
    %v1305 = vsub.f32 %v757, %v1304
    %v1306 = vand.u32 %v1305, 4294901760
    %v1307 = vsub.f32 %v1305, %v1306
    %v1308 = vand.u32 %v1307, 4294901760
    %1309 = vmatpush1.msra.mxu0 %v1308
    %v1310 = vand.u32 %v760, 4294901760
    %v1311 = vsub.f32 %v760, %v1310
    %v1312 = vand.u32 %v1311, 4294901760
    %v1313 = vsub.f32 %v1311, %v1312
    %v1314 = vand.u32 %v1313, 4294901760
    %1315 = vmatprep.subr.mxu0 %v1314
    %v1316 = vand.u32 %v759, 4294901760
    %v1317 = vsub.f32 %v759, %v1316
    %v1318 = vand.u32 %v1317, 4294901760
    %v1319 = vsub.f32 %v1317, %v1318
    %v1320 = vand.u32 %v1319, 4294901760
    %1321 = vmatpush1.msra.mxu0 %v1320
    %v1322 = vand.u32 %v762, 4294901760
    %v1323 = vsub.f32 %v762, %v1322
    %v1324 = vand.u32 %v1323, 4294901760
    %v1325 = vsub.f32 %v1323, %v1324
    %v1326 = vand.u32 %v1325, 4294901760
    %1327 = vmatprep.subr.mxu0 %v1326
    %v1328 = vand.u32 %v761, 4294901760
    %v1329 = vsub.f32 %v761, %v1328
    %v1330 = vand.u32 %v1329, 4294901760
    %v1331 = vsub.f32 %v1329, %v1330
    %v1332 = vand.u32 %v1331, 4294901760
    %1333 = vmatpush1.msra.mxu0 %v1332
    %v1334 = vand.u32 %v764, 4294901760
    %v1335 = vsub.f32 %v764, %v1334
    %v1336 = vand.u32 %v1335, 4294901760
    %v1337 = vsub.f32 %v1335, %v1336
    %v1338 = vand.u32 %v1337, 4294901760
    %1339 = vmatprep.subr.mxu0 %v1338
    %v1340 = vand.u32 %v763, 4294901760
    %v1341 = vsub.f32 %v763, %v1340
    %v1342 = vand.u32 %v1341, 4294901760
    %v1343 = vsub.f32 %v1341, %v1342
    %v1344 = vand.u32 %v1343, 4294901760
    %1345 = vmatpush1.msra.mxu0 %v1344
    %v1346 = vand.u32 %v766, 4294901760
    %v1347 = vsub.f32 %v766, %v1346
    %v1348 = vand.u32 %v1347, 4294901760
    %v1349 = vsub.f32 %v1347, %v1348
    %v1350 = vand.u32 %v1349, 4294901760
    %1351 = vmatprep.subr.mxu0 %v1350
    %v1352 = vand.u32 %v765, 4294901760
    %v1353 = vsub.f32 %v765, %v1352
    %v1354 = vand.u32 %v1353, 4294901760
    %v1355 = vsub.f32 %v1353, %v1354
    %v1356 = vand.u32 %v1355, 4294901760
    %1357 = vmatpush1.msra.mxu0 %v1356
    %v1358 = vand.u32 %v768, 4294901760
    %v1359 = vsub.f32 %v768, %v1358
    %v1360 = vand.u32 %v1359, 4294901760
    %v1361 = vsub.f32 %v1359, %v1360
    %v1362 = vand.u32 %v1361, 4294901760
    %1363 = vmatprep.subr.mxu0 %v1362
    %v1364 = vand.u32 %v767, 4294901760
    %v1365 = vsub.f32 %v767, %v1364
    %v1366 = vand.u32 %v1365, 4294901760
    %v1367 = vsub.f32 %v1365, %v1366
    %v1368 = vand.u32 %v1367, 4294901760
    %1369 = vmatpush1.msra.mxu0 %v1368
    %v1370 = vand.u32 %v770, 4294901760
    %v1371 = vsub.f32 %v770, %v1370
    %v1372 = vand.u32 %v1371, 4294901760
    %v1373 = vsub.f32 %v1371, %v1372
    %v1374 = vand.u32 %v1373, 4294901760
    %1375 = vmatprep.subr.mxu0 %v1374
    %v1376 = vand.u32 %v769, 4294901760
    %v1377 = vsub.f32 %v769, %v1376
    %v1378 = vand.u32 %v1377, 4294901760
    %v1379 = vsub.f32 %v1377, %v1378
    %v1380 = vand.u32 %v1379, 4294901760
    %1381 = vmatpush1.msra.mxu0 %v1380
    %v1382 = vand.u32 %v772, 4294901760
    %v1383 = vsub.f32 %v772, %v1382
    %v1384 = vand.u32 %v1383, 4294901760
    %v1385 = vsub.f32 %v1383, %v1384
    %v1386 = vand.u32 %v1385, 4294901760
    %1387 = vmatprep.subr.mxu0 %v1386
    %v1388 = vand.u32 %v771, 4294901760
    %v1389 = vsub.f32 %v771, %v1388
    %v1390 = vand.u32 %v1389, 4294901760
    %v1391 = vsub.f32 %v1389, %v1390
    %v1392 = vand.u32 %v1391, 4294901760
    %1393 = vmatpush1.msra.mxu0 %v1392
    %v1394 = vand.u32 %v774, 4294901760
    %v1395 = vsub.f32 %v774, %v1394
    %v1396 = vand.u32 %v1395, 4294901760
    %v1397 = vsub.f32 %v1395, %v1396
    %v1398 = vand.u32 %v1397, 4294901760
    %1399 = vmatprep.subr.mxu0 %v1398
    %v1400 = vand.u32 %v773, 4294901760
    %v1401 = vsub.f32 %v773, %v1400
    %v1402 = vand.u32 %v1401, 4294901760
    %v1403 = vsub.f32 %v1401, %v1402
    %v1404 = vand.u32 %v1403, 4294901760
    %1405 = vmatpush1.msra.mxu0 %v1404
    %v1406 = vand.u32 %v776, 4294901760
    %v1407 = vsub.f32 %v776, %v1406
    %v1408 = vand.u32 %v1407, 4294901760
    %v1409 = vsub.f32 %v1407, %v1408
    %v1410 = vand.u32 %v1409, 4294901760
    %1411 = vmatprep.subr.mxu0 %v1410
    %v1412 = vand.u32 %v775, 4294901760
    %v1413 = vsub.f32 %v775, %v1412
    %v1414 = vand.u32 %v1413, 4294901760
    %v1415 = vsub.f32 %v1413, %v1414
    %v1416 = vand.u32 %v1415, 4294901760
    %1417 = vmatpush1.msra.mxu0 %v1416
    %v1418 = vand.u32 %v778, 4294901760
    %v1419 = vsub.f32 %v778, %v1418
    %v1420 = vand.u32 %v1419, 4294901760
    %v1421 = vsub.f32 %v1419, %v1420
    %v1422 = vand.u32 %v1421, 4294901760
    %1423 = vmatprep.subr.mxu0 %v1422
    %v1424 = vand.u32 %v777, 4294901760
    %v1425 = vsub.f32 %v777, %v1424
    %v1426 = vand.u32 %v1425, 4294901760
    %v1427 = vsub.f32 %v1425, %v1426
    %v1428 = vand.u32 %v1427, 4294901760
    %1429 = vmatpush1.msra.mxu0 %v1428
    %v1430 = vand.u32 %v780, 4294901760
    %v1431 = vsub.f32 %v780, %v1430
    %v1432 = vand.u32 %v1431, 4294901760
    %v1433 = vsub.f32 %v1431, %v1432
    %v1434 = vand.u32 %v1433, 4294901760
    %1435 = vmatprep.subr.mxu0 %v1434
    %v1436 = vand.u32 %v779, 4294901760
    %v1437 = vsub.f32 %v779, %v1436
    %v1438 = vand.u32 %v1437, 4294901760
    %v1439 = vsub.f32 %v1437, %v1438
    %v1440 = vand.u32 %v1439, 4294901760
    %1441 = vmatpush1.msra.mxu0 %v1440
    %v1442 = vand.u32 %v782, 4294901760
    %v1443 = vsub.f32 %v782, %v1442
    %v1444 = vand.u32 %v1443, 4294901760
    %v1445 = vsub.f32 %v1443, %v1444
    %v1446 = vand.u32 %v1445, 4294901760
    %1447 = vmatprep.subr.mxu0 %v1446
    %v1448 = vand.u32 %v781, 4294901760
    %v1449 = vsub.f32 %v781, %v1448
    %v1450 = vand.u32 %v1449, 4294901760
    %v1451 = vsub.f32 %v1449, %v1450
    %v1452 = vand.u32 %v1451, 4294901760
    %1453 = vmatpush1.msra.mxu0 %v1452
    %v1454 = vand.u32 %v784, 4294901760
    %v1455 = vsub.f32 %v784, %v1454
    %v1456 = vand.u32 %v1455, 4294901760
    %v1457 = vsub.f32 %v1455, %v1456
    %v1458 = vand.u32 %v1457, 4294901760
    %1459 = vmatprep.subr.mxu0 %v1458
    %v1460 = vand.u32 %v783, 4294901760
    %v1461 = vsub.f32 %v783, %v1460
    %v1462 = vand.u32 %v1461, 4294901760
    %v1463 = vsub.f32 %v1461, %v1462
    %v1464 = vand.u32 %v1463, 4294901760
    %1465 = vmatpush1.msra.mxu0 %v1464
    %v1466 = vand.u32 %v786, 4294901760
    %v1467 = vsub.f32 %v786, %v1466
    %v1468 = vand.u32 %v1467, 4294901760
    %v1469 = vsub.f32 %v1467, %v1468
    %v1470 = vand.u32 %v1469, 4294901760
    %1471 = vmatprep.subr.mxu0 %v1470
    %v1472 = vand.u32 %v785, 4294901760
    %v1473 = vsub.f32 %v785, %v1472
    %v1474 = vand.u32 %v1473, 4294901760
    %v1475 = vsub.f32 %v1473, %v1474
    %v1476 = vand.u32 %v1475, 4294901760
    %1477 = vmatpush1.msra.mxu0 %v1476
    %v1478 = vand.u32 %v788, 4294901760
    %v1479 = vsub.f32 %v788, %v1478
    %v1480 = vand.u32 %v1479, 4294901760
    %v1481 = vsub.f32 %v1479, %v1480
    %v1482 = vand.u32 %v1481, 4294901760
    %1483 = vmatprep.subr.mxu0 %v1482
    %v1484 = vand.u32 %v787, 4294901760
    %v1485 = vsub.f32 %v787, %v1484
    %v1486 = vand.u32 %v1485, 4294901760
    %v1487 = vsub.f32 %v1485, %v1486
    %v1488 = vand.u32 %v1487, 4294901760
    %1489 = vmatpush1.msra.mxu0 %v1488
    %v1490 = vand.u32 %v790, 4294901760
    %v1491 = vsub.f32 %v790, %v1490
    %v1492 = vand.u32 %v1491, 4294901760
    %v1493 = vsub.f32 %v1491, %v1492
    %v1494 = vand.u32 %v1493, 4294901760
    %1495 = vmatprep.subr.mxu0 %v1494
    %v1496 = vand.u32 %v789, 4294901760
    %v1497 = vsub.f32 %v789, %v1496
    %v1498 = vand.u32 %v1497, 4294901760
    %v1499 = vsub.f32 %v1497, %v1498
    %v1500 = vand.u32 %v1499, 4294901760
    %1501 = vmatpush1.msra.mxu0 %v1500
    %v1502 = vand.u32 %v792, 4294901760
    %v1503 = vsub.f32 %v792, %v1502
    %v1504 = vand.u32 %v1503, 4294901760
    %v1505 = vsub.f32 %v1503, %v1504
    %v1506 = vand.u32 %v1505, 4294901760
    %1507 = vmatprep.subr.mxu0 %v1506
    %v1508 = vand.u32 %v791, 4294901760
    %v1509 = vsub.f32 %v791, %v1508
    %v1510 = vand.u32 %v1509, 4294901760
    %v1511 = vsub.f32 %v1509, %v1510
    %v1512 = vand.u32 %v1511, 4294901760
    %1513 = vmatpush1.msra.mxu0 %v1512
    %v1514 = vand.u32 %v794, 4294901760
    %v1515 = vsub.f32 %v794, %v1514
    %v1516 = vand.u32 %v1515, 4294901760
    %v1517 = vsub.f32 %v1515, %v1516
    %v1518 = vand.u32 %v1517, 4294901760
    %1519 = vmatprep.subr.mxu0 %v1518
    %v1520 = vand.u32 %v793, 4294901760
    %v1521 = vsub.f32 %v793, %v1520
    %v1522 = vand.u32 %v1521, 4294901760
    %v1523 = vsub.f32 %v1521, %v1522
    %v1524 = vand.u32 %v1523, 4294901760
    %1525 = vmatpush1.msra.mxu0 %v1524
    %v1526 = vand.u32 %v796, 4294901760
    %v1527 = vsub.f32 %v796, %v1526
    %v1528 = vand.u32 %v1527, 4294901760
    %v1529 = vsub.f32 %v1527, %v1528
    %v1530 = vand.u32 %v1529, 4294901760
    %1531 = vmatprep.subr.mxu0 %v1530
    %v1532 = vand.u32 %v795, 4294901760
    %v1533 = vsub.f32 %v795, %v1532
    %v1534 = vand.u32 %v1533, 4294901760
    %v1535 = vsub.f32 %v1533, %v1534
    %v1536 = vand.u32 %v1535, 4294901760
    %1537 = vmatpush1.msra.mxu0 %v1536
    %v1538 = vand.u32 %v798, 4294901760
    %v1539 = vsub.f32 %v798, %v1538
    %v1540 = vand.u32 %v1539, 4294901760
    %v1541 = vsub.f32 %v1539, %v1540
    %v1542 = vand.u32 %v1541, 4294901760
    %1543 = vmatprep.subr.mxu0 %v1542
    %v1544 = vand.u32 %v797, 4294901760
    %v1545 = vsub.f32 %v797, %v1544
    %v1546 = vand.u32 %v1545, 4294901760
    %v1547 = vsub.f32 %v1545, %v1546
    %v1548 = vand.u32 %v1547, 4294901760
    %1549 = vmatpush1.msra.mxu0 %v1548
    %v1550 = vand.u32 %v800, 4294901760
    %v1551 = vsub.f32 %v800, %v1550
    %v1552 = vand.u32 %v1551, 4294901760
    %v1553 = vsub.f32 %v1551, %v1552
    %v1554 = vand.u32 %v1553, 4294901760
    %1555 = vmatprep.subr.mxu0 %v1554
    %v1556 = vand.u32 %v799, 4294901760
    %v1557 = vsub.f32 %v799, %v1556
    %v1558 = vand.u32 %v1557, 4294901760
    %v1559 = vsub.f32 %v1557, %v1558
    %v1560 = vand.u32 %v1559, 4294901760
    %1561 = vmatpush1.msra.mxu0 %v1560
    %v1562 = vand.u32 %v802, 4294901760
    %v1563 = vsub.f32 %v802, %v1562
    %v1564 = vand.u32 %v1563, 4294901760
    %v1565 = vsub.f32 %v1563, %v1564
    %v1566 = vand.u32 %v1565, 4294901760
    %1567 = vmatprep.subr.mxu0 %v1566
    %v1568 = vand.u32 %v801, 4294901760
    %v1569 = vsub.f32 %v801, %v1568
    %v1570 = vand.u32 %v1569, 4294901760
    %v1571 = vsub.f32 %v1569, %v1570
    %v1572 = vand.u32 %v1571, 4294901760
    %1573 = vmatpush1.msra.mxu0 %v1572
    %v1574 = vand.u32 %v804, 4294901760
    %v1575 = vsub.f32 %v804, %v1574
    %v1576 = vand.u32 %v1575, 4294901760
    %v1577 = vsub.f32 %v1575, %v1576
    %v1578 = vand.u32 %v1577, 4294901760
    %1579 = vmatprep.subr.mxu0 %v1578
    %v1580 = vand.u32 %v803, 4294901760
    %v1581 = vsub.f32 %v803, %v1580
    %v1582 = vand.u32 %v1581, 4294901760
    %v1583 = vsub.f32 %v1581, %v1582
    %v1584 = vand.u32 %v1583, 4294901760
    %1585 = vmatpush1.msra.mxu0 %v1584
    %v1586 = vand.u32 %v806, 4294901760
    %v1587 = vsub.f32 %v806, %v1586
    %v1588 = vand.u32 %v1587, 4294901760
    %v1589 = vsub.f32 %v1587, %v1588
    %v1590 = vand.u32 %v1589, 4294901760
    %1591 = vmatprep.subr.mxu0 %v1590
    %v1592 = vand.u32 %v805, 4294901760
    %v1593 = vsub.f32 %v805, %v1592
    %v1594 = vand.u32 %v1593, 4294901760
    %v1595 = vsub.f32 %v1593, %v1594
    %v1596 = vand.u32 %v1595, 4294901760
    %1597 = vmatpush1.msra.mxu0 %v1596
    %v1598 = vand.u32 %v808, 4294901760
    %v1599 = vsub.f32 %v808, %v1598
    %v1600 = vand.u32 %v1599, 4294901760
    %v1601 = vsub.f32 %v1599, %v1600
    %v1602 = vand.u32 %v1601, 4294901760
    %1603 = vmatprep.subr.mxu0 %v1602
    %v1604 = vand.u32 %v807, 4294901760
    %v1605 = vsub.f32 %v807, %v1604
    %v1606 = vand.u32 %v1605, 4294901760
    %v1607 = vsub.f32 %v1605, %v1606
    %v1608 = vand.u32 %v1607, 4294901760
    %1609 = vmatpush1.msra.mxu0 %v1608
    %v1610 = vand.u32 %v810, 4294901760
    %1611 = vmatprep.mubr.f32.mxu0 %v1610
    %v1612 = vand.u32 %v809, 4294901760
    %1613 = vmatmul.mubr.f32.gmra.mrb[0].mxu0 %v1612
    %v1614 = vpop.f32.mrb[0].mxu0
    %v1615 = vadd.f32 %v982, %v1614
    %v1616 = vpop.f32.mrb[0].mxu0
    %v1617 = vadd.f32 %v984, %v1616
    %v1618 = vand.u32 %v812, 4294901760
    %1619 = vmatprep.mubr.f32.mxu0 %v1618
    %v1620 = vand.u32 %v811, 4294901760
    %1621 = vmatmul.mubr.f32.gmra.mrb[0].mxu0 %v1620
    %v1622 = vpop.f32.mrb[0].mxu0
    %v1623 = vadd.f32 %v998, %v1622
    %v1624 = vpop.f32.mrb[0].mxu0
    %v1625 = vadd.f32 %v1000, %v1624
    %v1626 = vand.u32 %v814, 4294901760
    %1627 = vmatprep.mubr.f32.mxu0 %v1626
    %v1628 = vand.u32 %v813, 4294901760
    %1629 = vmatmul.mubr.f32.gmra.mrb[0].mxu0 %v1628
    %v1630 = vpop.f32.mrb[0].mxu0
    %v1631 = vadd.f32 %v1014, %v1630
    %v1632 = vpop.f32.mrb[0].mxu0
    %v1633 = vadd.f32 %v1016, %v1632
    %v1634 = vand.u32 %v816, 4294901760
    %1635 = vmatprep.mubr.f32.mxu0 %v1634
    %v1636 = vand.u32 %v815, 4294901760
    %1637 = vmatmul.mubr.f32.gmra.mrb[0].mxu0 %v1636
    %v1638 = vpop.f32.mrb[0].mxu0
    %v1639 = vadd.f32 %v1030, %v1638
    %v1640 = vpop.f32.mrb[0].mxu0
    %v1641 = vadd.f32 %v1032, %v1640
    %v1642 = vand.u32 %v818, 4294901760
    %1643 = vmatprep.mubr.f32.mxu0 %v1642
    %v1644 = vand.u32 %v817, 4294901760
    %1645 = vmatmul.mubr.f32.gmra.mrb[0].mxu0 %v1644
    %v1646 = vpop.f32.mrb[0].mxu0
    %v1647 = vadd.f32 %v1046, %v1646
    %v1648 = vpop.f32.mrb[0].mxu0
    %v1649 = vadd.f32 %v1048, %v1648
    %v1650 = vand.u32 %v820, 4294901760
    %1651 = vmatprep.mubr.f32.mxu0 %v1650
    %v1652 = vand.u32 %v819, 4294901760
    %1653 = vmatmul.mubr.f32.gmra.mrb[0].mxu0 %v1652
    %v1654 = vpop.f32.mrb[0].mxu0
    %v1655 = vadd.f32 %v1062, %v1654
    %v1656 = vpop.f32.mrb[0].mxu0
    %v1657 = vadd.f32 %v1064, %v1656
    %v1658 = vand.u32 %v822, 4294901760
    %1659 = vmatprep.mubr.f32.mxu0 %v1658
    %v1660 = vand.u32 %v821, 4294901760
    %1661 = vmatmul.mubr.f32.gmra.mrb[0].mxu0 %v1660
    %v1662 = vpop.f32.mrb[0].mxu0
    %v1663 = vadd.f32 %v1078, %v1662
    %v1664 = vpop.f32.mrb[0].mxu0
    %v1665 = vadd.f32 %v1080, %v1664
    %v1666 = vand.u32 %v824, 4294901760
    %1667 = vmatprep.mubr.f32.mxu0 %v1666
    %v1668 = vand.u32 %v823, 4294901760
    %1669 = vmatmul.mubr.f32.gmra.mrb[0].mxu0 %v1668
    %v1670 = vpop.f32.mrb[0].mxu0
    %v1671 = vadd.f32 %v1094, %v1670
    %v1672 = vpop.f32.mrb[0].mxu0
    %v1673 = vadd.f32 %v1096, %v1672
    %v1674 = vand.u32 %v826, 4294901760
    %1675 = vmatprep.mubr.f32.mxu0 %v1674
    %v1676 = vand.u32 %v825, 4294901760
    %1677 = vmatmul.mubr.f32.gmra.mrb[0].mxu0 %v1676
    %v1678 = vpop.f32.mrb[0].mxu0
    %v1679 = vadd.f32 %v1110, %v1678
    %v1680 = vpop.f32.mrb[0].mxu0
    %v1681 = vadd.f32 %v1112, %v1680
    %v1682 = vand.u32 %v828, 4294901760
    %1683 = vmatprep.mubr.f32.mxu0 %v1682
    %v1684 = vand.u32 %v827, 4294901760
    %1685 = vmatmul.mubr.f32.gmra.mrb[0].mxu0 %v1684
    %v1686 = vpop.f32.mrb[0].mxu0
    %v1687 = vadd.f32 %v1126, %v1686
    %v1688 = vpop.f32.mrb[0].mxu0
    %v1689 = vadd.f32 %v1128, %v1688
    %v1690 = vand.u32 %v830, 4294901760
    %1691 = vmatprep.mubr.f32.mxu0 %v1690
    %v1692 = vand.u32 %v829, 4294901760
    %1693 = vmatmul.mubr.f32.gmra.mrb[0].mxu0 %v1692
    %v1694 = vpop.f32.mrb[0].mxu0
    %v1695 = vadd.f32 %v1142, %v1694
    %v1696 = vpop.f32.mrb[0].mxu0
    %v1697 = vadd.f32 %v1144, %v1696
    %v1698 = vand.u32 %v832, 4294901760
    %1699 = vmatprep.mubr.f32.mxu0 %v1698
    %v1700 = vand.u32 %v831, 4294901760
    %1701 = vmatmul.mubr.f32.gmra.mrb[0].mxu0 %v1700
    %v1702 = vpop.f32.mrb[0].mxu0
    %v1703 = vadd.f32 %v1158, %v1702
    %v1704 = vpop.f32.mrb[0].mxu0
    %v1705 = vadd.f32 %v1160, %v1704
    %v1706 = vand.u32 %v834, 4294901760
    %1707 = vmatprep.mubr.f32.mxu0 %v1706
    %v1708 = vand.u32 %v833, 4294901760
    %1709 = vmatmul.mubr.f32.gmra.mrb[0].mxu0 %v1708
    %v1710 = vpop.f32.mrb[0].mxu0
    %v1711 = vadd.f32 %v1174, %v1710
    %v1712 = vpop.f32.mrb[0].mxu0
    %v1713 = vadd.f32 %v1176, %v1712
    %v1714 = vand.u32 %v836, 4294901760
    %1715 = vmatprep.mubr.f32.mxu0 %v1714
    %v1716 = vand.u32 %v835, 4294901760
    %1717 = vmatmul.mubr.f32.gmra.mrb[0].mxu0 %v1716
    %v1718 = vpop.f32.mrb[0].mxu0
    %v1719 = vadd.f32 %v1190, %v1718
    %v1720 = vpop.f32.mrb[0].mxu0
    %v1721 = vadd.f32 %v1192, %v1720
    %v1722 = vand.u32 %v838, 4294901760
    %1723 = vmatprep.mubr.f32.mxu0 %v1722
    %v1724 = vand.u32 %v837, 4294901760
    %1725 = vmatmul.mubr.f32.gmra.mrb[0].mxu0 %v1724
    %v1726 = vpop.f32.mrb[0].mxu0
    %v1727 = vadd.f32 %v1206, %v1726
    %v1728 = vpop.f32.mrb[0].mxu0
    %v1729 = vadd.f32 %v1208, %v1728
    %v1730 = vand.u32 %v840, 4294901760
    %1731 = vmatprep.mubr.f32.mxu0 %v1730
    %v1732 = vand.u32 %v839, 4294901760
    %1733 = vmatmul.mubr.f32.gmra.mrb[0].mxu0 %v1732
    %v1734 = vpop.f32.mrb[0].mxu0
    %v1735 = vadd.f32 %v1222, %v1734
    %v1736 = vpop.f32.mrb[0].mxu0
    %v1737 = vadd.f32 %v1224, %v1736
    %1738 = vdwg.mxu0
    %v1739 = vand.u32 %v746, 4294901760
    %v1740 = vsub.f32 %v746, %v1739
    %1741 = vmatprep.subr.mxu0 %v1740
    %v1742 = vand.u32 %v745, 4294901760
    %v1743 = vsub.f32 %v745, %v1742
    %1744 = vmatpush1.msra.mxu0 %v1743
    %v1745 = vand.u32 %v748, 4294901760
    %v1746 = vsub.f32 %v748, %v1745
    %1747 = vmatprep.subr.mxu0 %v1746
    %v1748 = vand.u32 %v747, 4294901760
    %v1749 = vsub.f32 %v747, %v1748
    %1750 = vmatpush1.msra.mxu0 %v1749
    %v1751 = vand.u32 %v750, 4294901760
    %v1752 = vsub.f32 %v750, %v1751
    %1753 = vmatprep.subr.mxu0 %v1752
    %v1754 = vand.u32 %v749, 4294901760
    %v1755 = vsub.f32 %v749, %v1754
    %1756 = vmatpush1.msra.mxu0 %v1755
    %v1757 = vand.u32 %v752, 4294901760
    %v1758 = vsub.f32 %v752, %v1757
    %1759 = vmatprep.subr.mxu0 %v1758
    %v1760 = vand.u32 %v751, 4294901760
    %v1761 = vsub.f32 %v751, %v1760
    %1762 = vmatpush1.msra.mxu0 %v1761
    %v1763 = vand.u32 %v754, 4294901760
    %v1764 = vsub.f32 %v754, %v1763
    %1765 = vmatprep.subr.mxu0 %v1764
    %v1766 = vand.u32 %v753, 4294901760
    %v1767 = vsub.f32 %v753, %v1766
    %1768 = vmatpush1.msra.mxu0 %v1767
    %v1769 = vand.u32 %v756, 4294901760
    %v1770 = vsub.f32 %v756, %v1769
    %1771 = vmatprep.subr.mxu0 %v1770
    %v1772 = vand.u32 %v755, 4294901760
    %v1773 = vsub.f32 %v755, %v1772
    %1774 = vmatpush1.msra.mxu0 %v1773
    %v1775 = vand.u32 %v758, 4294901760
    %v1776 = vsub.f32 %v758, %v1775
    %1777 = vmatprep.subr.mxu0 %v1776
    %v1778 = vand.u32 %v757, 4294901760
    %v1779 = vsub.f32 %v757, %v1778
    %1780 = vmatpush1.msra.mxu0 %v1779
    %v1781 = vand.u32 %v760, 4294901760
    %v1782 = vsub.f32 %v760, %v1781
    %1783 = vmatprep.subr.mxu0 %v1782
    %v1784 = vand.u32 %v759, 4294901760
    %v1785 = vsub.f32 %v759, %v1784
    %1786 = vmatpush1.msra.mxu0 %v1785
    %v1787 = vand.u32 %v762, 4294901760
    %v1788 = vsub.f32 %v762, %v1787
    %1789 = vmatprep.subr.mxu0 %v1788
    %v1790 = vand.u32 %v761, 4294901760
    %v1791 = vsub.f32 %v761, %v1790
    %1792 = vmatpush1.msra.mxu0 %v1791
    %v1793 = vand.u32 %v764, 4294901760
    %v1794 = vsub.f32 %v764, %v1793
    %1795 = vmatprep.subr.mxu0 %v1794
    %v1796 = vand.u32 %v763, 4294901760
    %v1797 = vsub.f32 %v763, %v1796
    %1798 = vmatpush1.msra.mxu0 %v1797
    %v1799 = vand.u32 %v766, 4294901760
    %v1800 = vsub.f32 %v766, %v1799
    %1801 = vmatprep.subr.mxu0 %v1800
    %v1802 = vand.u32 %v765, 4294901760
    %v1803 = vsub.f32 %v765, %v1802
    %1804 = vmatpush1.msra.mxu0 %v1803
    %v1805 = vand.u32 %v768, 4294901760
    %v1806 = vsub.f32 %v768, %v1805
    %1807 = vmatprep.subr.mxu0 %v1806
    %v1808 = vand.u32 %v767, 4294901760
    %v1809 = vsub.f32 %v767, %v1808
    %1810 = vmatpush1.msra.mxu0 %v1809
    %v1811 = vand.u32 %v770, 4294901760
    %v1812 = vsub.f32 %v770, %v1811
    %1813 = vmatprep.subr.mxu0 %v1812
    %v1814 = vand.u32 %v769, 4294901760
    %v1815 = vsub.f32 %v769, %v1814
    %1816 = vmatpush1.msra.mxu0 %v1815
    %v1817 = vand.u32 %v772, 4294901760
    %v1818 = vsub.f32 %v772, %v1817
    %1819 = vmatprep.subr.mxu0 %v1818
    %v1820 = vand.u32 %v771, 4294901760
    %v1821 = vsub.f32 %v771, %v1820
    %1822 = vmatpush1.msra.mxu0 %v1821
    %v1823 = vand.u32 %v774, 4294901760
    %v1824 = vsub.f32 %v774, %v1823
    %1825 = vmatprep.subr.mxu0 %v1824
    %v1826 = vand.u32 %v773, 4294901760
    %v1827 = vsub.f32 %v773, %v1826
    %1828 = vmatpush1.msra.mxu0 %v1827
    %v1829 = vand.u32 %v776, 4294901760
    %v1830 = vsub.f32 %v776, %v1829
    %1831 = vmatprep.subr.mxu0 %v1830
    %v1832 = vand.u32 %v775, 4294901760
    %v1833 = vsub.f32 %v775, %v1832
    %1834 = vmatpush1.msra.mxu0 %v1833
    %v1835 = vand.u32 %v778, 4294901760
    %v1836 = vsub.f32 %v778, %v1835
    %1837 = vmatprep.subr.mxu0 %v1836
    %v1838 = vand.u32 %v777, 4294901760
    %v1839 = vsub.f32 %v777, %v1838
    %1840 = vmatpush1.msra.mxu0 %v1839
    %v1841 = vand.u32 %v780, 4294901760
    %v1842 = vsub.f32 %v780, %v1841
    %1843 = vmatprep.subr.mxu0 %v1842
    %v1844 = vand.u32 %v779, 4294901760
    %v1845 = vsub.f32 %v779, %v1844
    %1846 = vmatpush1.msra.mxu0 %v1845
    %v1847 = vand.u32 %v782, 4294901760
    %v1848 = vsub.f32 %v782, %v1847
    %1849 = vmatprep.subr.mxu0 %v1848
    %v1850 = vand.u32 %v781, 4294901760
    %v1851 = vsub.f32 %v781, %v1850
    %1852 = vmatpush1.msra.mxu0 %v1851
    %v1853 = vand.u32 %v784, 4294901760
    %v1854 = vsub.f32 %v784, %v1853
    %1855 = vmatprep.subr.mxu0 %v1854
    %v1856 = vand.u32 %v783, 4294901760
    %v1857 = vsub.f32 %v783, %v1856
    %1858 = vmatpush1.msra.mxu0 %v1857
    %v1859 = vand.u32 %v786, 4294901760
    %v1860 = vsub.f32 %v786, %v1859
    %1861 = vmatprep.subr.mxu0 %v1860
    %v1862 = vand.u32 %v785, 4294901760
    %v1863 = vsub.f32 %v785, %v1862
    %1864 = vmatpush1.msra.mxu0 %v1863
    %v1865 = vand.u32 %v788, 4294901760
    %v1866 = vsub.f32 %v788, %v1865
    %1867 = vmatprep.subr.mxu0 %v1866
    %v1868 = vand.u32 %v787, 4294901760
    %v1869 = vsub.f32 %v787, %v1868
    %1870 = vmatpush1.msra.mxu0 %v1869
    %v1871 = vand.u32 %v790, 4294901760
    %v1872 = vsub.f32 %v790, %v1871
    %1873 = vmatprep.subr.mxu0 %v1872
    %v1874 = vand.u32 %v789, 4294901760
    %v1875 = vsub.f32 %v789, %v1874
    %1876 = vmatpush1.msra.mxu0 %v1875
    %v1877 = vand.u32 %v792, 4294901760
    %v1878 = vsub.f32 %v792, %v1877
    %1879 = vmatprep.subr.mxu0 %v1878
    %v1880 = vand.u32 %v791, 4294901760
    %v1881 = vsub.f32 %v791, %v1880
    %1882 = vmatpush1.msra.mxu0 %v1881
    %v1883 = vand.u32 %v794, 4294901760
    %v1884 = vsub.f32 %v794, %v1883
    %1885 = vmatprep.subr.mxu0 %v1884
    %v1886 = vand.u32 %v793, 4294901760
    %v1887 = vsub.f32 %v793, %v1886
    %1888 = vmatpush1.msra.mxu0 %v1887
    %v1889 = vand.u32 %v796, 4294901760
    %v1890 = vsub.f32 %v796, %v1889
    %1891 = vmatprep.subr.mxu0 %v1890
    %v1892 = vand.u32 %v795, 4294901760
    %v1893 = vsub.f32 %v795, %v1892
    %1894 = vmatpush1.msra.mxu0 %v1893
    %v1895 = vand.u32 %v798, 4294901760
    %v1896 = vsub.f32 %v798, %v1895
    %1897 = vmatprep.subr.mxu0 %v1896
    %v1898 = vand.u32 %v797, 4294901760
    %v1899 = vsub.f32 %v797, %v1898
    %1900 = vmatpush1.msra.mxu0 %v1899
    %v1901 = vand.u32 %v800, 4294901760
    %v1902 = vsub.f32 %v800, %v1901
    %1903 = vmatprep.subr.mxu0 %v1902
    %v1904 = vand.u32 %v799, 4294901760
    %v1905 = vsub.f32 %v799, %v1904
    %1906 = vmatpush1.msra.mxu0 %v1905
    %v1907 = vand.u32 %v802, 4294901760
    %v1908 = vsub.f32 %v802, %v1907
    %1909 = vmatprep.subr.mxu0 %v1908
    %v1910 = vand.u32 %v801, 4294901760
    %v1911 = vsub.f32 %v801, %v1910
    %1912 = vmatpush1.msra.mxu0 %v1911
    %v1913 = vand.u32 %v804, 4294901760
    %v1914 = vsub.f32 %v804, %v1913
    %1915 = vmatprep.subr.mxu0 %v1914
    %v1916 = vand.u32 %v803, 4294901760
    %v1917 = vsub.f32 %v803, %v1916
    %1918 = vmatpush1.msra.mxu0 %v1917
    %v1919 = vand.u32 %v806, 4294901760
    %v1920 = vsub.f32 %v806, %v1919
    %1921 = vmatprep.subr.mxu0 %v1920
    %v1922 = vand.u32 %v805, 4294901760
    %v1923 = vsub.f32 %v805, %v1922
    %1924 = vmatpush1.msra.mxu0 %v1923
    %v1925 = vand.u32 %v808, 4294901760
    %v1926 = vsub.f32 %v808, %v1925
    %1927 = vmatprep.subr.mxu0 %v1926
    %v1928 = vand.u32 %v807, 4294901760
    %v1929 = vsub.f32 %v807, %v1928
    %1930 = vmatpush1.msra.mxu0 %v1929
    %v1931 = vand.u32 %v810, 4294901760
    %v1932 = vsub.f32 %v810, %v1931
    %1933 = vmatprep.mubr.f32.mxu0 %v1932
    %v1934 = vand.u32 %v809, 4294901760
    %v1935 = vsub.f32 %v809, %v1934
    %1936 = vmatmul.mubr.f32.gmra.mrb[0].mxu0 %v1935
    %v1937 = vpop.f32.mrb[0].mxu0
    %v1938 = vadd.f32 %v1615, %v1937
    %v1939 = vpop.f32.mrb[0].mxu0
    %v1940 = vadd.f32 %v1617, %v1939
    %v1941 = vand.u32 %v812, 4294901760
    %v1942 = vsub.f32 %v812, %v1941
    %1943 = vmatprep.mubr.f32.mxu0 %v1942
    %v1944 = vand.u32 %v811, 4294901760
    %v1945 = vsub.f32 %v811, %v1944
    %1946 = vmatmul.mubr.f32.gmra.mrb[0].mxu0 %v1945
    %v1947 = vpop.f32.mrb[0].mxu0
    %v1948 = vadd.f32 %v1623, %v1947
    %v1949 = vpop.f32.mrb[0].mxu0
    %v1950 = vadd.f32 %v1625, %v1949
    %v1951 = vand.u32 %v814, 4294901760
    %v1952 = vsub.f32 %v814, %v1951
    %1953 = vmatprep.mubr.f32.mxu0 %v1952
    %v1954 = vand.u32 %v813, 4294901760
    %v1955 = vsub.f32 %v813, %v1954
    %1956 = vmatmul.mubr.f32.gmra.mrb[0].mxu0 %v1955
    %v1957 = vpop.f32.mrb[0].mxu0
    %v1958 = vadd.f32 %v1631, %v1957
    %v1959 = vpop.f32.mrb[0].mxu0
    %v1960 = vadd.f32 %v1633, %v1959
    %v1961 = vand.u32 %v816, 4294901760
    %v1962 = vsub.f32 %v816, %v1961
    %1963 = vmatprep.mubr.f32.mxu0 %v1962
    %v1964 = vand.u32 %v815, 4294901760
    %v1965 = vsub.f32 %v815, %v1964
    %1966 = vmatmul.mubr.f32.gmra.mrb[0].mxu0 %v1965
    %v1967 = vpop.f32.mrb[0].mxu0
    %v1968 = vadd.f32 %v1639, %v1967
    %v1969 = vpop.f32.mrb[0].mxu0
    %v1970 = vadd.f32 %v1641, %v1969
    %v1971 = vand.u32 %v818, 4294901760
    %v1972 = vsub.f32 %v818, %v1971
    %1973 = vmatprep.mubr.f32.mxu0 %v1972
    %v1974 = vand.u32 %v817, 4294901760
    %v1975 = vsub.f32 %v817, %v1974
    %1976 = vmatmul.mubr.f32.gmra.mrb[0].mxu0 %v1975
    %v1977 = vpop.f32.mrb[0].mxu0
    %v1978 = vadd.f32 %v1647, %v1977
    %v1979 = vpop.f32.mrb[0].mxu0
    %v1980 = vadd.f32 %v1649, %v1979
    %v1981 = vand.u32 %v820, 4294901760
    %v1982 = vsub.f32 %v820, %v1981
    %1983 = vmatprep.mubr.f32.mxu0 %v1982
    %v1984 = vand.u32 %v819, 4294901760
    %v1985 = vsub.f32 %v819, %v1984
    %1986 = vmatmul.mubr.f32.gmra.mrb[0].mxu0 %v1985
    %v1987 = vpop.f32.mrb[0].mxu0
    %v1988 = vadd.f32 %v1655, %v1987
    %v1989 = vpop.f32.mrb[0].mxu0
    %v1990 = vadd.f32 %v1657, %v1989
    %v1991 = vand.u32 %v822, 4294901760
    %v1992 = vsub.f32 %v822, %v1991
    %1993 = vmatprep.mubr.f32.mxu0 %v1992
    %v1994 = vand.u32 %v821, 4294901760
    %v1995 = vsub.f32 %v821, %v1994
    %1996 = vmatmul.mubr.f32.gmra.mrb[0].mxu0 %v1995
    %v1997 = vpop.f32.mrb[0].mxu0
    %v1998 = vadd.f32 %v1663, %v1997
    %v1999 = vpop.f32.mrb[0].mxu0
    %v2000 = vadd.f32 %v1665, %v1999
    %v2001 = vand.u32 %v824, 4294901760
    %v2002 = vsub.f32 %v824, %v2001
    %2003 = vmatprep.mubr.f32.mxu0 %v2002
    %v2004 = vand.u32 %v823, 4294901760
    %v2005 = vsub.f32 %v823, %v2004
    %2006 = vmatmul.mubr.f32.gmra.mrb[0].mxu0 %v2005
    %v2007 = vpop.f32.mrb[0].mxu0
    %v2008 = vadd.f32 %v1671, %v2007
    %v2009 = vpop.f32.mrb[0].mxu0
    %v2010 = vadd.f32 %v1673, %v2009
    %v2011 = vand.u32 %v826, 4294901760
    %v2012 = vsub.f32 %v826, %v2011
    %2013 = vmatprep.mubr.f32.mxu0 %v2012
    %v2014 = vand.u32 %v825, 4294901760
    %v2015 = vsub.f32 %v825, %v2014
    %2016 = vmatmul.mubr.f32.gmra.mrb[0].mxu0 %v2015
    %v2017 = vpop.f32.mrb[0].mxu0
    %v2018 = vadd.f32 %v1679, %v2017
    %v2019 = vpop.f32.mrb[0].mxu0
    %v2020 = vadd.f32 %v1681, %v2019
    %v2021 = vand.u32 %v828, 4294901760
    %v2022 = vsub.f32 %v828, %v2021
    %2023 = vmatprep.mubr.f32.mxu0 %v2022
    %v2024 = vand.u32 %v827, 4294901760
    %v2025 = vsub.f32 %v827, %v2024
    %2026 = vmatmul.mubr.f32.gmra.mrb[0].mxu0 %v2025
    %v2027 = vpop.f32.mrb[0].mxu0
    %v2028 = vadd.f32 %v1687, %v2027
    %v2029 = vpop.f32.mrb[0].mxu0
    %v2030 = vadd.f32 %v1689, %v2029
    %v2031 = vand.u32 %v830, 4294901760
    %v2032 = vsub.f32 %v830, %v2031
    %2033 = vmatprep.mubr.f32.mxu0 %v2032
    %v2034 = vand.u32 %v829, 4294901760
    %v2035 = vsub.f32 %v829, %v2034
    %2036 = vmatmul.mubr.f32.gmra.mrb[0].mxu0 %v2035
    %v2037 = vpop.f32.mrb[0].mxu0
    %v2038 = vadd.f32 %v1695, %v2037
    %v2039 = vpop.f32.mrb[0].mxu0
    %v2040 = vadd.f32 %v1697, %v2039
    %v2041 = vand.u32 %v832, 4294901760
    %v2042 = vsub.f32 %v832, %v2041
    %2043 = vmatprep.mubr.f32.mxu0 %v2042
    %v2044 = vand.u32 %v831, 4294901760
    %v2045 = vsub.f32 %v831, %v2044
    %2046 = vmatmul.mubr.f32.gmra.mrb[0].mxu0 %v2045
    %v2047 = vpop.f32.mrb[0].mxu0
    %v2048 = vadd.f32 %v1703, %v2047
    %v2049 = vpop.f32.mrb[0].mxu0
    %v2050 = vadd.f32 %v1705, %v2049
    %v2051 = vand.u32 %v834, 4294901760
    %v2052 = vsub.f32 %v834, %v2051
    %2053 = vmatprep.mubr.f32.mxu0 %v2052
    %v2054 = vand.u32 %v833, 4294901760
    %v2055 = vsub.f32 %v833, %v2054
    %2056 = vmatmul.mubr.f32.gmra.mrb[0].mxu0 %v2055
    %v2057 = vpop.f32.mrb[0].mxu0
    %v2058 = vadd.f32 %v1711, %v2057
    %v2059 = vpop.f32.mrb[0].mxu0
    %v2060 = vadd.f32 %v1713, %v2059
    %v2061 = vand.u32 %v836, 4294901760
    %v2062 = vsub.f32 %v836, %v2061
    %2063 = vmatprep.mubr.f32.mxu0 %v2062
    %v2064 = vand.u32 %v835, 4294901760
    %v2065 = vsub.f32 %v835, %v2064
    %2066 = vmatmul.mubr.f32.gmra.mrb[0].mxu0 %v2065
    %v2067 = vpop.f32.mrb[0].mxu0
    %v2068 = vadd.f32 %v1719, %v2067
    %v2069 = vpop.f32.mrb[0].mxu0
    %v2070 = vadd.f32 %v1721, %v2069
    %v2071 = vand.u32 %v838, 4294901760
    %v2072 = vsub.f32 %v838, %v2071
    %2073 = vmatprep.mubr.f32.mxu0 %v2072
    %v2074 = vand.u32 %v837, 4294901760
    %v2075 = vsub.f32 %v837, %v2074
    %2076 = vmatmul.mubr.f32.gmra.mrb[0].mxu0 %v2075
    %v2077 = vpop.f32.mrb[0].mxu0
    %v2078 = vadd.f32 %v1727, %v2077
    %v2079 = vpop.f32.mrb[0].mxu0
    %v2080 = vadd.f32 %v1729, %v2079
    %v2081 = vand.u32 %v840, 4294901760
    %v2082 = vsub.f32 %v840, %v2081
    %2083 = vmatprep.mubr.f32.mxu0 %v2082
    %v2084 = vand.u32 %v839, 4294901760
    %v2085 = vsub.f32 %v839, %v2084
    %2086 = vmatmul.mubr.f32.gmra.mrb[0].mxu0 %v2085
    %v2087 = vpop.f32.mrb[0].mxu0
    %v2088 = vadd.f32 %v1735, %v2087
    %v2089 = vpop.f32.mrb[0].mxu0
    %v2090 = vadd.f32 %v1737, %v2089
    %2091 = vdwg.mxu0
    %v2092 = vand.u32 %v746, 4294901760
    %2093 = vmatprep.subr.mxu0 %v2092
    %v2094 = vand.u32 %v745, 4294901760
    %2095 = vmatpush1.msra.mxu0 %v2094
    %v2096 = vand.u32 %v748, 4294901760
    %2097 = vmatprep.subr.mxu0 %v2096
    %v2098 = vand.u32 %v747, 4294901760
    %2099 = vmatpush1.msra.mxu0 %v2098
    %v2100 = vand.u32 %v750, 4294901760
    %2101 = vmatprep.subr.mxu0 %v2100
    %v2102 = vand.u32 %v749, 4294901760
    %2103 = vmatpush1.msra.mxu0 %v2102
    %v2104 = vand.u32 %v752, 4294901760
    %2105 = vmatprep.subr.mxu0 %v2104
    %v2106 = vand.u32 %v751, 4294901760
    %2107 = vmatpush1.msra.mxu0 %v2106
    %v2108 = vand.u32 %v754, 4294901760
    %2109 = vmatprep.subr.mxu0 %v2108
    %v2110 = vand.u32 %v753, 4294901760
    %2111 = vmatpush1.msra.mxu0 %v2110
    %v2112 = vand.u32 %v756, 4294901760
    %2113 = vmatprep.subr.mxu0 %v2112
    %v2114 = vand.u32 %v755, 4294901760
    %2115 = vmatpush1.msra.mxu0 %v2114
    %v2116 = vand.u32 %v758, 4294901760
    %2117 = vmatprep.subr.mxu0 %v2116
    %v2118 = vand.u32 %v757, 4294901760
    %2119 = vmatpush1.msra.mxu0 %v2118
    %v2120 = vand.u32 %v760, 4294901760
    %2121 = vmatprep.subr.mxu0 %v2120
    %v2122 = vand.u32 %v759, 4294901760
    %2123 = vmatpush1.msra.mxu0 %v2122
    %v2124 = vand.u32 %v762, 4294901760
    %2125 = vmatprep.subr.mxu0 %v2124
    %v2126 = vand.u32 %v761, 4294901760
    %2127 = vmatpush1.msra.mxu0 %v2126
    %v2128 = vand.u32 %v764, 4294901760
    %2129 = vmatprep.subr.mxu0 %v2128
    %v2130 = vand.u32 %v763, 4294901760
    %2131 = vmatpush1.msra.mxu0 %v2130
    %v2132 = vand.u32 %v766, 4294901760
    %2133 = vmatprep.subr.mxu0 %v2132
    %v2134 = vand.u32 %v765, 4294901760
    %2135 = vmatpush1.msra.mxu0 %v2134
    %v2136 = vand.u32 %v768, 4294901760
    %2137 = vmatprep.subr.mxu0 %v2136
    %v2138 = vand.u32 %v767, 4294901760
    %2139 = vmatpush1.msra.mxu0 %v2138
    %v2140 = vand.u32 %v770, 4294901760
    %2141 = vmatprep.subr.mxu0 %v2140
    %v2142 = vand.u32 %v769, 4294901760
    %2143 = vmatpush1.msra.mxu0 %v2142
    %v2144 = vand.u32 %v772, 4294901760
    %2145 = vmatprep.subr.mxu0 %v2144
    %v2146 = vand.u32 %v771, 4294901760
    %2147 = vmatpush1.msra.mxu0 %v2146
    %v2148 = vand.u32 %v774, 4294901760
    %2149 = vmatprep.subr.mxu0 %v2148
    %v2150 = vand.u32 %v773, 4294901760
    %2151 = vmatpush1.msra.mxu0 %v2150
    %v2152 = vand.u32 %v776, 4294901760
    %2153 = vmatprep.subr.mxu0 %v2152
    %v2154 = vand.u32 %v775, 4294901760
    %2155 = vmatpush1.msra.mxu0 %v2154
    %v2156 = vand.u32 %v778, 4294901760
    %2157 = vmatprep.subr.mxu0 %v2156
    %v2158 = vand.u32 %v777, 4294901760
    %2159 = vmatpush1.msra.mxu0 %v2158
    %v2160 = vand.u32 %v780, 4294901760
    %2161 = vmatprep.subr.mxu0 %v2160
    %v2162 = vand.u32 %v779, 4294901760
    %2163 = vmatpush1.msra.mxu0 %v2162
    %v2164 = vand.u32 %v782, 4294901760
    %2165 = vmatprep.subr.mxu0 %v2164
    %v2166 = vand.u32 %v781, 4294901760
    %2167 = vmatpush1.msra.mxu0 %v2166
    %v2168 = vand.u32 %v784, 4294901760
    %2169 = vmatprep.subr.mxu0 %v2168
    %v2170 = vand.u32 %v783, 4294901760
    %2171 = vmatpush1.msra.mxu0 %v2170
    %v2172 = vand.u32 %v786, 4294901760
    %2173 = vmatprep.subr.mxu0 %v2172
    %v2174 = vand.u32 %v785, 4294901760
    %2175 = vmatpush1.msra.mxu0 %v2174
    %v2176 = vand.u32 %v788, 4294901760
    %2177 = vmatprep.subr.mxu0 %v2176
    %v2178 = vand.u32 %v787, 4294901760
    %2179 = vmatpush1.msra.mxu0 %v2178
    %v2180 = vand.u32 %v790, 4294901760
    %2181 = vmatprep.subr.mxu0 %v2180
    %v2182 = vand.u32 %v789, 4294901760
    %2183 = vmatpush1.msra.mxu0 %v2182
    %v2184 = vand.u32 %v792, 4294901760
    %2185 = vmatprep.subr.mxu0 %v2184
    %v2186 = vand.u32 %v791, 4294901760
    %2187 = vmatpush1.msra.mxu0 %v2186
    %v2188 = vand.u32 %v794, 4294901760
    %2189 = vmatprep.subr.mxu0 %v2188
    %v2190 = vand.u32 %v793, 4294901760
    %2191 = vmatpush1.msra.mxu0 %v2190
    %v2192 = vand.u32 %v796, 4294901760
    %2193 = vmatprep.subr.mxu0 %v2192
    %v2194 = vand.u32 %v795, 4294901760
    %2195 = vmatpush1.msra.mxu0 %v2194
    %v2196 = vand.u32 %v798, 4294901760
    %2197 = vmatprep.subr.mxu0 %v2196
    %v2198 = vand.u32 %v797, 4294901760
    %2199 = vmatpush1.msra.mxu0 %v2198
    %v2200 = vand.u32 %v800, 4294901760
    %2201 = vmatprep.subr.mxu0 %v2200
    %v2202 = vand.u32 %v799, 4294901760
    %2203 = vmatpush1.msra.mxu0 %v2202
    %v2204 = vand.u32 %v802, 4294901760
    %2205 = vmatprep.subr.mxu0 %v2204
    %v2206 = vand.u32 %v801, 4294901760
    %2207 = vmatpush1.msra.mxu0 %v2206
    %v2208 = vand.u32 %v804, 4294901760
    %2209 = vmatprep.subr.mxu0 %v2208
    %v2210 = vand.u32 %v803, 4294901760
    %2211 = vmatpush1.msra.mxu0 %v2210
    %v2212 = vand.u32 %v806, 4294901760
    %2213 = vmatprep.subr.mxu0 %v2212
    %v2214 = vand.u32 %v805, 4294901760
    %2215 = vmatpush1.msra.mxu0 %v2214
    %v2216 = vand.u32 %v808, 4294901760
    %2217 = vmatprep.subr.mxu0 %v2216
    %v2218 = vand.u32 %v807, 4294901760
    %2219 = vmatpush1.msra.mxu0 %v2218
    %v2220 = vand.u32 %v810, 4294901760
    %v2221 = vsub.f32 %v810, %v2220
    %v2222 = vand.u32 %v2221, 4294901760
    %2223 = vmatprep.mubr.f32.mxu0 %v2222
    %v2224 = vand.u32 %v809, 4294901760
    %v2225 = vsub.f32 %v809, %v2224
    %v2226 = vand.u32 %v2225, 4294901760
    %2227 = vmatmul.mubr.f32.gmra.mrb[0].mxu0 %v2226
    %v2228 = vpop.f32.mrb[0].mxu0
    %v2229 = vadd.f32 %v1938, %v2228
    %v2230 = vpop.f32.mrb[0].mxu0
    %v2231 = vadd.f32 %v1940, %v2230
    %v2232 = vand.u32 %v812, 4294901760
    %v2233 = vsub.f32 %v812, %v2232
    %v2234 = vand.u32 %v2233, 4294901760
    %2235 = vmatprep.mubr.f32.mxu0 %v2234
    %v2236 = vand.u32 %v811, 4294901760
    %v2237 = vsub.f32 %v811, %v2236
    %v2238 = vand.u32 %v2237, 4294901760
    %2239 = vmatmul.mubr.f32.gmra.mrb[0].mxu0 %v2238
    %v2240 = vpop.f32.mrb[0].mxu0
    %v2241 = vadd.f32 %v1948, %v2240
    %v2242 = vpop.f32.mrb[0].mxu0
    %v2243 = vadd.f32 %v1950, %v2242
    %v2244 = vand.u32 %v814, 4294901760
    %v2245 = vsub.f32 %v814, %v2244
    %v2246 = vand.u32 %v2245, 4294901760
    %2247 = vmatprep.mubr.f32.mxu0 %v2246
    %v2248 = vand.u32 %v813, 4294901760
    %v2249 = vsub.f32 %v813, %v2248
    %v2250 = vand.u32 %v2249, 4294901760
    %2251 = vmatmul.mubr.f32.gmra.mrb[0].mxu0 %v2250
    %v2252 = vpop.f32.mrb[0].mxu0
    %v2253 = vadd.f32 %v1958, %v2252
    %v2254 = vpop.f32.mrb[0].mxu0
    %v2255 = vadd.f32 %v1960, %v2254
    %v2256 = vand.u32 %v816, 4294901760
    %v2257 = vsub.f32 %v816, %v2256
    %v2258 = vand.u32 %v2257, 4294901760
    %2259 = vmatprep.mubr.f32.mxu0 %v2258
    %v2260 = vand.u32 %v815, 4294901760
    %v2261 = vsub.f32 %v815, %v2260
    %v2262 = vand.u32 %v2261, 4294901760
    %2263 = vmatmul.mubr.f32.gmra.mrb[0].mxu0 %v2262
    %v2264 = vpop.f32.mrb[0].mxu0
    %v2265 = vadd.f32 %v1968, %v2264
    %v2266 = vpop.f32.mrb[0].mxu0
    %v2267 = vadd.f32 %v1970, %v2266
    %v2268 = vand.u32 %v818, 4294901760
    %v2269 = vsub.f32 %v818, %v2268
    %v2270 = vand.u32 %v2269, 4294901760
    %2271 = vmatprep.mubr.f32.mxu0 %v2270
    %v2272 = vand.u32 %v817, 4294901760
    %v2273 = vsub.f32 %v817, %v2272
    %v2274 = vand.u32 %v2273, 4294901760
    %2275 = vmatmul.mubr.f32.gmra.mrb[0].mxu0 %v2274
    %v2276 = vpop.f32.mrb[0].mxu0
    %v2277 = vadd.f32 %v1978, %v2276
    %v2278 = vpop.f32.mrb[0].mxu0
    %v2279 = vadd.f32 %v1980, %v2278
    %v2280 = vand.u32 %v820, 4294901760
    %v2281 = vsub.f32 %v820, %v2280
    %v2282 = vand.u32 %v2281, 4294901760
    %2283 = vmatprep.mubr.f32.mxu0 %v2282
    %v2284 = vand.u32 %v819, 4294901760
    %v2285 = vsub.f32 %v819, %v2284
    %v2286 = vand.u32 %v2285, 4294901760
    %2287 = vmatmul.mubr.f32.gmra.mrb[0].mxu0 %v2286
    %v2288 = vpop.f32.mrb[0].mxu0
    %v2289 = vadd.f32 %v1988, %v2288
    %v2290 = vpop.f32.mrb[0].mxu0
    %v2291 = vadd.f32 %v1990, %v2290
    %v2292 = vand.u32 %v822, 4294901760
    %v2293 = vsub.f32 %v822, %v2292
    %v2294 = vand.u32 %v2293, 4294901760
    %2295 = vmatprep.mubr.f32.mxu0 %v2294
    %v2296 = vand.u32 %v821, 4294901760
    %v2297 = vsub.f32 %v821, %v2296
    %v2298 = vand.u32 %v2297, 4294901760
    %2299 = vmatmul.mubr.f32.gmra.mrb[0].mxu0 %v2298
    %v2300 = vpop.f32.mrb[0].mxu0
    %v2301 = vadd.f32 %v1998, %v2300
    %v2302 = vpop.f32.mrb[0].mxu0
    %v2303 = vadd.f32 %v2000, %v2302
    %v2304 = vand.u32 %v824, 4294901760
    %v2305 = vsub.f32 %v824, %v2304
    %v2306 = vand.u32 %v2305, 4294901760
    %2307 = vmatprep.mubr.f32.mxu0 %v2306
    %v2308 = vand.u32 %v823, 4294901760
    %v2309 = vsub.f32 %v823, %v2308
    %v2310 = vand.u32 %v2309, 4294901760
    %2311 = vmatmul.mubr.f32.gmra.mrb[0].mxu0 %v2310
    %v2312 = vpop.f32.mrb[0].mxu0
    %v2313 = vadd.f32 %v2008, %v2312
    %v2314 = vpop.f32.mrb[0].mxu0
    %v2315 = vadd.f32 %v2010, %v2314
    %v2316 = vand.u32 %v826, 4294901760
    %v2317 = vsub.f32 %v826, %v2316
    %v2318 = vand.u32 %v2317, 4294901760
    %2319 = vmatprep.mubr.f32.mxu0 %v2318
    %v2320 = vand.u32 %v825, 4294901760
    %v2321 = vsub.f32 %v825, %v2320
    %v2322 = vand.u32 %v2321, 4294901760
    %2323 = vmatmul.mubr.f32.gmra.mrb[0].mxu0 %v2322
    %v2324 = vpop.f32.mrb[0].mxu0
    %v2325 = vadd.f32 %v2018, %v2324
    %v2326 = vpop.f32.mrb[0].mxu0
    %v2327 = vadd.f32 %v2020, %v2326
    %v2328 = vand.u32 %v828, 4294901760
    %v2329 = vsub.f32 %v828, %v2328
    %v2330 = vand.u32 %v2329, 4294901760
    %2331 = vmatprep.mubr.f32.mxu0 %v2330
    %v2332 = vand.u32 %v827, 4294901760
    %v2333 = vsub.f32 %v827, %v2332
    %v2334 = vand.u32 %v2333, 4294901760
    %2335 = vmatmul.mubr.f32.gmra.mrb[0].mxu0 %v2334
    %v2336 = vpop.f32.mrb[0].mxu0
    %v2337 = vadd.f32 %v2028, %v2336
    %v2338 = vpop.f32.mrb[0].mxu0
    %v2339 = vadd.f32 %v2030, %v2338
    %v2340 = vand.u32 %v830, 4294901760
    %v2341 = vsub.f32 %v830, %v2340
    %v2342 = vand.u32 %v2341, 4294901760
    %2343 = vmatprep.mubr.f32.mxu0 %v2342
    %v2344 = vand.u32 %v829, 4294901760
    %v2345 = vsub.f32 %v829, %v2344
    %v2346 = vand.u32 %v2345, 4294901760
    %2347 = vmatmul.mubr.f32.gmra.mrb[0].mxu0 %v2346
    %v2348 = vpop.f32.mrb[0].mxu0
    %v2349 = vadd.f32 %v2038, %v2348
    %v2350 = vpop.f32.mrb[0].mxu0
    %v2351 = vadd.f32 %v2040, %v2350
    %v2352 = vand.u32 %v832, 4294901760
    %v2353 = vsub.f32 %v832, %v2352
    %v2354 = vand.u32 %v2353, 4294901760
    %2355 = vmatprep.mubr.f32.mxu0 %v2354
    %v2356 = vand.u32 %v831, 4294901760
    %v2357 = vsub.f32 %v831, %v2356
    %v2358 = vand.u32 %v2357, 4294901760
    %2359 = vmatmul.mubr.f32.gmra.mrb[0].mxu0 %v2358
    %v2360 = vpop.f32.mrb[0].mxu0
    %v2361 = vadd.f32 %v2048, %v2360
    %v2362 = vpop.f32.mrb[0].mxu0
    %v2363 = vadd.f32 %v2050, %v2362
    %v2364 = vand.u32 %v834, 4294901760
    %v2365 = vsub.f32 %v834, %v2364
    %v2366 = vand.u32 %v2365, 4294901760
    %2367 = vmatprep.mubr.f32.mxu0 %v2366
    %v2368 = vand.u32 %v833, 4294901760
    %v2369 = vsub.f32 %v833, %v2368
    %v2370 = vand.u32 %v2369, 4294901760
    %2371 = vmatmul.mubr.f32.gmra.mrb[0].mxu0 %v2370
    %v2372 = vpop.f32.mrb[0].mxu0
    %v2373 = vadd.f32 %v2058, %v2372
    %v2374 = vpop.f32.mrb[0].mxu0
    %v2375 = vadd.f32 %v2060, %v2374
    %v2376 = vand.u32 %v836, 4294901760
    %v2377 = vsub.f32 %v836, %v2376
    %v2378 = vand.u32 %v2377, 4294901760
    %2379 = vmatprep.mubr.f32.mxu0 %v2378
    %v2380 = vand.u32 %v835, 4294901760
    %v2381 = vsub.f32 %v835, %v2380
    %v2382 = vand.u32 %v2381, 4294901760
    %2383 = vmatmul.mubr.f32.gmra.mrb[0].mxu0 %v2382
    %v2384 = vpop.f32.mrb[0].mxu0
    %v2385 = vadd.f32 %v2068, %v2384
    %v2386 = vpop.f32.mrb[0].mxu0
    %v2387 = vadd.f32 %v2070, %v2386
    %v2388 = vand.u32 %v838, 4294901760
    %v2389 = vsub.f32 %v838, %v2388
    %v2390 = vand.u32 %v2389, 4294901760
    %2391 = vmatprep.mubr.f32.mxu0 %v2390
    %v2392 = vand.u32 %v837, 4294901760
    %v2393 = vsub.f32 %v837, %v2392
    %v2394 = vand.u32 %v2393, 4294901760
    %2395 = vmatmul.mubr.f32.gmra.mrb[0].mxu0 %v2394
    %v2396 = vpop.f32.mrb[0].mxu0
    %v2397 = vadd.f32 %v2078, %v2396
    %v2398 = vpop.f32.mrb[0].mxu0
    %v2399 = vadd.f32 %v2080, %v2398
    %v2400 = vand.u32 %v840, 4294901760
    %v2401 = vsub.f32 %v840, %v2400
    %v2402 = vand.u32 %v2401, 4294901760
    %2403 = vmatprep.mubr.f32.mxu0 %v2402
    %v2404 = vand.u32 %v839, 4294901760
    %v2405 = vsub.f32 %v839, %v2404
    %v2406 = vand.u32 %v2405, 4294901760
    %2407 = vmatmul.mubr.f32.gmra.mrb[0].mxu0 %v2406
    %v2408 = vpop.f32.mrb[0].mxu0
    %v2409 = vadd.f32 %v2088, %v2408
    %v2410 = vpop.f32.mrb[0].mxu0
    %v2411 = vadd.f32 %v2090, %v2410
    %2412 = vdwg.mxu0
    %v2413 = vand.u32 %v746, 4294901760
    %v2414 = vsub.f32 %v746, %v2413
    %v2415 = vand.u32 %v2414, 4294901760
    %2416 = vmatprep.subr.mxu0 %v2415
    %v2417 = vand.u32 %v745, 4294901760
    %v2418 = vsub.f32 %v745, %v2417
    %v2419 = vand.u32 %v2418, 4294901760
    %2420 = vmatpush1.msra.mxu0 %v2419
    %v2421 = vand.u32 %v748, 4294901760
    %v2422 = vsub.f32 %v748, %v2421
    %v2423 = vand.u32 %v2422, 4294901760
    %2424 = vmatprep.subr.mxu0 %v2423
    %v2425 = vand.u32 %v747, 4294901760
    %v2426 = vsub.f32 %v747, %v2425
    %v2427 = vand.u32 %v2426, 4294901760
    %2428 = vmatpush1.msra.mxu0 %v2427
    %v2429 = vand.u32 %v750, 4294901760
    %v2430 = vsub.f32 %v750, %v2429
    %v2431 = vand.u32 %v2430, 4294901760
    %2432 = vmatprep.subr.mxu0 %v2431
    %v2433 = vand.u32 %v749, 4294901760
    %v2434 = vsub.f32 %v749, %v2433
    %v2435 = vand.u32 %v2434, 4294901760
    %2436 = vmatpush1.msra.mxu0 %v2435
    %v2437 = vand.u32 %v752, 4294901760
    %v2438 = vsub.f32 %v752, %v2437
    %v2439 = vand.u32 %v2438, 4294901760
    %2440 = vmatprep.subr.mxu0 %v2439
    %v2441 = vand.u32 %v751, 4294901760
    %v2442 = vsub.f32 %v751, %v2441
    %v2443 = vand.u32 %v2442, 4294901760
    %2444 = vmatpush1.msra.mxu0 %v2443
    %v2445 = vand.u32 %v754, 4294901760
    %v2446 = vsub.f32 %v754, %v2445
    %v2447 = vand.u32 %v2446, 4294901760
    %2448 = vmatprep.subr.mxu0 %v2447
    %v2449 = vand.u32 %v753, 4294901760
    %v2450 = vsub.f32 %v753, %v2449
    %v2451 = vand.u32 %v2450, 4294901760
    %2452 = vmatpush1.msra.mxu0 %v2451
    %v2453 = vand.u32 %v756, 4294901760
    %v2454 = vsub.f32 %v756, %v2453
    %v2455 = vand.u32 %v2454, 4294901760
    %2456 = vmatprep.subr.mxu0 %v2455
    %v2457 = vand.u32 %v755, 4294901760
    %v2458 = vsub.f32 %v755, %v2457
    %v2459 = vand.u32 %v2458, 4294901760
    %2460 = vmatpush1.msra.mxu0 %v2459
    %v2461 = vand.u32 %v758, 4294901760
    %v2462 = vsub.f32 %v758, %v2461
    %v2463 = vand.u32 %v2462, 4294901760
    %2464 = vmatprep.subr.mxu0 %v2463
    %v2465 = vand.u32 %v757, 4294901760
    %v2466 = vsub.f32 %v757, %v2465
    %v2467 = vand.u32 %v2466, 4294901760
    %2468 = vmatpush1.msra.mxu0 %v2467
    %v2469 = vand.u32 %v760, 4294901760
    %v2470 = vsub.f32 %v760, %v2469
    %v2471 = vand.u32 %v2470, 4294901760
    %2472 = vmatprep.subr.mxu0 %v2471
    %v2473 = vand.u32 %v759, 4294901760
    %v2474 = vsub.f32 %v759, %v2473
    %v2475 = vand.u32 %v2474, 4294901760
    %2476 = vmatpush1.msra.mxu0 %v2475
    %v2477 = vand.u32 %v762, 4294901760
    %v2478 = vsub.f32 %v762, %v2477
    %v2479 = vand.u32 %v2478, 4294901760
    %2480 = vmatprep.subr.mxu0 %v2479
    %v2481 = vand.u32 %v761, 4294901760
    %v2482 = vsub.f32 %v761, %v2481
    %v2483 = vand.u32 %v2482, 4294901760
    %2484 = vmatpush1.msra.mxu0 %v2483
    %v2485 = vand.u32 %v764, 4294901760
    %v2486 = vsub.f32 %v764, %v2485
    %v2487 = vand.u32 %v2486, 4294901760
    %2488 = vmatprep.subr.mxu0 %v2487
    %v2489 = vand.u32 %v763, 4294901760
    %v2490 = vsub.f32 %v763, %v2489
    %v2491 = vand.u32 %v2490, 4294901760
    %2492 = vmatpush1.msra.mxu0 %v2491
    %v2493 = vand.u32 %v766, 4294901760
    %v2494 = vsub.f32 %v766, %v2493
    %v2495 = vand.u32 %v2494, 4294901760
    %2496 = vmatprep.subr.mxu0 %v2495
    %v2497 = vand.u32 %v765, 4294901760
    %v2498 = vsub.f32 %v765, %v2497
    %v2499 = vand.u32 %v2498, 4294901760
    %2500 = vmatpush1.msra.mxu0 %v2499
    %v2501 = vand.u32 %v768, 4294901760
    %v2502 = vsub.f32 %v768, %v2501
    %v2503 = vand.u32 %v2502, 4294901760
    %2504 = vmatprep.subr.mxu0 %v2503
    %v2505 = vand.u32 %v767, 4294901760
    %v2506 = vsub.f32 %v767, %v2505
    %v2507 = vand.u32 %v2506, 4294901760
    %2508 = vmatpush1.msra.mxu0 %v2507
    %v2509 = vand.u32 %v770, 4294901760
    %v2510 = vsub.f32 %v770, %v2509
    %v2511 = vand.u32 %v2510, 4294901760
    %2512 = vmatprep.subr.mxu0 %v2511
    %v2513 = vand.u32 %v769, 4294901760
    %v2514 = vsub.f32 %v769, %v2513
    %v2515 = vand.u32 %v2514, 4294901760
    %2516 = vmatpush1.msra.mxu0 %v2515
    %v2517 = vand.u32 %v772, 4294901760
    %v2518 = vsub.f32 %v772, %v2517
    %v2519 = vand.u32 %v2518, 4294901760
    %2520 = vmatprep.subr.mxu0 %v2519
    %v2521 = vand.u32 %v771, 4294901760
    %v2522 = vsub.f32 %v771, %v2521
    %v2523 = vand.u32 %v2522, 4294901760
    %2524 = vmatpush1.msra.mxu0 %v2523
    %v2525 = vand.u32 %v774, 4294901760
    %v2526 = vsub.f32 %v774, %v2525
    %v2527 = vand.u32 %v2526, 4294901760
    %2528 = vmatprep.subr.mxu0 %v2527
    %v2529 = vand.u32 %v773, 4294901760
    %v2530 = vsub.f32 %v773, %v2529
    %v2531 = vand.u32 %v2530, 4294901760
    %2532 = vmatpush1.msra.mxu0 %v2531
    %v2533 = vand.u32 %v776, 4294901760
    %v2534 = vsub.f32 %v776, %v2533
    %v2535 = vand.u32 %v2534, 4294901760
    %2536 = vmatprep.subr.mxu0 %v2535
    %v2537 = vand.u32 %v775, 4294901760
    %v2538 = vsub.f32 %v775, %v2537
    %v2539 = vand.u32 %v2538, 4294901760
    %2540 = vmatpush1.msra.mxu0 %v2539
    %v2541 = vand.u32 %v778, 4294901760
    %v2542 = vsub.f32 %v778, %v2541
    %v2543 = vand.u32 %v2542, 4294901760
    %2544 = vmatprep.subr.mxu0 %v2543
    %v2545 = vand.u32 %v777, 4294901760
    %v2546 = vsub.f32 %v777, %v2545
    %v2547 = vand.u32 %v2546, 4294901760
    %2548 = vmatpush1.msra.mxu0 %v2547
    %v2549 = vand.u32 %v780, 4294901760
    %v2550 = vsub.f32 %v780, %v2549
    %v2551 = vand.u32 %v2550, 4294901760
    %2552 = vmatprep.subr.mxu0 %v2551
    %v2553 = vand.u32 %v779, 4294901760
    %v2554 = vsub.f32 %v779, %v2553
    %v2555 = vand.u32 %v2554, 4294901760
    %2556 = vmatpush1.msra.mxu0 %v2555
    %v2557 = vand.u32 %v782, 4294901760
    %v2558 = vsub.f32 %v782, %v2557
    %v2559 = vand.u32 %v2558, 4294901760
    %2560 = vmatprep.subr.mxu0 %v2559
    %v2561 = vand.u32 %v781, 4294901760
    %v2562 = vsub.f32 %v781, %v2561
    %v2563 = vand.u32 %v2562, 4294901760
    %2564 = vmatpush1.msra.mxu0 %v2563
    %v2565 = vand.u32 %v784, 4294901760
    %v2566 = vsub.f32 %v784, %v2565
    %v2567 = vand.u32 %v2566, 4294901760
    %2568 = vmatprep.subr.mxu0 %v2567
    %v2569 = vand.u32 %v783, 4294901760
    %v2570 = vsub.f32 %v783, %v2569
    %v2571 = vand.u32 %v2570, 4294901760
    %2572 = vmatpush1.msra.mxu0 %v2571
    %v2573 = vand.u32 %v786, 4294901760
    %v2574 = vsub.f32 %v786, %v2573
    %v2575 = vand.u32 %v2574, 4294901760
    %2576 = vmatprep.subr.mxu0 %v2575
    %v2577 = vand.u32 %v785, 4294901760
    %v2578 = vsub.f32 %v785, %v2577
    %v2579 = vand.u32 %v2578, 4294901760
    %2580 = vmatpush1.msra.mxu0 %v2579
    %v2581 = vand.u32 %v788, 4294901760
    %v2582 = vsub.f32 %v788, %v2581
    %v2583 = vand.u32 %v2582, 4294901760
    %2584 = vmatprep.subr.mxu0 %v2583
    %v2585 = vand.u32 %v787, 4294901760
    %v2586 = vsub.f32 %v787, %v2585
    %v2587 = vand.u32 %v2586, 4294901760
    %2588 = vmatpush1.msra.mxu0 %v2587
    %v2589 = vand.u32 %v790, 4294901760
    %v2590 = vsub.f32 %v790, %v2589
    %v2591 = vand.u32 %v2590, 4294901760
    %2592 = vmatprep.subr.mxu0 %v2591
    %v2593 = vand.u32 %v789, 4294901760
    %v2594 = vsub.f32 %v789, %v2593
    %v2595 = vand.u32 %v2594, 4294901760
    %2596 = vmatpush1.msra.mxu0 %v2595
    %v2597 = vand.u32 %v792, 4294901760
    %v2598 = vsub.f32 %v792, %v2597
    %v2599 = vand.u32 %v2598, 4294901760
    %2600 = vmatprep.subr.mxu0 %v2599
    %v2601 = vand.u32 %v791, 4294901760
    %v2602 = vsub.f32 %v791, %v2601
    %v2603 = vand.u32 %v2602, 4294901760
    %2604 = vmatpush1.msra.mxu0 %v2603
    %v2605 = vand.u32 %v794, 4294901760
    %v2606 = vsub.f32 %v794, %v2605
    %v2607 = vand.u32 %v2606, 4294901760
    %2608 = vmatprep.subr.mxu0 %v2607
    %v2609 = vand.u32 %v793, 4294901760
    %v2610 = vsub.f32 %v793, %v2609
    %v2611 = vand.u32 %v2610, 4294901760
    %2612 = vmatpush1.msra.mxu0 %v2611
    %v2613 = vand.u32 %v796, 4294901760
    %v2614 = vsub.f32 %v796, %v2613
    %v2615 = vand.u32 %v2614, 4294901760
    %2616 = vmatprep.subr.mxu0 %v2615
    %v2617 = vand.u32 %v795, 4294901760
    %v2618 = vsub.f32 %v795, %v2617
    %v2619 = vand.u32 %v2618, 4294901760
    %2620 = vmatpush1.msra.mxu0 %v2619
    %v2621 = vand.u32 %v798, 4294901760
    %v2622 = vsub.f32 %v798, %v2621
    %v2623 = vand.u32 %v2622, 4294901760
    %2624 = vmatprep.subr.mxu0 %v2623
    %v2625 = vand.u32 %v797, 4294901760
    %v2626 = vsub.f32 %v797, %v2625
    %v2627 = vand.u32 %v2626, 4294901760
    %2628 = vmatpush1.msra.mxu0 %v2627
    %v2629 = vand.u32 %v800, 4294901760
    %v2630 = vsub.f32 %v800, %v2629
    %v2631 = vand.u32 %v2630, 4294901760
    %2632 = vmatprep.subr.mxu0 %v2631
    %v2633 = vand.u32 %v799, 4294901760
    %v2634 = vsub.f32 %v799, %v2633
    %v2635 = vand.u32 %v2634, 4294901760
    %2636 = vmatpush1.msra.mxu0 %v2635
    %v2637 = vand.u32 %v802, 4294901760
    %v2638 = vsub.f32 %v802, %v2637
    %v2639 = vand.u32 %v2638, 4294901760
    %2640 = vmatprep.subr.mxu0 %v2639
    %v2641 = vand.u32 %v801, 4294901760
    %v2642 = vsub.f32 %v801, %v2641
    %v2643 = vand.u32 %v2642, 4294901760
    %2644 = vmatpush1.msra.mxu0 %v2643
    %v2645 = vand.u32 %v804, 4294901760
    %v2646 = vsub.f32 %v804, %v2645
    %v2647 = vand.u32 %v2646, 4294901760
    %2648 = vmatprep.subr.mxu0 %v2647
    %v2649 = vand.u32 %v803, 4294901760
    %v2650 = vsub.f32 %v803, %v2649
    %v2651 = vand.u32 %v2650, 4294901760
    %2652 = vmatpush1.msra.mxu0 %v2651
    %v2653 = vand.u32 %v806, 4294901760
    %v2654 = vsub.f32 %v806, %v2653
    %v2655 = vand.u32 %v2654, 4294901760
    %2656 = vmatprep.subr.mxu0 %v2655
    %v2657 = vand.u32 %v805, 4294901760
    %v2658 = vsub.f32 %v805, %v2657
    %v2659 = vand.u32 %v2658, 4294901760
    %2660 = vmatpush1.msra.mxu0 %v2659
    %v2661 = vand.u32 %v808, 4294901760
    %v2662 = vsub.f32 %v808, %v2661
    %v2663 = vand.u32 %v2662, 4294901760
    %2664 = vmatprep.subr.mxu0 %v2663
    %v2665 = vand.u32 %v807, 4294901760
    %v2666 = vsub.f32 %v807, %v2665
    %v2667 = vand.u32 %v2666, 4294901760
    %2668 = vmatpush1.msra.mxu0 %v2667
    %v2669 = vand.u32 %v810, 4294901760
    %2670 = vmatprep.mubr.f32.mxu0 %v2669
    %v2671 = vand.u32 %v809, 4294901760
    %2672 = vmatmul.mubr.f32.gmra.mrb[0].mxu0 %v2671
    %v2673 = vpop.f32.mrb[0].mxu0
    %v2674 = vadd.f32 %v2229, %v2673
    %v2675 = vpop.f32.mrb[0].mxu0
    %v2676 = vadd.f32 %v2231, %v2675
    %v2677 = vand.u32 %v812, 4294901760
    %2678 = vmatprep.mubr.f32.mxu0 %v2677
    %v2679 = vand.u32 %v811, 4294901760
    %2680 = vmatmul.mubr.f32.gmra.mrb[0].mxu0 %v2679
    %v2681 = vpop.f32.mrb[0].mxu0
    %v2682 = vadd.f32 %v2241, %v2681
    %v2683 = vpop.f32.mrb[0].mxu0
    %v2684 = vadd.f32 %v2243, %v2683
    %v2685 = vand.u32 %v814, 4294901760
    %2686 = vmatprep.mubr.f32.mxu0 %v2685
    %v2687 = vand.u32 %v813, 4294901760
    %2688 = vmatmul.mubr.f32.gmra.mrb[0].mxu0 %v2687
    %v2689 = vpop.f32.mrb[0].mxu0
    %v2690 = vadd.f32 %v2253, %v2689
    %v2691 = vpop.f32.mrb[0].mxu0
    %v2692 = vadd.f32 %v2255, %v2691
    %v2693 = vand.u32 %v816, 4294901760
    %2694 = vmatprep.mubr.f32.mxu0 %v2693
    %v2695 = vand.u32 %v815, 4294901760
    %2696 = vmatmul.mubr.f32.gmra.mrb[0].mxu0 %v2695
    %v2697 = vpop.f32.mrb[0].mxu0
    %v2698 = vadd.f32 %v2265, %v2697
    %v2699 = vpop.f32.mrb[0].mxu0
    %v2700 = vadd.f32 %v2267, %v2699
    %v2701 = vand.u32 %v818, 4294901760
    %2702 = vmatprep.mubr.f32.mxu0 %v2701
    %v2703 = vand.u32 %v817, 4294901760
    %2704 = vmatmul.mubr.f32.gmra.mrb[0].mxu0 %v2703
    %v2705 = vpop.f32.mrb[0].mxu0
    %v2706 = vadd.f32 %v2277, %v2705
    %v2707 = vpop.f32.mrb[0].mxu0
    %v2708 = vadd.f32 %v2279, %v2707
    %v2709 = vand.u32 %v820, 4294901760
    %2710 = vmatprep.mubr.f32.mxu0 %v2709
    %v2711 = vand.u32 %v819, 4294901760
    %2712 = vmatmul.mubr.f32.gmra.mrb[0].mxu0 %v2711
    %v2713 = vpop.f32.mrb[0].mxu0
    %v2714 = vadd.f32 %v2289, %v2713
    %v2715 = vpop.f32.mrb[0].mxu0
    %v2716 = vadd.f32 %v2291, %v2715
    %v2717 = vand.u32 %v822, 4294901760
    %2718 = vmatprep.mubr.f32.mxu0 %v2717
    %v2719 = vand.u32 %v821, 4294901760
    %2720 = vmatmul.mubr.f32.gmra.mrb[0].mxu0 %v2719
    %v2721 = vpop.f32.mrb[0].mxu0
    %v2722 = vadd.f32 %v2301, %v2721
    %v2723 = vpop.f32.mrb[0].mxu0
    %v2724 = vadd.f32 %v2303, %v2723
    %v2725 = vand.u32 %v824, 4294901760
    %2726 = vmatprep.mubr.f32.mxu0 %v2725
    %v2727 = vand.u32 %v823, 4294901760
    %2728 = vmatmul.mubr.f32.gmra.mrb[0].mxu0 %v2727
    %v2729 = vpop.f32.mrb[0].mxu0
    %v2730 = vadd.f32 %v2313, %v2729
    %v2731 = vpop.f32.mrb[0].mxu0
    %v2732 = vadd.f32 %v2315, %v2731
    %v2733 = vand.u32 %v826, 4294901760
    %2734 = vmatprep.mubr.f32.mxu0 %v2733
    %v2735 = vand.u32 %v825, 4294901760
    %2736 = vmatmul.mubr.f32.gmra.mrb[0].mxu0 %v2735
    %v2737 = vpop.f32.mrb[0].mxu0
    %v2738 = vadd.f32 %v2325, %v2737
    %v2739 = vpop.f32.mrb[0].mxu0
    %v2740 = vadd.f32 %v2327, %v2739
    %v2741 = vand.u32 %v828, 4294901760
    %2742 = vmatprep.mubr.f32.mxu0 %v2741
    %v2743 = vand.u32 %v827, 4294901760
    %2744 = vmatmul.mubr.f32.gmra.mrb[0].mxu0 %v2743
    %v2745 = vpop.f32.mrb[0].mxu0
    %v2746 = vadd.f32 %v2337, %v2745
    %v2747 = vpop.f32.mrb[0].mxu0
    %v2748 = vadd.f32 %v2339, %v2747
    %v2749 = vand.u32 %v830, 4294901760
    %2750 = vmatprep.mubr.f32.mxu0 %v2749
    %v2751 = vand.u32 %v829, 4294901760
    %2752 = vmatmul.mubr.f32.gmra.mrb[0].mxu0 %v2751
    %v2753 = vpop.f32.mrb[0].mxu0
    %v2754 = vadd.f32 %v2349, %v2753
    %v2755 = vpop.f32.mrb[0].mxu0
    %v2756 = vadd.f32 %v2351, %v2755
    %v2757 = vand.u32 %v832, 4294901760
    %2758 = vmatprep.mubr.f32.mxu0 %v2757
    %v2759 = vand.u32 %v831, 4294901760
    %2760 = vmatmul.mubr.f32.gmra.mrb[0].mxu0 %v2759
    %v2761 = vpop.f32.mrb[0].mxu0
    %v2762 = vadd.f32 %v2361, %v2761
    %v2763 = vpop.f32.mrb[0].mxu0
    %v2764 = vadd.f32 %v2363, %v2763
    %v2765 = vand.u32 %v834, 4294901760
    %2766 = vmatprep.mubr.f32.mxu0 %v2765
    %v2767 = vand.u32 %v833, 4294901760
    %2768 = vmatmul.mubr.f32.gmra.mrb[0].mxu0 %v2767
    %v2769 = vpop.f32.mrb[0].mxu0
    %v2770 = vadd.f32 %v2373, %v2769
    %v2771 = vpop.f32.mrb[0].mxu0
    %v2772 = vadd.f32 %v2375, %v2771
    %v2773 = vand.u32 %v836, 4294901760
    %2774 = vmatprep.mubr.f32.mxu0 %v2773
    %v2775 = vand.u32 %v835, 4294901760
    %2776 = vmatmul.mubr.f32.gmra.mrb[0].mxu0 %v2775
    %v2777 = vpop.f32.mrb[0].mxu0
    %v2778 = vadd.f32 %v2385, %v2777
    %v2779 = vpop.f32.mrb[0].mxu0
    %v2780 = vadd.f32 %v2387, %v2779
    %v2781 = vand.u32 %v838, 4294901760
    %2782 = vmatprep.mubr.f32.mxu0 %v2781
    %v2783 = vand.u32 %v837, 4294901760
    %2784 = vmatmul.mubr.f32.gmra.mrb[0].mxu0 %v2783
    %v2785 = vpop.f32.mrb[0].mxu0
    %v2786 = vadd.f32 %v2397, %v2785
    %v2787 = vpop.f32.mrb[0].mxu0
    %v2788 = vadd.f32 %v2399, %v2787
    %v2789 = vand.u32 %v840, 4294901760
    %2790 = vmatprep.mubr.f32.mxu0 %v2789
    %v2791 = vand.u32 %v839, 4294901760
    %2792 = vmatmul.mubr.f32.gmra.mrb[0].mxu0 %v2791
    %v2793 = vpop.f32.mrb[0].mxu0
    %v2794 = vadd.f32 %v2409, %v2793
    %v2795 = vpop.f32.mrb[0].mxu0
    %v2796 = vadd.f32 %v2411, %v2795
    %2797 = vdwg.mxu0
    %v2798 = vand.u32 %v746, 4294901760
    %2799 = vmatprep.subr.mxu0 %v2798
    %v2800 = vand.u32 %v745, 4294901760
    %2801 = vmatpush1.msra.mxu0 %v2800
    %v2802 = vand.u32 %v748, 4294901760
    %2803 = vmatprep.subr.mxu0 %v2802
    %v2804 = vand.u32 %v747, 4294901760
    %2805 = vmatpush1.msra.mxu0 %v2804
    %v2806 = vand.u32 %v750, 4294901760
    %2807 = vmatprep.subr.mxu0 %v2806
    %v2808 = vand.u32 %v749, 4294901760
    %2809 = vmatpush1.msra.mxu0 %v2808
    %v2810 = vand.u32 %v752, 4294901760
    %2811 = vmatprep.subr.mxu0 %v2810
    %v2812 = vand.u32 %v751, 4294901760
    %2813 = vmatpush1.msra.mxu0 %v2812
    %v2814 = vand.u32 %v754, 4294901760
    %2815 = vmatprep.subr.mxu0 %v2814
    %v2816 = vand.u32 %v753, 4294901760
    %2817 = vmatpush1.msra.mxu0 %v2816
    %v2818 = vand.u32 %v756, 4294901760
    %2819 = vmatprep.subr.mxu0 %v2818
    %v2820 = vand.u32 %v755, 4294901760
    %2821 = vmatpush1.msra.mxu0 %v2820
    %v2822 = vand.u32 %v758, 4294901760
    %2823 = vmatprep.subr.mxu0 %v2822
    %v2824 = vand.u32 %v757, 4294901760
    %2825 = vmatpush1.msra.mxu0 %v2824
    %v2826 = vand.u32 %v760, 4294901760
    %2827 = vmatprep.subr.mxu0 %v2826
    %v2828 = vand.u32 %v759, 4294901760
    %2829 = vmatpush1.msra.mxu0 %v2828
    %v2830 = vand.u32 %v762, 4294901760
    %2831 = vmatprep.subr.mxu0 %v2830
    %v2832 = vand.u32 %v761, 4294901760
    %2833 = vmatpush1.msra.mxu0 %v2832
    %v2834 = vand.u32 %v764, 4294901760
    %2835 = vmatprep.subr.mxu0 %v2834
    %v2836 = vand.u32 %v763, 4294901760
    %2837 = vmatpush1.msra.mxu0 %v2836
    %v2838 = vand.u32 %v766, 4294901760
    %2839 = vmatprep.subr.mxu0 %v2838
    %v2840 = vand.u32 %v765, 4294901760
    %2841 = vmatpush1.msra.mxu0 %v2840
    %v2842 = vand.u32 %v768, 4294901760
    %2843 = vmatprep.subr.mxu0 %v2842
    %v2844 = vand.u32 %v767, 4294901760
    %2845 = vmatpush1.msra.mxu0 %v2844
    %v2846 = vand.u32 %v770, 4294901760
    %2847 = vmatprep.subr.mxu0 %v2846
    %v2848 = vand.u32 %v769, 4294901760
    %2849 = vmatpush1.msra.mxu0 %v2848
    %v2850 = vand.u32 %v772, 4294901760
    %2851 = vmatprep.subr.mxu0 %v2850
    %v2852 = vand.u32 %v771, 4294901760
    %2853 = vmatpush1.msra.mxu0 %v2852
    %v2854 = vand.u32 %v774, 4294901760
    %2855 = vmatprep.subr.mxu0 %v2854
    %v2856 = vand.u32 %v773, 4294901760
    %2857 = vmatpush1.msra.mxu0 %v2856
    %v2858 = vand.u32 %v776, 4294901760
    %2859 = vmatprep.subr.mxu0 %v2858
    %v2860 = vand.u32 %v775, 4294901760
    %2861 = vmatpush1.msra.mxu0 %v2860
    %v2862 = vand.u32 %v778, 4294901760
    %2863 = vmatprep.subr.mxu0 %v2862
    %v2864 = vand.u32 %v777, 4294901760
    %2865 = vmatpush1.msra.mxu0 %v2864
    %v2866 = vand.u32 %v780, 4294901760
    %2867 = vmatprep.subr.mxu0 %v2866
    %v2868 = vand.u32 %v779, 4294901760
    %2869 = vmatpush1.msra.mxu0 %v2868
    %v2870 = vand.u32 %v782, 4294901760
    %2871 = vmatprep.subr.mxu0 %v2870
    %v2872 = vand.u32 %v781, 4294901760
    %2873 = vmatpush1.msra.mxu0 %v2872
    %v2874 = vand.u32 %v784, 4294901760
    %2875 = vmatprep.subr.mxu0 %v2874
    %v2876 = vand.u32 %v783, 4294901760
    %2877 = vmatpush1.msra.mxu0 %v2876
    %v2878 = vand.u32 %v786, 4294901760
    %2879 = vmatprep.subr.mxu0 %v2878
    %v2880 = vand.u32 %v785, 4294901760
    %2881 = vmatpush1.msra.mxu0 %v2880
    %v2882 = vand.u32 %v788, 4294901760
    %2883 = vmatprep.subr.mxu0 %v2882
    %v2884 = vand.u32 %v787, 4294901760
    %2885 = vmatpush1.msra.mxu0 %v2884
    %v2886 = vand.u32 %v790, 4294901760
    %2887 = vmatprep.subr.mxu0 %v2886
    %v2888 = vand.u32 %v789, 4294901760
    %2889 = vmatpush1.msra.mxu0 %v2888
    %v2890 = vand.u32 %v792, 4294901760
    %2891 = vmatprep.subr.mxu0 %v2890
    %v2892 = vand.u32 %v791, 4294901760
    %2893 = vmatpush1.msra.mxu0 %v2892
    %v2894 = vand.u32 %v794, 4294901760
    %2895 = vmatprep.subr.mxu0 %v2894
    %v2896 = vand.u32 %v793, 4294901760
    %2897 = vmatpush1.msra.mxu0 %v2896
    %v2898 = vand.u32 %v796, 4294901760
    %2899 = vmatprep.subr.mxu0 %v2898
    %v2900 = vand.u32 %v795, 4294901760
    %2901 = vmatpush1.msra.mxu0 %v2900
    %v2902 = vand.u32 %v798, 4294901760
    %2903 = vmatprep.subr.mxu0 %v2902
    %v2904 = vand.u32 %v797, 4294901760
    %2905 = vmatpush1.msra.mxu0 %v2904
    %v2906 = vand.u32 %v800, 4294901760
    %2907 = vmatprep.subr.mxu0 %v2906
    %v2908 = vand.u32 %v799, 4294901760
    %2909 = vmatpush1.msra.mxu0 %v2908
    %v2910 = vand.u32 %v802, 4294901760
    %2911 = vmatprep.subr.mxu0 %v2910
    %v2912 = vand.u32 %v801, 4294901760
    %2913 = vmatpush1.msra.mxu0 %v2912
    %v2914 = vand.u32 %v804, 4294901760
    %2915 = vmatprep.subr.mxu0 %v2914
    %v2916 = vand.u32 %v803, 4294901760
    %2917 = vmatpush1.msra.mxu0 %v2916
    %v2918 = vand.u32 %v806, 4294901760
    %2919 = vmatprep.subr.mxu0 %v2918
    %v2920 = vand.u32 %v805, 4294901760
    %2921 = vmatpush1.msra.mxu0 %v2920
    %v2922 = vand.u32 %v808, 4294901760
    %2923 = vmatprep.subr.mxu0 %v2922
    %v2924 = vand.u32 %v807, 4294901760
    %2925 = vmatpush1.msra.mxu0 %v2924
    %v2926 = vand.u32 %v810, 4294901760
    %2927 = vmatprep.mubr.f32.mxu0 %v2926
    %v2928 = vand.u32 %v809, 4294901760
    %2929 = vmatmul.mubr.f32.gmra.mrb[0].mxu0 %v2928
    %v2930 = vpop.f32.mrb[0].mxu0
    %v2931 = vadd.f32 %v2674, %v2930
    %v2932 = vpop.f32.mrb[0].mxu0
    %v2933 = vadd.f32 %v2676, %v2932
    %v2934 = vand.u32 %v812, 4294901760
    %2935 = vmatprep.mubr.f32.mxu0 %v2934
    %v2936 = vand.u32 %v811, 4294901760
    %2937 = vmatmul.mubr.f32.gmra.mrb[0].mxu0 %v2936
    %v2938 = vpop.f32.mrb[0].mxu0
    %v2939 = vadd.f32 %v2682, %v2938
    %v2940 = vpop.f32.mrb[0].mxu0
    %v2941 = vadd.f32 %v2684, %v2940
    %v2942 = vand.u32 %v814, 4294901760
    %2943 = vmatprep.mubr.f32.mxu0 %v2942
    %v2944 = vand.u32 %v813, 4294901760
    %2945 = vmatmul.mubr.f32.gmra.mrb[0].mxu0 %v2944
    %v2946 = vpop.f32.mrb[0].mxu0
    %v2947 = vadd.f32 %v2690, %v2946
    %v2948 = vpop.f32.mrb[0].mxu0
    %v2949 = vadd.f32 %v2692, %v2948
    %v2950 = vand.u32 %v816, 4294901760
    %2951 = vmatprep.mubr.f32.mxu0 %v2950
    %v2952 = vand.u32 %v815, 4294901760
    %2953 = vmatmul.mubr.f32.gmra.mrb[0].mxu0 %v2952
    %v2954 = vpop.f32.mrb[0].mxu0
    %v2955 = vadd.f32 %v2698, %v2954
    %v2956 = vpop.f32.mrb[0].mxu0
    %v2957 = vadd.f32 %v2700, %v2956
    %v2958 = vand.u32 %v818, 4294901760
    %2959 = vmatprep.mubr.f32.mxu0 %v2958
    %v2960 = vand.u32 %v817, 4294901760
    %2961 = vmatmul.mubr.f32.gmra.mrb[0].mxu0 %v2960
    %v2962 = vpop.f32.mrb[0].mxu0
    %v2963 = vadd.f32 %v2706, %v2962
    %v2964 = vpop.f32.mrb[0].mxu0
    %v2965 = vadd.f32 %v2708, %v2964
    %v2966 = vand.u32 %v820, 4294901760
    %2967 = vmatprep.mubr.f32.mxu0 %v2966
    %v2968 = vand.u32 %v819, 4294901760
    %2969 = vmatmul.mubr.f32.gmra.mrb[0].mxu0 %v2968
    %v2970 = vpop.f32.mrb[0].mxu0
    %v2971 = vadd.f32 %v2714, %v2970
    %v2972 = vpop.f32.mrb[0].mxu0
    %v2973 = vadd.f32 %v2716, %v2972
    %v2974 = vand.u32 %v822, 4294901760
    %2975 = vmatprep.mubr.f32.mxu0 %v2974
    %v2976 = vand.u32 %v821, 4294901760
    %2977 = vmatmul.mubr.f32.gmra.mrb[0].mxu0 %v2976
    %v2978 = vpop.f32.mrb[0].mxu0
    %v2979 = vadd.f32 %v2722, %v2978
    %v2980 = vpop.f32.mrb[0].mxu0
    %v2981 = vadd.f32 %v2724, %v2980
    %v2982 = vand.u32 %v824, 4294901760
    %2983 = vmatprep.mubr.f32.mxu0 %v2982
    %v2984 = vand.u32 %v823, 4294901760
    %2985 = vmatmul.mubr.f32.gmra.mrb[0].mxu0 %v2984
    %v2986 = vpop.f32.mrb[0].mxu0
    %v2987 = vadd.f32 %v2730, %v2986
    %v2988 = vpop.f32.mrb[0].mxu0
    %v2989 = vadd.f32 %v2732, %v2988
    %v2990 = vand.u32 %v826, 4294901760
    %2991 = vmatprep.mubr.f32.mxu0 %v2990
    %v2992 = vand.u32 %v825, 4294901760
    %2993 = vmatmul.mubr.f32.gmra.mrb[0].mxu0 %v2992
    %v2994 = vpop.f32.mrb[0].mxu0
    %v2995 = vadd.f32 %v2738, %v2994
    %v2996 = vpop.f32.mrb[0].mxu0
    %v2997 = vadd.f32 %v2740, %v2996
    %v2998 = vand.u32 %v828, 4294901760
    %2999 = vmatprep.mubr.f32.mxu0 %v2998
    %v3000 = vand.u32 %v827, 4294901760
    %3001 = vmatmul.mubr.f32.gmra.mrb[0].mxu0 %v3000
    %v3002 = vpop.f32.mrb[0].mxu0
    %v3003 = vadd.f32 %v2746, %v3002
    %v3004 = vpop.f32.mrb[0].mxu0
    %v3005 = vadd.f32 %v2748, %v3004
    %v3006 = vand.u32 %v830, 4294901760
    %3007 = vmatprep.mubr.f32.mxu0 %v3006
    %v3008 = vand.u32 %v829, 4294901760
    %3009 = vmatmul.mubr.f32.gmra.mrb[0].mxu0 %v3008
    %v3010 = vpop.f32.mrb[0].mxu0
    %v3011 = vadd.f32 %v2754, %v3010
    %v3012 = vpop.f32.mrb[0].mxu0
    %v3013 = vadd.f32 %v2756, %v3012
    %v3014 = vand.u32 %v832, 4294901760
    %3015 = vmatprep.mubr.f32.mxu0 %v3014
    %v3016 = vand.u32 %v831, 4294901760
    %3017 = vmatmul.mubr.f32.gmra.mrb[0].mxu0 %v3016
    %v3018 = vpop.f32.mrb[0].mxu0
    %v3019 = vadd.f32 %v2762, %v3018
    %v3020 = vpop.f32.mrb[0].mxu0
    %v3021 = vadd.f32 %v2764, %v3020
    %v3022 = vand.u32 %v834, 4294901760
    %3023 = vmatprep.mubr.f32.mxu0 %v3022
    %v3024 = vand.u32 %v833, 4294901760
    %3025 = vmatmul.mubr.f32.gmra.mrb[0].mxu0 %v3024
    %v3026 = vpop.f32.mrb[0].mxu0
    %v3027 = vadd.f32 %v2770, %v3026
    %v3028 = vpop.f32.mrb[0].mxu0
    %v3029 = vadd.f32 %v2772, %v3028
    %v3030 = vand.u32 %v836, 4294901760
    %3031 = vmatprep.mubr.f32.mxu0 %v3030
    %v3032 = vand.u32 %v835, 4294901760
    %3033 = vmatmul.mubr.f32.gmra.mrb[0].mxu0 %v3032
    %v3034 = vpop.f32.mrb[0].mxu0
    %v3035 = vadd.f32 %v2778, %v3034
    %v3036 = vpop.f32.mrb[0].mxu0
    %v3037 = vadd.f32 %v2780, %v3036
    %v3038 = vand.u32 %v838, 4294901760
    %3039 = vmatprep.mubr.f32.mxu0 %v3038
    %v3040 = vand.u32 %v837, 4294901760
    %3041 = vmatmul.mubr.f32.gmra.mrb[0].mxu0 %v3040
    %v3042 = vpop.f32.mrb[0].mxu0
    %v3043 = vadd.f32 %v2786, %v3042
    %v3044 = vpop.f32.mrb[0].mxu0
    %v3045 = vadd.f32 %v2788, %v3044
    %v3046 = vand.u32 %v840, 4294901760
    %3047 = vmatprep.mubr.f32.mxu0 %v3046
    %v3048 = vand.u32 %v839, 4294901760
    %3049 = vmatmul.mubr.f32.gmra.mrb[0].mxu0 %v3048
    %v3050 = vpop.f32.mrb[0].mxu0
    %v3051 = vadd.f32 %v2794, %v3050
    %v3052 = vpop.f32.mrb[0].mxu0
    %v3053 = vadd.f32 %v2796, %v3052
    %3054 = vdwg.mxu0
    %v3055 = vand.u32 2147483647, %v2931
    %v3056 = vand.u32 2147483647, %v2933
    %v3057 = vand.u32 2147483647, %v2939
    %v3058 = vand.u32 2147483647, %v2941
    %v3059 = vand.u32 2147483647, %v2947
    %v3060 = vand.u32 2147483647, %v2949
    %v3061 = vand.u32 2147483647, %v2955
    %v3062 = vand.u32 2147483647, %v2957
    %v3063 = vand.u32 2147483647, %v2963
    %v3064 = vand.u32 2147483647, %v2965
    %v3065 = vand.u32 2147483647, %v2971
    %v3066 = vand.u32 2147483647, %v2973
    %v3067 = vand.u32 2147483647, %v2979
    %v3068 = vand.u32 2147483647, %v2981
    %v3069 = vand.u32 2147483647, %v2987
    %v3070 = vand.u32 2147483647, %v2989
    %v3071 = vand.u32 2147483647, %v2995
    %v3072 = vand.u32 2147483647, %v2997
    %v3073 = vand.u32 2147483647, %v3003
    %v3074 = vand.u32 2147483647, %v3005
    %v3075 = vand.u32 2147483647, %v3011
    %v3076 = vand.u32 2147483647, %v3013
    %v3077 = vand.u32 2147483647, %v3019
    %v3078 = vand.u32 2147483647, %v3021
    %v3079 = vand.u32 2147483647, %v3027
    %v3080 = vand.u32 2147483647, %v3029
    %v3081 = vand.u32 2147483647, %v3035
    %v3082 = vand.u32 2147483647, %v3037
    %v3083 = vand.u32 2147483647, %v3043
    %v3084 = vand.u32 2147483647, %v3045
    %v3085 = vand.u32 2147483647, %v3051
    %v3086 = vand.u32 2147483647, %v3053
    %v3087 = vadd.f32 %v3055, %v3057
    %v3088 = vadd.f32 %v3087, %v3059
    %v3089 = vadd.f32 %v3088, %v3061
    %v3090 = vadd.f32 %v3089, %v3063
    %v3091 = vadd.f32 %v3090, %v3065
    %v3092 = vadd.f32 %v3091, %v3067
    %v3093 = vadd.f32 %v3092, %v3069
    %v3094 = vadd.f32 %v3093, %v3071
    %v3095 = vadd.f32 %v3094, %v3073
    %v3096 = vadd.f32 %v3095, %v3075
    %v3097 = vadd.f32 %v3096, %v3077
    %v3098 = vadd.f32 %v3097, %v3079
    %v3099 = vadd.f32 %v3098, %v3081
    %v3100 = vadd.f32 %v3099, %v3083
    %v3101 = vadd.f32 %v3100, %v3085
    %v3102 = vrot.slane %v3101, 4
    %v3103 = vadd.f32 %v3101, %v3102
    %v3104 = vrot.slane %v3103, 2
    %v3105 = vadd.f32 %v3103, %v3104
    %v3106 = vrot.slane %v3105, 1
    %v3107 = vadd.f32 %v3105, %v3106
    %v3108 = vadd.f32 %v3056, %v3058
    %v3109 = vadd.f32 %v3108, %v3060
    %v3110 = vadd.f32 %v3109, %v3062
    %v3111 = vadd.f32 %v3110, %v3064
    %v3112 = vadd.f32 %v3111, %v3066
    %v3113 = vadd.f32 %v3112, %v3068
    %v3114 = vadd.f32 %v3113, %v3070
    %v3115 = vadd.f32 %v3114, %v3072
    %v3116 = vadd.f32 %v3115, %v3074
    %v3117 = vadd.f32 %v3116, %v3076
    %v3118 = vadd.f32 %v3117, %v3078
    %v3119 = vadd.f32 %v3118, %v3080
    %v3120 = vadd.f32 %v3119, %v3082
    %v3121 = vadd.f32 %v3120, %v3084
    %v3122 = vadd.f32 %v3121, %v3086
    %v3123 = vrot.slane %v3122, 4
    %v3124 = vadd.f32 %v3122, %v3123
    %v3125 = vrot.slane %v3124, 2
    %v3126 = vadd.f32 %v3124, %v3125
    %v3127 = vrot.slane %v3126, 1
    %v3128 = vadd.f32 %v3126, %v3127
    %v3131 = vcombine.low %v3107, %v3128
    %v3133 = vunpack.c.l.s4 1966171168
    %v3134 = vunpack.c.0.s8 %v3133
    %v3135 = vlaneseq
    %v3136 = vshrl.u32 %v3135, 7
    %v3137 = vsub.s32 %v3134, %v3136
    %v3138 = vrot.slane %v3131, %v3137
    %v3140 = vunpack.c.l.s4 1966171168
    %v3141 = vunpack.c.0.s8 %v3140
    %v3142 = vlaneseq
    %v3143 = vshrl.u32 %v3142, 7
    %v3144 = vsub.s32 %v3141, %v3143
    %v3145 = vrot.slane %v3138, %v3144
    %v3147 = vlaneseq
    %vm3148 = vcmp.ge.s32.totalorder %v3147, 0
    %vm3149 = vcmp.lt.s32.totalorder %v3147, 256
    %vm3150 = vmand %vm3148, %vm3149
    %3151 = vst.msk [vmem:[#allocation7] sm:$0x3] %vm3150, %v3145
    // Predicated region
    $region26: #{tpu_custom_call.1} parent=1 // pred_check
      _
    $region27: #{tpu_custom_call.1} parent=1 // pred_check_branch
      %3153 = sbr.rel (0) target = $region29
    $region28: #{tpu_custom_call.1} parent=1 // pred_region
      %s3155 = ssub.s32 32, 32
      %3156 = vsyncadd [#allocation4], %s3155
      %s3158 = sshll.u32 [#allocation7], 4
      %s3159 = int_to_ptr.vmem [resolvable:$true] %s3158
      %3161 = dma.vmem_to_hbm [thread:$0]  %s3159, 32, %s4, [#allocation4]
    $region29: #{tpu_custom_call.1} parent=1 // pred_fallthru
      _
    // Predicated region
    $region30: #{tpu_custom_call.1} parent=1 // pred_check
      _
    $region31: #{tpu_custom_call.1} parent=1 // pred_check_branch
      %3163 = sbr.rel (0) target = $region33
    $region32: #{tpu_custom_call.1} parent=1 // pred_region
      %3164 = dma.done [#allocation4], 32
    $region33: #{tpu_custom_call.1} parent=1 // pred_fallthru
      _
    %3165 = vsyncpa [#allocation3], 1
    %3166 = vsyncpa [#allocation6], 1
    %3167 = vsyncpa [#allocation4], 1

// kernel: tpu_custom_call.1
$region0: #{tpu_custom_call.1}
  #allocation0 [shape = 'u32[]', space=smem, size = 0x4, offset = 0x4, fixed_abs, tag = 'smem constant byte address 0x4 - core index']
  #allocation1 [shape = 'u32[144,128]{1,0:T(1,128)}', space=vmem, size = 0x12000, scoped, tag = 'internal scratch']
  %s0 = inlined_call_operand.hbm [shape: s32[1,256], index: 0, kind: input, shape index: {}]
  %s1 = inlined_call_operand.vmem [shape: s32[1,256], index: 1, kind: input, shape index: {}]
  %s2 = inlined_call_operand.vmem [shape: s32[1,256], index: 2, kind: input, shape index: {}]
  %s3 = inlined_call_operand.hbm [shape: f32[128,256], index: 3, kind: input, shape index: {}]
  %s4 = inlined_call_operand.hbm [shape: f32[1,256], index: 4, kind: output, shape index: {}]
  %s5 = sld [smem:[#allocation0]]
  $region34: #{tpu_custom_call.1} parent=0
    _
  %s7 = ssub.s32 1, %s5
  %s8 = scalar_select 0, %s7, %s5
  $region1: #{tpu_custom_call.1} parent=0
    #allocation2 [shape = 'u8[1024]{0}', space=vmem, size = 0x400, scoped, tag = 'input window, operand 0, single buffered']
    #allocation3 [shape = 's32[1]{0}', space=sflag, size = 0x4, scoped, tag = 'scoped memory for tpu_custom_call.1']
    #allocation4 [shape = 's32[1]{0}', space=sflag, size = 0x4, scoped, tag = 'scoped memory for tpu_custom_call.1']
    #allocation5 [shape = 'u8[131072]{0}', space=vmem, size = 0x20000, scoped, tag = 'input window, operand 3, single buffered']
    #allocation6 [shape = 's32[1]{0}', space=sflag, size = 0x4, scoped, tag = 'scoped memory for tpu_custom_call.1']
    #allocation7 [shape = 'u8[1024]{0}', space=vmem, size = 0x400, scoped, tag = 'output window, operand 0, single buffered']
    %9 = vsyncpa [#allocation3], 0
    %10 = vsyncpa [#allocation6], 0
    %11 = vsyncpa [#allocation4], 0
    // Predicated region
    $region2: #{tpu_custom_call.1} parent=1 // pred_check
      _
    $region3: #{tpu_custom_call.1} parent=1 // pred_check_branch
      %13 = sbr.rel (0) target = $region5
    $region4: #{tpu_custom_call.1} parent=1 // pred_region
      %s15 = ssub.s32 32, 32
      %16 = vsyncadd [#allocation3], %s15
      %s18 = sshll.u32 [#allocation2], 4
      %s19 = int_to_ptr.vmem [resolvable:$true] %s18
      %21 = dma.hbm_to_vmem [thread:$0]  %s0, 32, %s19, [#allocation3]
    $region5: #{tpu_custom_call.1} parent=1 // pred_fallthru
      _
    // Predicated region
    $region6: #{tpu_custom_call.1} parent=1 // pred_check
      _
    $region7: #{tpu_custom_call.1} parent=1 // pred_check_branch
      %23 = sbr.rel (0) target = $region9
    $region8: #{tpu_custom_call.1} parent=1 // pred_region
      _
    $region9: #{tpu_custom_call.1} parent=1 // pred_fallthru
      _
    // Predicated region
    $region10: #{tpu_custom_call.1} parent=1 // pred_check
      _
    $region11: #{tpu_custom_call.1} parent=1 // pred_check_branch
      %25 = sbr.rel (0) target = $region13
    $region12: #{tpu_custom_call.1} parent=1 // pred_region
      _
    $region13: #{tpu_custom_call.1} parent=1 // pred_fallthru
      _
    // Predicated region
    $region14: #{tpu_custom_call.1} parent=1 // pred_check
      _
    $region15: #{tpu_custom_call.1} parent=1 // pred_check_branch
      %27 = sbr.rel (0) target = $region17
    $region16: #{tpu_custom_call.1} parent=1 // pred_region
      %s29 = ssub.s32 4096, 4096
      %30 = vsyncadd [#allocation6], %s29
      %s31 = sshll.u32 [#allocation5], 4
      %s32 = int_to_ptr.vmem [resolvable:$true] %s31
      %37 = dma.hbm_to_vmem [thread:$0]  %s3, 4096, %s32, [#allocation6], 256, 256, 16
    $region17: #{tpu_custom_call.1} parent=1 // pred_fallthru
      _
    // Predicated region
    $region18: #{tpu_custom_call.1} parent=1 // pred_check
      _
    $region19: #{tpu_custom_call.1} parent=1 // pred_check_branch
      %39 = sbr.rel (0) target = $region21
    $region20: #{tpu_custom_call.1} parent=1 // pred_region
      %40 = dma.done [#allocation3], 32
    $region21: #{tpu_custom_call.1} parent=1 // pred_fallthru
      _
    // Predicated region
    $region22: #{tpu_custom_call.1} parent=1 // pred_check
      _
    $region23: #{tpu_custom_call.1} parent=1 // pred_check_branch
      %42 = sbr.rel (0) target = $region25
    $region24: #{tpu_custom_call.1} parent=1 // pred_region
      %43 = dma.done [#allocation6], 4096
    $region25: #{tpu_custom_call.1} parent=1 // pred_fallthru
      _
    %v44 = vlaneseq
    %v45 = vshrl.u32 %v44, 7
    %v46 = vadd.s32 %v45, 8
    %v47 = vadd.s32 %v45, 16
    %v48 = vadd.s32 %v45, 24
    %v49 = vadd.s32 %v45, 32
    %v50 = vadd.s32 %v45, 40
    %v51 = vadd.s32 %v45, 48
    %v52 = vadd.s32 %v45, 56
    %v53 = vadd.s32 %v45, 64
    %v54 = vadd.s32 %v45, 72
    %v55 = vadd.s32 %v45, 80
    %v56 = vadd.s32 %v45, 88
    %v57 = vadd.s32 %v45, 96
    %v58 = vadd.s32 %v45, 104
    %v59 = vadd.s32 %v45, 112
    %v60 = vadd.s32 %v45, 120
    %v61 = vadd.s32 %v45, 128
    %v62 = vadd.s32 %v45, 136
    %v63 = vadd.s32 %v45, 144
    %v64 = vadd.s32 %v45, 152
    %v65 = vadd.s32 %v45, 160
    %v66 = vadd.s32 %v45, 168
    %v67 = vadd.s32 %v45, 176
    %v68 = vadd.s32 %v45, 184
    %v69 = vadd.s32 %v45, 192
    %v70 = vadd.s32 %v45, 200
    %v71 = vadd.s32 %v45, 208
    %v72 = vadd.s32 %v45, 216
    %v73 = vadd.s32 %v45, 224
    %v74 = vadd.s32 %v45, 232
    %v75 = vadd.s32 %v45, 240
    %v76 = vadd.s32 %v45, 248
    %v77 = vld [vmem:[#allocation2] sm:$0x3]
    %v78 = vlaneseq
    %v79 = vshrl.u32 %v78, 7
    %v80 = vsub.s32 0, %v79
    %v81 = vrot.slane %v77, %v80
    %v82 = vlaneseq
    %v83 = vshrl.u32 %v82, 7
    %v84 = vsub.s32 1, %v83
    %v85 = vrot.slane %v77, %v84
    %vm86 = vcmp.eq.s32.totalorder %v45, %v81
    %vm87 = vcmp.eq.s32.totalorder %v45, %v85
    %vm88 = vcmp.eq.s32.totalorder %v46, %v81
    %vm89 = vcmp.eq.s32.totalorder %v46, %v85
    %vm90 = vcmp.eq.s32.totalorder %v47, %v81
    %vm91 = vcmp.eq.s32.totalorder %v47, %v85
    %vm92 = vcmp.eq.s32.totalorder %v48, %v81
    %vm93 = vcmp.eq.s32.totalorder %v48, %v85
    %vm94 = vcmp.eq.s32.totalorder %v49, %v81
    %vm95 = vcmp.eq.s32.totalorder %v49, %v85
    %vm96 = vcmp.eq.s32.totalorder %v50, %v81
    %vm97 = vcmp.eq.s32.totalorder %v50, %v85
    %vm98 = vcmp.eq.s32.totalorder %v51, %v81
    %vm99 = vcmp.eq.s32.totalorder %v51, %v85
    %vm100 = vcmp.eq.s32.totalorder %v52, %v81
    %vm101 = vcmp.eq.s32.totalorder %v52, %v85
    %vm102 = vcmp.eq.s32.totalorder %v53, %v81
    %vm103 = vcmp.eq.s32.totalorder %v53, %v85
    %vm104 = vcmp.eq.s32.totalorder %v54, %v81
    %vm105 = vcmp.eq.s32.totalorder %v54, %v85
    %vm106 = vcmp.eq.s32.totalorder %v55, %v81
    %vm107 = vcmp.eq.s32.totalorder %v55, %v85
    %vm108 = vcmp.eq.s32.totalorder %v56, %v81
    %vm109 = vcmp.eq.s32.totalorder %v56, %v85
    %vm110 = vcmp.eq.s32.totalorder %v57, %v81
    %vm111 = vcmp.eq.s32.totalorder %v57, %v85
    %vm112 = vcmp.eq.s32.totalorder %v58, %v81
    %vm113 = vcmp.eq.s32.totalorder %v58, %v85
    %vm114 = vcmp.eq.s32.totalorder %v59, %v81
    %vm115 = vcmp.eq.s32.totalorder %v59, %v85
    %vm116 = vcmp.eq.s32.totalorder %v60, %v81
    %vm117 = vcmp.eq.s32.totalorder %v60, %v85
    %vm118 = vcmp.eq.s32.totalorder %v61, %v81
    %vm119 = vcmp.eq.s32.totalorder %v61, %v85
    %vm120 = vcmp.eq.s32.totalorder %v62, %v81
    %vm121 = vcmp.eq.s32.totalorder %v62, %v85
    %vm122 = vcmp.eq.s32.totalorder %v63, %v81
    %vm123 = vcmp.eq.s32.totalorder %v63, %v85
    %vm124 = vcmp.eq.s32.totalorder %v64, %v81
    %vm125 = vcmp.eq.s32.totalorder %v64, %v85
    %vm126 = vcmp.eq.s32.totalorder %v65, %v81
    %vm127 = vcmp.eq.s32.totalorder %v65, %v85
    %vm128 = vcmp.eq.s32.totalorder %v66, %v81
    %vm129 = vcmp.eq.s32.totalorder %v66, %v85
    %vm130 = vcmp.eq.s32.totalorder %v67, %v81
    %vm131 = vcmp.eq.s32.totalorder %v67, %v85
    %vm132 = vcmp.eq.s32.totalorder %v68, %v81
    %vm133 = vcmp.eq.s32.totalorder %v68, %v85
    %vm134 = vcmp.eq.s32.totalorder %v69, %v81
    %vm135 = vcmp.eq.s32.totalorder %v69, %v85
    %vm136 = vcmp.eq.s32.totalorder %v70, %v81
    %vm137 = vcmp.eq.s32.totalorder %v70, %v85
    %vm138 = vcmp.eq.s32.totalorder %v71, %v81
    %vm139 = vcmp.eq.s32.totalorder %v71, %v85
    %vm140 = vcmp.eq.s32.totalorder %v72, %v81
    %vm141 = vcmp.eq.s32.totalorder %v72, %v85
    %vm142 = vcmp.eq.s32.totalorder %v73, %v81
    %vm143 = vcmp.eq.s32.totalorder %v73, %v85
    %vm144 = vcmp.eq.s32.totalorder %v74, %v81
    %vm145 = vcmp.eq.s32.totalorder %v74, %v85
    %vm146 = vcmp.eq.s32.totalorder %v75, %v81
    %vm147 = vcmp.eq.s32.totalorder %v75, %v85
    %vm148 = vcmp.eq.s32.totalorder %v76, %v81
    %vm149 = vcmp.eq.s32.totalorder %v76, %v85
    %v150 = vsel %vm86, 1, 0
    %v151 = vsel %vm87, 1, 0
    %v152 = vsel %vm88, 1, 0
    %v153 = vsel %vm89, 1, 0
    %v154 = vsel %vm90, 1, 0
    %v155 = vsel %vm91, 1, 0
    %v156 = vsel %vm92, 1, 0
    %v157 = vsel %vm93, 1, 0
    %v158 = vsel %vm94, 1, 0
    %v159 = vsel %vm95, 1, 0
    %v160 = vsel %vm96, 1, 0
    %v161 = vsel %vm97, 1, 0
    %v162 = vsel %vm98, 1, 0
    %v163 = vsel %vm99, 1, 0
    %v164 = vsel %vm100, 1, 0
    %v165 = vsel %vm101, 1, 0
    %v166 = vsel %vm102, 1, 0
    %v167 = vsel %vm103, 1, 0
    %v168 = vsel %vm104, 1, 0
    %v169 = vsel %vm105, 1, 0
    %v170 = vsel %vm106, 1, 0
    %v171 = vsel %vm107, 1, 0
    %v172 = vsel %vm108, 1, 0
    %v173 = vsel %vm109, 1, 0
    %v174 = vsel %vm110, 1, 0
    %v175 = vsel %vm111, 1, 0
    %v176 = vsel %vm112, 1, 0
    %v177 = vsel %vm113, 1, 0
    %v178 = vsel %vm114, 1, 0
    %v179 = vsel %vm115, 1, 0
    %v180 = vsel %vm116, 1, 0
    %v181 = vsel %vm117, 1, 0
    %v182 = vsel %vm118, 1, 0
    %v183 = vsel %vm119, 1, 0
    %v184 = vsel %vm120, 1, 0
    %v185 = vsel %vm121, 1, 0
    %v186 = vsel %vm122, 1, 0
    %v187 = vsel %vm123, 1, 0
    %v188 = vsel %vm124, 1, 0
    %v189 = vsel %vm125, 1, 0
    %v190 = vsel %vm126, 1, 0
    %v191 = vsel %vm127, 1, 0
    %v192 = vsel %vm128, 1, 0
    %v193 = vsel %vm129, 1, 0
    %v194 = vsel %vm130, 1, 0
    %v195 = vsel %vm131, 1, 0
    %v196 = vsel %vm132, 1, 0
    %v197 = vsel %vm133, 1, 0
    %v198 = vsel %vm134, 1, 0
    %v199 = vsel %vm135, 1, 0
    %v200 = vsel %vm136, 1, 0
    %v201 = vsel %vm137, 1, 0
    %v202 = vsel %vm138, 1, 0
    %v203 = vsel %vm139, 1, 0
    %v204 = vsel %vm140, 1, 0
    %v205 = vsel %vm141, 1, 0
    %v206 = vsel %vm142, 1, 0
    %v207 = vsel %vm143, 1, 0
    %v208 = vsel %vm144, 1, 0
    %v209 = vsel %vm145, 1, 0
    %v210 = vsel %vm146, 1, 0
    %v211 = vsel %vm147, 1, 0
    %v212 = vsel %vm148, 1, 0
    %v213 = vsel %vm149, 1, 0
    %v214 = vcvt.s32.f32 %v150
    %v215 = vcvt.s32.f32 %v151
    %v216 = vcvt.s32.f32 %v152
    %v217 = vcvt.s32.f32 %v153
    %v218 = vcvt.s32.f32 %v154
    %v219 = vcvt.s32.f32 %v155
    %v220 = vcvt.s32.f32 %v156
    %v221 = vcvt.s32.f32 %v157
    %v222 = vcvt.s32.f32 %v158
    %v223 = vcvt.s32.f32 %v159
    %v224 = vcvt.s32.f32 %v160
    %v225 = vcvt.s32.f32 %v161
    %v226 = vcvt.s32.f32 %v162
    %v227 = vcvt.s32.f32 %v163
    %v228 = vcvt.s32.f32 %v164
    %v229 = vcvt.s32.f32 %v165
    %v230 = vcvt.s32.f32 %v166
    %v231 = vcvt.s32.f32 %v167
    %v232 = vcvt.s32.f32 %v168
    %v233 = vcvt.s32.f32 %v169
    %v234 = vcvt.s32.f32 %v170
    %v235 = vcvt.s32.f32 %v171
    %v236 = vcvt.s32.f32 %v172
    %v237 = vcvt.s32.f32 %v173
    %v238 = vcvt.s32.f32 %v174
    %v239 = vcvt.s32.f32 %v175
    %v240 = vcvt.s32.f32 %v176
    %v241 = vcvt.s32.f32 %v177
    %v242 = vcvt.s32.f32 %v178
    %v243 = vcvt.s32.f32 %v179
    %v244 = vcvt.s32.f32 %v180
    %v245 = vcvt.s32.f32 %v181
    %v246 = vcvt.s32.f32 %v182
    %v247 = vcvt.s32.f32 %v183
    %v248 = vcvt.s32.f32 %v184
    %v249 = vcvt.s32.f32 %v185
    %v250 = vcvt.s32.f32 %v186
    %v251 = vcvt.s32.f32 %v187
    %v252 = vcvt.s32.f32 %v188
    %v253 = vcvt.s32.f32 %v189
    %v254 = vcvt.s32.f32 %v190
    %v255 = vcvt.s32.f32 %v191
    %v256 = vcvt.s32.f32 %v192
    %v257 = vcvt.s32.f32 %v193
    %v258 = vcvt.s32.f32 %v194
    %v259 = vcvt.s32.f32 %v195
    %v260 = vcvt.s32.f32 %v196
    %v261 = vcvt.s32.f32 %v197
    %v262 = vcvt.s32.f32 %v198
    %v263 = vcvt.s32.f32 %v199
    %v264 = vcvt.s32.f32 %v200
    %v265 = vcvt.s32.f32 %v201
    %v266 = vcvt.s32.f32 %v202
    %v267 = vcvt.s32.f32 %v203
    %v268 = vcvt.s32.f32 %v204
    %v269 = vcvt.s32.f32 %v205
    %v270 = vcvt.s32.f32 %v206
    %v271 = vcvt.s32.f32 %v207
    %v272 = vcvt.s32.f32 %v208
    %v273 = vcvt.s32.f32 %v209
    %v274 = vcvt.s32.f32 %v210
    %v275 = vcvt.s32.f32 %v211
    %v276 = vcvt.s32.f32 %v212
    %v277 = vcvt.s32.f32 %v213
    %v278 = vld [vmem:[%s1] sm:$0x3]
    %v279 = vadd.s32 %v278, 128
    %v280 = vlaneseq
    %v281 = vshrl.u32 %v280, 7
    %v282 = vsub.s32 0, %v281
    %v283 = vrot.slane %v279, %v282
    %v284 = vlaneseq
    %v285 = vshrl.u32 %v284, 7
    %v286 = vsub.s32 1, %v285
    %v287 = vrot.slane %v279, %v286
    %vm288 = vcmp.eq.s32.totalorder %v45, %v283
    %vm289 = vcmp.eq.s32.totalorder %v45, %v287
    %vm290 = vcmp.eq.s32.totalorder %v46, %v283
    %vm291 = vcmp.eq.s32.totalorder %v46, %v287
    %vm292 = vcmp.eq.s32.totalorder %v47, %v283
    %vm293 = vcmp.eq.s32.totalorder %v47, %v287
    %vm294 = vcmp.eq.s32.totalorder %v48, %v283
    %vm295 = vcmp.eq.s32.totalorder %v48, %v287
    %vm296 = vcmp.eq.s32.totalorder %v49, %v283
    %vm297 = vcmp.eq.s32.totalorder %v49, %v287
    %vm298 = vcmp.eq.s32.totalorder %v50, %v283
    %vm299 = vcmp.eq.s32.totalorder %v50, %v287
    %vm300 = vcmp.eq.s32.totalorder %v51, %v283
    %vm301 = vcmp.eq.s32.totalorder %v51, %v287
    %vm302 = vcmp.eq.s32.totalorder %v52, %v283
    %vm303 = vcmp.eq.s32.totalorder %v52, %v287
    %vm304 = vcmp.eq.s32.totalorder %v53, %v283
    %vm305 = vcmp.eq.s32.totalorder %v53, %v287
    %vm306 = vcmp.eq.s32.totalorder %v54, %v283
    %vm307 = vcmp.eq.s32.totalorder %v54, %v287
    %vm308 = vcmp.eq.s32.totalorder %v55, %v283
    %vm309 = vcmp.eq.s32.totalorder %v55, %v287
    %vm310 = vcmp.eq.s32.totalorder %v56, %v283
    %vm311 = vcmp.eq.s32.totalorder %v56, %v287
    %vm312 = vcmp.eq.s32.totalorder %v57, %v283
    %vm313 = vcmp.eq.s32.totalorder %v57, %v287
    %vm314 = vcmp.eq.s32.totalorder %v58, %v283
    %vm315 = vcmp.eq.s32.totalorder %v58, %v287
    %vm316 = vcmp.eq.s32.totalorder %v59, %v283
    %vm317 = vcmp.eq.s32.totalorder %v59, %v287
    %vm318 = vcmp.eq.s32.totalorder %v60, %v283
    %vm319 = vcmp.eq.s32.totalorder %v60, %v287
    %vm320 = vcmp.eq.s32.totalorder %v61, %v283
    %vm321 = vcmp.eq.s32.totalorder %v61, %v287
    %vm322 = vcmp.eq.s32.totalorder %v62, %v283
    %vm323 = vcmp.eq.s32.totalorder %v62, %v287
    %vm324 = vcmp.eq.s32.totalorder %v63, %v283
    %vm325 = vcmp.eq.s32.totalorder %v63, %v287
    %vm326 = vcmp.eq.s32.totalorder %v64, %v283
    %vm327 = vcmp.eq.s32.totalorder %v64, %v287
    %vm328 = vcmp.eq.s32.totalorder %v65, %v283
    %vm329 = vcmp.eq.s32.totalorder %v65, %v287
    %vm330 = vcmp.eq.s32.totalorder %v66, %v283
    %vm331 = vcmp.eq.s32.totalorder %v66, %v287
    %vm332 = vcmp.eq.s32.totalorder %v67, %v283
    %vm333 = vcmp.eq.s32.totalorder %v67, %v287
    %vm334 = vcmp.eq.s32.totalorder %v68, %v283
    %vm335 = vcmp.eq.s32.totalorder %v68, %v287
    %vm336 = vcmp.eq.s32.totalorder %v69, %v283
    %vm337 = vcmp.eq.s32.totalorder %v69, %v287
    %vm338 = vcmp.eq.s32.totalorder %v70, %v283
    %vm339 = vcmp.eq.s32.totalorder %v70, %v287
    %vm340 = vcmp.eq.s32.totalorder %v71, %v283
    %vm341 = vcmp.eq.s32.totalorder %v71, %v287
    %vm342 = vcmp.eq.s32.totalorder %v72, %v283
    %vm343 = vcmp.eq.s32.totalorder %v72, %v287
    %vm344 = vcmp.eq.s32.totalorder %v73, %v283
    %vm345 = vcmp.eq.s32.totalorder %v73, %v287
    %vm346 = vcmp.eq.s32.totalorder %v74, %v283
    %vm347 = vcmp.eq.s32.totalorder %v74, %v287
    %vm348 = vcmp.eq.s32.totalorder %v75, %v283
    %vm349 = vcmp.eq.s32.totalorder %v75, %v287
    %vm350 = vcmp.eq.s32.totalorder %v76, %v283
    %vm351 = vcmp.eq.s32.totalorder %v76, %v287
    %v352 = vsel %vm288, 1, 0
    %v353 = vsel %vm289, 1, 0
    %v354 = vsel %vm290, 1, 0
    %v355 = vsel %vm291, 1, 0
    %v356 = vsel %vm292, 1, 0
    %v357 = vsel %vm293, 1, 0
    %v358 = vsel %vm294, 1, 0
    %v359 = vsel %vm295, 1, 0
    %v360 = vsel %vm296, 1, 0
    %v361 = vsel %vm297, 1, 0
    %v362 = vsel %vm298, 1, 0
    %v363 = vsel %vm299, 1, 0
    %v364 = vsel %vm300, 1, 0
    %v365 = vsel %vm301, 1, 0
    %v366 = vsel %vm302, 1, 0
    %v367 = vsel %vm303, 1, 0
    %v368 = vsel %vm304, 1, 0
    %v369 = vsel %vm305, 1, 0
    %v370 = vsel %vm306, 1, 0
    %v371 = vsel %vm307, 1, 0
    %v372 = vsel %vm308, 1, 0
    %v373 = vsel %vm309, 1, 0
    %v374 = vsel %vm310, 1, 0
    %v375 = vsel %vm311, 1, 0
    %v376 = vsel %vm312, 1, 0
    %v377 = vsel %vm313, 1, 0
    %v378 = vsel %vm314, 1, 0
    %v379 = vsel %vm315, 1, 0
    %v380 = vsel %vm316, 1, 0
    %v381 = vsel %vm317, 1, 0
    %v382 = vsel %vm318, 1, 0
    %v383 = vsel %vm319, 1, 0
    %v384 = vsel %vm320, 1, 0
    %v385 = vsel %vm321, 1, 0
    %v386 = vsel %vm322, 1, 0
    %v387 = vsel %vm323, 1, 0
    %v388 = vsel %vm324, 1, 0
    %v389 = vsel %vm325, 1, 0
    %v390 = vsel %vm326, 1, 0
    %v391 = vsel %vm327, 1, 0
    %v392 = vsel %vm328, 1, 0
    %v393 = vsel %vm329, 1, 0
    %v394 = vsel %vm330, 1, 0
    %v395 = vsel %vm331, 1, 0
    %v396 = vsel %vm332, 1, 0
    %v397 = vsel %vm333, 1, 0
    %v398 = vsel %vm334, 1, 0
    %v399 = vsel %vm335, 1, 0
    %v400 = vsel %vm336, 1, 0
    %v401 = vsel %vm337, 1, 0
    %v402 = vsel %vm338, 1, 0
    %v403 = vsel %vm339, 1, 0
    %v404 = vsel %vm340, 1, 0
    %v405 = vsel %vm341, 1, 0
    %v406 = vsel %vm342, 1, 0
    %v407 = vsel %vm343, 1, 0
    %v408 = vsel %vm344, 1, 0
    %v409 = vsel %vm345, 1, 0
    %v410 = vsel %vm346, 1, 0
    %v411 = vsel %vm347, 1, 0
    %v412 = vsel %vm348, 1, 0
    %v413 = vsel %vm349, 1, 0
    %v414 = vsel %vm350, 1, 0
    %v415 = vsel %vm351, 1, 0
    %v416 = vcvt.s32.f32 %v352
    %v417 = vcvt.s32.f32 %v353
    %v418 = vcvt.s32.f32 %v354
    %v419 = vcvt.s32.f32 %v355
    %v420 = vcvt.s32.f32 %v356
    %v421 = vcvt.s32.f32 %v357
    %v422 = vcvt.s32.f32 %v358
    %v423 = vcvt.s32.f32 %v359
    %v424 = vcvt.s32.f32 %v360
    %v425 = vcvt.s32.f32 %v361
    %v426 = vcvt.s32.f32 %v362
    %v427 = vcvt.s32.f32 %v363
    %v428 = vcvt.s32.f32 %v364
    %v429 = vcvt.s32.f32 %v365
    %v430 = vcvt.s32.f32 %v366
    %v431 = vcvt.s32.f32 %v367
    %v432 = vcvt.s32.f32 %v368
    %v433 = vcvt.s32.f32 %v369
    %v434 = vcvt.s32.f32 %v370
    %v435 = vcvt.s32.f32 %v371
    %v436 = vcvt.s32.f32 %v372
    %v437 = vcvt.s32.f32 %v373
    %v438 = vcvt.s32.f32 %v374
    %v439 = vcvt.s32.f32 %v375
    %v440 = vcvt.s32.f32 %v376
    %v441 = vcvt.s32.f32 %v377
    %v442 = vcvt.s32.f32 %v378
    %v443 = vcvt.s32.f32 %v379
    %v444 = vcvt.s32.f32 %v380
    %v445 = vcvt.s32.f32 %v381
    %v446 = vcvt.s32.f32 %v382
    %v447 = vcvt.s32.f32 %v383
    %v448 = vcvt.s32.f32 %v384
    %v449 = vcvt.s32.f32 %v385
    %v450 = vcvt.s32.f32 %v386
    %v451 = vcvt.s32.f32 %v387
    %v452 = vcvt.s32.f32 %v388
    %v453 = vcvt.s32.f32 %v389
    %v454 = vcvt.s32.f32 %v390
    %v455 = vcvt.s32.f32 %v391
    %v456 = vcvt.s32.f32 %v392
    %v457 = vcvt.s32.f32 %v393
    %v458 = vcvt.s32.f32 %v394
    %v459 = vcvt.s32.f32 %v395
    %v460 = vcvt.s32.f32 %v396
    %v461 = vcvt.s32.f32 %v397
    %v462 = vcvt.s32.f32 %v398
    %v463 = vcvt.s32.f32 %v399
    %v464 = vcvt.s32.f32 %v400
    %v465 = vcvt.s32.f32 %v401
    %v466 = vcvt.s32.f32 %v402
    %v467 = vcvt.s32.f32 %v403
    %v468 = vcvt.s32.f32 %v404
    %v469 = vcvt.s32.f32 %v405
    %v470 = vcvt.s32.f32 %v406
    %v471 = vcvt.s32.f32 %v407
    %v472 = vcvt.s32.f32 %v408
    %v473 = vcvt.s32.f32 %v409
    %v474 = vcvt.s32.f32 %v410
    %v475 = vcvt.s32.f32 %v411
    %v476 = vcvt.s32.f32 %v412
    %v477 = vcvt.s32.f32 %v413
    %v478 = vcvt.s32.f32 %v414
    %v479 = vcvt.s32.f32 %v415
    %v480 = vadd.f32 %v214, %v416
    %v481 = vadd.f32 %v215, %v417
    %v482 = vadd.f32 %v216, %v418
    %v483 = vadd.f32 %v217, %v419
    %v484 = vadd.f32 %v218, %v420
    %v485 = vadd.f32 %v219, %v421
    %v486 = vadd.f32 %v220, %v422
    %v487 = vadd.f32 %v221, %v423
    %v488 = vadd.f32 %v222, %v424
    %v489 = vadd.f32 %v223, %v425
    %v490 = vadd.f32 %v224, %v426
    %v491 = vadd.f32 %v225, %v427
    %v492 = vadd.f32 %v226, %v428
    %v493 = vadd.f32 %v227, %v429
    %v494 = vadd.f32 %v228, %v430
    %v495 = vadd.f32 %v229, %v431
    %v496 = vadd.f32 %v230, %v432
    %v497 = vadd.f32 %v231, %v433
    %v498 = vadd.f32 %v232, %v434
    %v499 = vadd.f32 %v233, %v435
    %v500 = vadd.f32 %v234, %v436
    %v501 = vadd.f32 %v235, %v437
    %v502 = vadd.f32 %v236, %v438
    %v503 = vadd.f32 %v237, %v439
    %v504 = vadd.f32 %v238, %v440
    %v505 = vadd.f32 %v239, %v441
    %v506 = vadd.f32 %v240, %v442
    %v507 = vadd.f32 %v241, %v443
    %v508 = vadd.f32 %v242, %v444
    %v509 = vadd.f32 %v243, %v445
    %v510 = vadd.f32 %v244, %v446
    %v511 = vadd.f32 %v245, %v447
    %v512 = vadd.f32 %v246, %v448
    %v513 = vadd.f32 %v247, %v449
    %v514 = vadd.f32 %v248, %v450
    %v515 = vadd.f32 %v249, %v451
    %v516 = vadd.f32 %v250, %v452
    %v517 = vadd.f32 %v251, %v453
    %v518 = vadd.f32 %v252, %v454
    %v519 = vadd.f32 %v253, %v455
    %v520 = vadd.f32 %v254, %v456
    %v521 = vadd.f32 %v255, %v457
    %v522 = vadd.f32 %v256, %v458
    %v523 = vadd.f32 %v257, %v459
    %v524 = vadd.f32 %v258, %v460
    %v525 = vadd.f32 %v259, %v461
    %v526 = vadd.f32 %v260, %v462
    %v527 = vadd.f32 %v261, %v463
    %v528 = vadd.f32 %v262, %v464
    %v529 = vadd.f32 %v263, %v465
    %v530 = vadd.f32 %v264, %v466
    %v531 = vadd.f32 %v265, %v467
    %v532 = vadd.f32 %v266, %v468
    %v533 = vadd.f32 %v267, %v469
    %v534 = vadd.f32 %v268, %v470
    %v535 = vadd.f32 %v269, %v471
    %v536 = vadd.f32 %v270, %v472
    %v537 = vadd.f32 %v271, %v473
    %v538 = vadd.f32 %v272, %v474
    %v539 = vadd.f32 %v273, %v475
    %v540 = vadd.f32 %v274, %v476
    %v541 = vadd.f32 %v275, %v477
    %v542 = vadd.f32 %v276, %v478
    %v543 = vadd.f32 %v277, %v479
    %v544 = vld [vmem:[%s2] sm:$0x3]
    %v545 = vlaneseq
    %v546 = vshrl.u32 %v545, 7
    %v547 = vsub.s32 0, %v546
    %v548 = vrot.slane %v544, %v547
    %v549 = vlaneseq
    %v550 = vshrl.u32 %v549, 7
    %v551 = vsub.s32 1, %v550
    %v552 = vrot.slane %v544, %v551
    %vm553 = vcmp.eq.s32.totalorder %v45, %v548
    %vm554 = vcmp.eq.s32.totalorder %v45, %v552
    %vm555 = vcmp.eq.s32.totalorder %v46, %v548
    %vm556 = vcmp.eq.s32.totalorder %v46, %v552
    %vm557 = vcmp.eq.s32.totalorder %v47, %v548
    %vm558 = vcmp.eq.s32.totalorder %v47, %v552
    %vm559 = vcmp.eq.s32.totalorder %v48, %v548
    %vm560 = vcmp.eq.s32.totalorder %v48, %v552
    %vm561 = vcmp.eq.s32.totalorder %v49, %v548
    %vm562 = vcmp.eq.s32.totalorder %v49, %v552
    %vm563 = vcmp.eq.s32.totalorder %v50, %v548
    %vm564 = vcmp.eq.s32.totalorder %v50, %v552
    %vm565 = vcmp.eq.s32.totalorder %v51, %v548
    %vm566 = vcmp.eq.s32.totalorder %v51, %v552
    %vm567 = vcmp.eq.s32.totalorder %v52, %v548
    %vm568 = vcmp.eq.s32.totalorder %v52, %v552
    %vm569 = vcmp.eq.s32.totalorder %v53, %v548
    %vm570 = vcmp.eq.s32.totalorder %v53, %v552
    %vm571 = vcmp.eq.s32.totalorder %v54, %v548
    %vm572 = vcmp.eq.s32.totalorder %v54, %v552
    %vm573 = vcmp.eq.s32.totalorder %v55, %v548
    %vm574 = vcmp.eq.s32.totalorder %v55, %v552
    %vm575 = vcmp.eq.s32.totalorder %v56, %v548
    %vm576 = vcmp.eq.s32.totalorder %v56, %v552
    %vm577 = vcmp.eq.s32.totalorder %v57, %v548
    %vm578 = vcmp.eq.s32.totalorder %v57, %v552
    %vm579 = vcmp.eq.s32.totalorder %v58, %v548
    %vm580 = vcmp.eq.s32.totalorder %v58, %v552
    %vm581 = vcmp.eq.s32.totalorder %v59, %v548
    %vm582 = vcmp.eq.s32.totalorder %v59, %v552
    %vm583 = vcmp.eq.s32.totalorder %v60, %v548
    %vm584 = vcmp.eq.s32.totalorder %v60, %v552
    %vm585 = vcmp.eq.s32.totalorder %v61, %v548
    %vm586 = vcmp.eq.s32.totalorder %v61, %v552
    %vm587 = vcmp.eq.s32.totalorder %v62, %v548
    %vm588 = vcmp.eq.s32.totalorder %v62, %v552
    %vm589 = vcmp.eq.s32.totalorder %v63, %v548
    %vm590 = vcmp.eq.s32.totalorder %v63, %v552
    %vm591 = vcmp.eq.s32.totalorder %v64, %v548
    %vm592 = vcmp.eq.s32.totalorder %v64, %v552
    %vm593 = vcmp.eq.s32.totalorder %v65, %v548
    %vm594 = vcmp.eq.s32.totalorder %v65, %v552
    %vm595 = vcmp.eq.s32.totalorder %v66, %v548
    %vm596 = vcmp.eq.s32.totalorder %v66, %v552
    %vm597 = vcmp.eq.s32.totalorder %v67, %v548
    %vm598 = vcmp.eq.s32.totalorder %v67, %v552
    %vm599 = vcmp.eq.s32.totalorder %v68, %v548
    %vm600 = vcmp.eq.s32.totalorder %v68, %v552
    %vm601 = vcmp.eq.s32.totalorder %v69, %v548
    %vm602 = vcmp.eq.s32.totalorder %v69, %v552
    %vm603 = vcmp.eq.s32.totalorder %v70, %v548
    %vm604 = vcmp.eq.s32.totalorder %v70, %v552
    %vm605 = vcmp.eq.s32.totalorder %v71, %v548
    %vm606 = vcmp.eq.s32.totalorder %v71, %v552
    %vm607 = vcmp.eq.s32.totalorder %v72, %v548
    %vm608 = vcmp.eq.s32.totalorder %v72, %v552
    %vm609 = vcmp.eq.s32.totalorder %v73, %v548
    %vm610 = vcmp.eq.s32.totalorder %v73, %v552
    %vm611 = vcmp.eq.s32.totalorder %v74, %v548
    %vm612 = vcmp.eq.s32.totalorder %v74, %v552
    %vm613 = vcmp.eq.s32.totalorder %v75, %v548
    %vm614 = vcmp.eq.s32.totalorder %v75, %v552
    %vm615 = vcmp.eq.s32.totalorder %v76, %v548
    %vm616 = vcmp.eq.s32.totalorder %v76, %v552
    %v617 = vsel %vm553, 1, 0
    %v618 = vsel %vm554, 1, 0
    %v619 = vsel %vm555, 1, 0
    %v620 = vsel %vm556, 1, 0
    %v621 = vsel %vm557, 1, 0
    %v622 = vsel %vm558, 1, 0
    %v623 = vsel %vm559, 1, 0
    %v624 = vsel %vm560, 1, 0
    %v625 = vsel %vm561, 1, 0
    %v626 = vsel %vm562, 1, 0
    %v627 = vsel %vm563, 1, 0
    %v628 = vsel %vm564, 1, 0
    %v629 = vsel %vm565, 1, 0
    %v630 = vsel %vm566, 1, 0
    %v631 = vsel %vm567, 1, 0
    %v632 = vsel %vm568, 1, 0
    %v633 = vsel %vm569, 1, 0
    %v634 = vsel %vm570, 1, 0
    %v635 = vsel %vm571, 1, 0
    %v636 = vsel %vm572, 1, 0
    %v637 = vsel %vm573, 1, 0
    %v638 = vsel %vm574, 1, 0
    %v639 = vsel %vm575, 1, 0
    %v640 = vsel %vm576, 1, 0
    %v641 = vsel %vm577, 1, 0
    %v642 = vsel %vm578, 1, 0
    %v643 = vsel %vm579, 1, 0
    %v644 = vsel %vm580, 1, 0
    %v645 = vsel %vm581, 1, 0
    %v646 = vsel %vm582, 1, 0
    %v647 = vsel %vm583, 1, 0
    %v648 = vsel %vm584, 1, 0
    %v649 = vsel %vm585, 1, 0
    %v650 = vsel %vm586, 1, 0
    %v651 = vsel %vm587, 1, 0
    %v652 = vsel %vm588, 1, 0
    %v653 = vsel %vm589, 1, 0
    %v654 = vsel %vm590, 1, 0
    %v655 = vsel %vm591, 1, 0
    %v656 = vsel %vm592, 1, 0
    %v657 = vsel %vm593, 1, 0
    %v658 = vsel %vm594, 1, 0
    %v659 = vsel %vm595, 1, 0
    %v660 = vsel %vm596, 1, 0
    %v661 = vsel %vm597, 1, 0
    %v662 = vsel %vm598, 1, 0
    %v663 = vsel %vm599, 1, 0
    %v664 = vsel %vm600, 1, 0
    %v665 = vsel %vm601, 1, 0
    %v666 = vsel %vm602, 1, 0
    %v667 = vsel %vm603, 1, 0
    %v668 = vsel %vm604, 1, 0
    %v669 = vsel %vm605, 1, 0
    %v670 = vsel %vm606, 1, 0
    %v671 = vsel %vm607, 1, 0
    %v672 = vsel %vm608, 1, 0
    %v673 = vsel %vm609, 1, 0
    %v674 = vsel %vm610, 1, 0
    %v675 = vsel %vm611, 1, 0
    %v676 = vsel %vm612, 1, 0
    %v677 = vsel %vm613, 1, 0
    %v678 = vsel %vm614, 1, 0
    %v679 = vsel %vm615, 1, 0
    %v680 = vsel %vm616, 1, 0
    %v681 = vcvt.s32.f32 %v617
    %v682 = vcvt.s32.f32 %v618
    %v683 = vcvt.s32.f32 %v619
    %v684 = vcvt.s32.f32 %v620
    %v685 = vcvt.s32.f32 %v621
    %v686 = vcvt.s32.f32 %v622
    %v687 = vcvt.s32.f32 %v623
    %v688 = vcvt.s32.f32 %v624
    %v689 = vcvt.s32.f32 %v625
    %v690 = vcvt.s32.f32 %v626
    %v691 = vcvt.s32.f32 %v627
    %v692 = vcvt.s32.f32 %v628
    %v693 = vcvt.s32.f32 %v629
    %v694 = vcvt.s32.f32 %v630
    %v695 = vcvt.s32.f32 %v631
    %v696 = vcvt.s32.f32 %v632
    %v697 = vcvt.s32.f32 %v633
    %v698 = vcvt.s32.f32 %v634
    %v699 = vcvt.s32.f32 %v635
    %v700 = vcvt.s32.f32 %v636
    %v701 = vcvt.s32.f32 %v637
    %v702 = vcvt.s32.f32 %v638
    %v703 = vcvt.s32.f32 %v639
    %v704 = vcvt.s32.f32 %v640
    %v705 = vcvt.s32.f32 %v641
    %v706 = vcvt.s32.f32 %v642
    %v707 = vcvt.s32.f32 %v643
    %v708 = vcvt.s32.f32 %v644
    %v709 = vcvt.s32.f32 %v645
    %v710 = vcvt.s32.f32 %v646
    %v711 = vcvt.s32.f32 %v647
    %v712 = vcvt.s32.f32 %v648
    %v713 = vcvt.s32.f32 %v649
    %v714 = vcvt.s32.f32 %v650
    %v715 = vcvt.s32.f32 %v651
    %v716 = vcvt.s32.f32 %v652
    %v717 = vcvt.s32.f32 %v653
    %v718 = vcvt.s32.f32 %v654
    %v719 = vcvt.s32.f32 %v655
    %v720 = vcvt.s32.f32 %v656
    %v721 = vcvt.s32.f32 %v657
    %v722 = vcvt.s32.f32 %v658
    %v723 = vcvt.s32.f32 %v659
    %v724 = vcvt.s32.f32 %v660
    %v725 = vcvt.s32.f32 %v661
    %v726 = vcvt.s32.f32 %v662
    %v727 = vcvt.s32.f32 %v663
    %v728 = vcvt.s32.f32 %v664
    %v729 = vcvt.s32.f32 %v665
    %v730 = vcvt.s32.f32 %v666
    %v731 = vcvt.s32.f32 %v667
    %v732 = vcvt.s32.f32 %v668
    %v733 = vcvt.s32.f32 %v669
    %v734 = vcvt.s32.f32 %v670
    %v735 = vcvt.s32.f32 %v671
    %v736 = vcvt.s32.f32 %v672
    %v737 = vcvt.s32.f32 %v673
    %v738 = vcvt.s32.f32 %v674
    %v739 = vcvt.s32.f32 %v675
    %v740 = vcvt.s32.f32 %v676
    %v741 = vcvt.s32.f32 %v677
    %v742 = vcvt.s32.f32 %v678
    %v743 = vcvt.s32.f32 %v679
    %v744 = vcvt.s32.f32 %v680
    %v745 = vsub.f32 %v480, %v681
    %v746 = vsub.f32 %v481, %v682
    %v747 = vsub.f32 %v482, %v683
    %v748 = vsub.f32 %v483, %v684
    %v749 = vsub.f32 %v484, %v685
    %v750 = vsub.f32 %v485, %v686
    %v751 = vsub.f32 %v486, %v687
    %v752 = vsub.f32 %v487, %v688
    %v753 = vsub.f32 %v488, %v689
    %v754 = vsub.f32 %v489, %v690
    %v755 = vsub.f32 %v490, %v691
    %v756 = vsub.f32 %v491, %v692
    %v757 = vsub.f32 %v492, %v693
    %v758 = vsub.f32 %v493, %v694
    %v759 = vsub.f32 %v494, %v695
    %v760 = vsub.f32 %v495, %v696
    %v761 = vsub.f32 %v496, %v697
    %v762 = vsub.f32 %v497, %v698
    %v763 = vsub.f32 %v498, %v699
    %v764 = vsub.f32 %v499, %v700
    %v765 = vsub.f32 %v500, %v701
    %v766 = vsub.f32 %v501, %v702
    %v767 = vsub.f32 %v502, %v703
    %v768 = vsub.f32 %v503, %v704
    %v769 = vsub.f32 %v504, %v705
    %v770 = vsub.f32 %v505, %v706
    %v771 = vsub.f32 %v506, %v707
    %v772 = vsub.f32 %v507, %v708
    %v773 = vsub.f32 %v508, %v709
    %v774 = vsub.f32 %v509, %v710
    %v775 = vsub.f32 %v510, %v711
    %v776 = vsub.f32 %v511, %v712
    %v777 = vsub.f32 %v512, %v713
    %v778 = vsub.f32 %v513, %v714
    %v779 = vsub.f32 %v514, %v715
    %v780 = vsub.f32 %v515, %v716
    %v781 = vsub.f32 %v516, %v717
    %v782 = vsub.f32 %v517, %v718
    %v783 = vsub.f32 %v518, %v719
    %v784 = vsub.f32 %v519, %v720
    %v785 = vsub.f32 %v520, %v721
    %v786 = vsub.f32 %v521, %v722
    %v787 = vsub.f32 %v522, %v723
    %v788 = vsub.f32 %v523, %v724
    %v789 = vsub.f32 %v524, %v725
    %v790 = vsub.f32 %v525, %v726
    %v791 = vsub.f32 %v526, %v727
    %v792 = vsub.f32 %v527, %v728
    %v793 = vsub.f32 %v528, %v729
    %v794 = vsub.f32 %v529, %v730
    %v795 = vsub.f32 %v530, %v731
    %v796 = vsub.f32 %v531, %v732
    %v797 = vsub.f32 %v532, %v733
    %v798 = vsub.f32 %v533, %v734
    %v799 = vsub.f32 %v534, %v735
    %v800 = vsub.f32 %v535, %v736
    %v801 = vsub.f32 %v536, %v737
    %v802 = vsub.f32 %v537, %v738
    %v803 = vsub.f32 %v538, %v739
    %v804 = vsub.f32 %v539, %v740
    %v805 = vsub.f32 %v540, %v741
    %v806 = vsub.f32 %v541, %v742
    %v807 = vsub.f32 %v542, %v743
    %v808 = vsub.f32 %v543, %v744
    %v809 = vld [vmem:[#allocation5] sm:$0xff]
    %v810 = vld [vmem:[#allocation5 + $0x8] sm:$0xff]
    %v811 = vld [vmem:[#allocation5 + $0x10] sm:$0xff]
    %v812 = vld [vmem:[#allocation5 + $0x18] sm:$0xff]
    %v813 = vld [vmem:[#allocation5 + $0x20] sm:$0xff]
    %v814 = vld [vmem:[#allocation5 + $0x28] sm:$0xff]
    %v815 = vld [vmem:[#allocation5 + $0x30] sm:$0xff]
    %v816 = vld [vmem:[#allocation5 + $0x38] sm:$0xff]
    %v817 = vld [vmem:[#allocation5 + $0x40] sm:$0xff]
    %v818 = vld [vmem:[#allocation5 + $0x48] sm:$0xff]
    %v819 = vld [vmem:[#allocation5 + $0x50] sm:$0xff]
    %v820 = vld [vmem:[#allocation5 + $0x58] sm:$0xff]
    %v821 = vld [vmem:[#allocation5 + $0x60] sm:$0xff]
    %v822 = vld [vmem:[#allocation5 + $0x68] sm:$0xff]
    %v823 = vld [vmem:[#allocation5 + $0x70] sm:$0xff]
    %v824 = vld [vmem:[#allocation5 + $0x78] sm:$0xff]
    %v825 = vld [vmem:[#allocation5 + $0x80] sm:$0xff]
    %v826 = vld [vmem:[#allocation5 + $0x88] sm:$0xff]
    %v827 = vld [vmem:[#allocation5 + $0x90] sm:$0xff]
    %v828 = vld [vmem:[#allocation5 + $0x98] sm:$0xff]
    %v829 = vld [vmem:[#allocation5 + $0xa0] sm:$0xff]
    %v830 = vld [vmem:[#allocation5 + $0xa8] sm:$0xff]
    %v831 = vld [vmem:[#allocation5 + $0xb0] sm:$0xff]
    %v832 = vld [vmem:[#allocation5 + $0xb8] sm:$0xff]
    %v833 = vld [vmem:[#allocation5 + $0xc0] sm:$0xff]
    %v834 = vld [vmem:[#allocation5 + $0xc8] sm:$0xff]
    %v835 = vld [vmem:[#allocation5 + $0xd0] sm:$0xff]
    %v836 = vld [vmem:[#allocation5 + $0xd8] sm:$0xff]
    %v837 = vld [vmem:[#allocation5 + $0xe0] sm:$0xff]
    %v838 = vld [vmem:[#allocation5 + $0xe8] sm:$0xff]
    %v839 = vld [vmem:[#allocation5 + $0xf0] sm:$0xff]
    %v840 = vld [vmem:[#allocation5 + $0xf8] sm:$0xff]
    %v841 = vand.u32 %v746, 4294901760
    %842 = vmatprep.subr.mxu0 %v841
    %v843 = vand.u32 %v745, 4294901760
    %844 = vmatpush1.msra.mxu0 %v843
    %v845 = vand.u32 %v748, 4294901760
    %846 = vmatprep.subr.mxu0 %v845
    %v847 = vand.u32 %v747, 4294901760
    %848 = vmatpush1.msra.mxu0 %v847
    %v849 = vand.u32 %v750, 4294901760
    %850 = vmatprep.subr.mxu0 %v849
    %v851 = vand.u32 %v749, 4294901760
    %852 = vmatpush1.msra.mxu0 %v851
    %v853 = vand.u32 %v752, 4294901760
    %854 = vmatprep.subr.mxu0 %v853
    %v855 = vand.u32 %v751, 4294901760
    %856 = vmatpush1.msra.mxu0 %v855
    %v857 = vand.u32 %v754, 4294901760
    %858 = vmatprep.subr.mxu0 %v857
    %v859 = vand.u32 %v753, 4294901760
    %860 = vmatpush1.msra.mxu0 %v859
    %v861 = vand.u32 %v756, 4294901760
    %862 = vmatprep.subr.mxu0 %v861
    %v863 = vand.u32 %v755, 4294901760
    %864 = vmatpush1.msra.mxu0 %v863
    %v865 = vand.u32 %v758, 4294901760
    %866 = vmatprep.subr.mxu0 %v865
    %v867 = vand.u32 %v757, 4294901760
    %868 = vmatpush1.msra.mxu0 %v867
    %v869 = vand.u32 %v760, 4294901760
    %870 = vmatprep.subr.mxu0 %v869
    %v871 = vand.u32 %v759, 4294901760
    %872 = vmatpush1.msra.mxu0 %v871
    %v873 = vand.u32 %v762, 4294901760
    %874 = vmatprep.subr.mxu0 %v873
    %v875 = vand.u32 %v761, 4294901760
    %876 = vmatpush1.msra.mxu0 %v875
    %v877 = vand.u32 %v764, 4294901760
    %878 = vmatprep.subr.mxu0 %v877
    %v879 = vand.u32 %v763, 4294901760
    %880 = vmatpush1.msra.mxu0 %v879
    %v881 = vand.u32 %v766, 4294901760
    %882 = vmatprep.subr.mxu0 %v881
    %v883 = vand.u32 %v765, 4294901760
    %884 = vmatpush1.msra.mxu0 %v883
    %v885 = vand.u32 %v768, 4294901760
    %886 = vmatprep.subr.mxu0 %v885
    %v887 = vand.u32 %v767, 4294901760
    %888 = vmatpush1.msra.mxu0 %v887
    %v889 = vand.u32 %v770, 4294901760
    %890 = vmatprep.subr.mxu0 %v889
    %v891 = vand.u32 %v769, 4294901760
    %892 = vmatpush1.msra.mxu0 %v891
    %v893 = vand.u32 %v772, 4294901760
    %894 = vmatprep.subr.mxu0 %v893
    %v895 = vand.u32 %v771, 4294901760
    %896 = vmatpush1.msra.mxu0 %v895
    %v897 = vand.u32 %v774, 4294901760
    %898 = vmatprep.subr.mxu0 %v897
    %v899 = vand.u32 %v773, 4294901760
    %900 = vmatpush1.msra.mxu0 %v899
    %v901 = vand.u32 %v776, 4294901760
    %902 = vmatprep.subr.mxu0 %v901
    %v903 = vand.u32 %v775, 4294901760
    %904 = vmatpush1.msra.mxu0 %v903
    %v905 = vand.u32 %v778, 4294901760
    %906 = vmatprep.subr.mxu0 %v905
    %v907 = vand.u32 %v777, 4294901760
    %908 = vmatpush1.msra.mxu0 %v907
    %v909 = vand.u32 %v780, 4294901760
    %910 = vmatprep.subr.mxu0 %v909
    %v911 = vand.u32 %v779, 4294901760
    %912 = vmatpush1.msra.mxu0 %v911
    %v913 = vand.u32 %v782, 4294901760
    %914 = vmatprep.subr.mxu0 %v913
    %v915 = vand.u32 %v781, 4294901760
    %916 = vmatpush1.msra.mxu0 %v915
    %v917 = vand.u32 %v784, 4294901760
    %918 = vmatprep.subr.mxu0 %v917
    %v919 = vand.u32 %v783, 4294901760
    %920 = vmatpush1.msra.mxu0 %v919
    %v921 = vand.u32 %v786, 4294901760
    %922 = vmatprep.subr.mxu0 %v921
    %v923 = vand.u32 %v785, 4294901760
    %924 = vmatpush1.msra.mxu0 %v923
    %v925 = vand.u32 %v788, 4294901760
    %926 = vmatprep.subr.mxu0 %v925
    %v927 = vand.u32 %v787, 4294901760
    %928 = vmatpush1.msra.mxu0 %v927
    %v929 = vand.u32 %v790, 4294901760
    %930 = vmatprep.subr.mxu0 %v929
    %v931 = vand.u32 %v789, 4294901760
    %932 = vmatpush1.msra.mxu0 %v931
    %v933 = vand.u32 %v792, 4294901760
    %934 = vmatprep.subr.mxu0 %v933
    %v935 = vand.u32 %v791, 4294901760
    %936 = vmatpush1.msra.mxu0 %v935
    %v937 = vand.u32 %v794, 4294901760
    %938 = vmatprep.subr.mxu0 %v937
    %v939 = vand.u32 %v793, 4294901760
    %940 = vmatpush1.msra.mxu0 %v939
    %v941 = vand.u32 %v796, 4294901760
    %942 = vmatprep.subr.mxu0 %v941
    %v943 = vand.u32 %v795, 4294901760
    %944 = vmatpush1.msra.mxu0 %v943
    %v945 = vand.u32 %v798, 4294901760
    %946 = vmatprep.subr.mxu0 %v945
    %v947 = vand.u32 %v797, 4294901760
    %948 = vmatpush1.msra.mxu0 %v947
    %v949 = vand.u32 %v800, 4294901760
    %950 = vmatprep.subr.mxu0 %v949
    %v951 = vand.u32 %v799, 4294901760
    %952 = vmatpush1.msra.mxu0 %v951
    %v953 = vand.u32 %v802, 4294901760
    %954 = vmatprep.subr.mxu0 %v953
    %v955 = vand.u32 %v801, 4294901760
    %956 = vmatpush1.msra.mxu0 %v955
    %v957 = vand.u32 %v804, 4294901760
    %958 = vmatprep.subr.mxu0 %v957
    %v959 = vand.u32 %v803, 4294901760
    %960 = vmatpush1.msra.mxu0 %v959
    %v961 = vand.u32 %v806, 4294901760
    %962 = vmatprep.subr.mxu0 %v961
    %v963 = vand.u32 %v805, 4294901760
    %964 = vmatpush1.msra.mxu0 %v963
    %v965 = vand.u32 %v808, 4294901760
    %966 = vmatprep.subr.mxu0 %v965
    %v967 = vand.u32 %v807, 4294901760
    %968 = vmatpush1.msra.mxu0 %v967
    %v969 = vand.u32 %v810, 4294901760
    %v970 = vsub.f32 %v810, %v969
    %v971 = vand.u32 %v970, 4294901760
    %v972 = vsub.f32 %v970, %v971
    %v973 = vand.u32 %v972, 4294901760
    %974 = vmatprep.mubr.f32.mxu0 %v973
    %v975 = vand.u32 %v809, 4294901760
    %v976 = vsub.f32 %v809, %v975
    %v977 = vand.u32 %v976, 4294901760
    %v978 = vsub.f32 %v976, %v977
    %v979 = vand.u32 %v978, 4294901760
    %980 = vmatmul.mubr.f32.gmra.mrb[0].mxu0 %v979
    %v981 = vpop.f32.mrb[0].mxu0
    %v982 = vadd.f32 0.0, %v981
    %v983 = vpop.f32.mrb[0].mxu0
    %v984 = vadd.f32 0.0, %v983
    %v985 = vand.u32 %v812, 4294901760
    %v986 = vsub.f32 %v812, %v985
    %v987 = vand.u32 %v986, 4294901760
    %v988 = vsub.f32 %v986, %v987
    %v989 = vand.u32 %v988, 4294901760
    %990 = vmatprep.mubr.f32.mxu0 %v989
    %v991 = vand.u32 %v811, 4294901760
    %v992 = vsub.f32 %v811, %v991
    %v993 = vand.u32 %v992, 4294901760
    %v994 = vsub.f32 %v992, %v993
    %v995 = vand.u32 %v994, 4294901760
    %996 = vmatmul.mubr.f32.gmra.mrb[0].mxu0 %v995
    %v997 = vpop.f32.mrb[0].mxu0
    %v998 = vadd.f32 0.0, %v997
    %v999 = vpop.f32.mrb[0].mxu0
    %v1000 = vadd.f32 0.0, %v999
    %v1001 = vand.u32 %v814, 4294901760
    %v1002 = vsub.f32 %v814, %v1001
    %v1003 = vand.u32 %v1002, 4294901760
    %v1004 = vsub.f32 %v1002, %v1003
    %v1005 = vand.u32 %v1004, 4294901760
    %1006 = vmatprep.mubr.f32.mxu0 %v1005
    %v1007 = vand.u32 %v813, 4294901760
    %v1008 = vsub.f32 %v813, %v1007
    %v1009 = vand.u32 %v1008, 4294901760
    %v1010 = vsub.f32 %v1008, %v1009
    %v1011 = vand.u32 %v1010, 4294901760
    %1012 = vmatmul.mubr.f32.gmra.mrb[0].mxu0 %v1011
    %v1013 = vpop.f32.mrb[0].mxu0
    %v1014 = vadd.f32 0.0, %v1013
    %v1015 = vpop.f32.mrb[0].mxu0
    %v1016 = vadd.f32 0.0, %v1015
    %v1017 = vand.u32 %v816, 4294901760
    %v1018 = vsub.f32 %v816, %v1017
    %v1019 = vand.u32 %v1018, 4294901760
    %v1020 = vsub.f32 %v1018, %v1019
    %v1021 = vand.u32 %v1020, 4294901760
    %1022 = vmatprep.mubr.f32.mxu0 %v1021
    %v1023 = vand.u32 %v815, 4294901760
    %v1024 = vsub.f32 %v815, %v1023
    %v1025 = vand.u32 %v1024, 4294901760
    %v1026 = vsub.f32 %v1024, %v1025
    %v1027 = vand.u32 %v1026, 4294901760
    %1028 = vmatmul.mubr.f32.gmra.mrb[0].mxu0 %v1027
    %v1029 = vpop.f32.mrb[0].mxu0
    %v1030 = vadd.f32 0.0, %v1029
    %v1031 = vpop.f32.mrb[0].mxu0
    %v1032 = vadd.f32 0.0, %v1031
    %v1033 = vand.u32 %v818, 4294901760
    %v1034 = vsub.f32 %v818, %v1033
    %v1035 = vand.u32 %v1034, 4294901760
    %v1036 = vsub.f32 %v1034, %v1035
    %v1037 = vand.u32 %v1036, 4294901760
    %1038 = vmatprep.mubr.f32.mxu0 %v1037
    %v1039 = vand.u32 %v817, 4294901760
    %v1040 = vsub.f32 %v817, %v1039
    %v1041 = vand.u32 %v1040, 4294901760
    %v1042 = vsub.f32 %v1040, %v1041
    %v1043 = vand.u32 %v1042, 4294901760
    %1044 = vmatmul.mubr.f32.gmra.mrb[0].mxu0 %v1043
    %v1045 = vpop.f32.mrb[0].mxu0
    %v1046 = vadd.f32 0.0, %v1045
    %v1047 = vpop.f32.mrb[0].mxu0
    %v1048 = vadd.f32 0.0, %v1047
    %v1049 = vand.u32 %v820, 4294901760
    %v1050 = vsub.f32 %v820, %v1049
    %v1051 = vand.u32 %v1050, 4294901760
    %v1052 = vsub.f32 %v1050, %v1051
    %v1053 = vand.u32 %v1052, 4294901760
    %1054 = vmatprep.mubr.f32.mxu0 %v1053
    %v1055 = vand.u32 %v819, 4294901760
    %v1056 = vsub.f32 %v819, %v1055
    %v1057 = vand.u32 %v1056, 4294901760
    %v1058 = vsub.f32 %v1056, %v1057
    %v1059 = vand.u32 %v1058, 4294901760
    %1060 = vmatmul.mubr.f32.gmra.mrb[0].mxu0 %v1059
    %v1061 = vpop.f32.mrb[0].mxu0
    %v1062 = vadd.f32 0.0, %v1061
    %v1063 = vpop.f32.mrb[0].mxu0
    %v1064 = vadd.f32 0.0, %v1063
    %v1065 = vand.u32 %v822, 4294901760
    %v1066 = vsub.f32 %v822, %v1065
    %v1067 = vand.u32 %v1066, 4294901760
    %v1068 = vsub.f32 %v1066, %v1067
    %v1069 = vand.u32 %v1068, 4294901760
    %1070 = vmatprep.mubr.f32.mxu0 %v1069
    %v1071 = vand.u32 %v821, 4294901760
    %v1072 = vsub.f32 %v821, %v1071
    %v1073 = vand.u32 %v1072, 4294901760
    %v1074 = vsub.f32 %v1072, %v1073
    %v1075 = vand.u32 %v1074, 4294901760
    %1076 = vmatmul.mubr.f32.gmra.mrb[0].mxu0 %v1075
    %v1077 = vpop.f32.mrb[0].mxu0
    %v1078 = vadd.f32 0.0, %v1077
    %v1079 = vpop.f32.mrb[0].mxu0
    %v1080 = vadd.f32 0.0, %v1079
    %v1081 = vand.u32 %v824, 4294901760
    %v1082 = vsub.f32 %v824, %v1081
    %v1083 = vand.u32 %v1082, 4294901760
    %v1084 = vsub.f32 %v1082, %v1083
    %v1085 = vand.u32 %v1084, 4294901760
    %1086 = vmatprep.mubr.f32.mxu0 %v1085
    %v1087 = vand.u32 %v823, 4294901760
    %v1088 = vsub.f32 %v823, %v1087
    %v1089 = vand.u32 %v1088, 4294901760
    %v1090 = vsub.f32 %v1088, %v1089
    %v1091 = vand.u32 %v1090, 4294901760
    %1092 = vmatmul.mubr.f32.gmra.mrb[0].mxu0 %v1091
    %v1093 = vpop.f32.mrb[0].mxu0
    %v1094 = vadd.f32 0.0, %v1093
    %v1095 = vpop.f32.mrb[0].mxu0
    %v1096 = vadd.f32 0.0, %v1095
    %v1097 = vand.u32 %v826, 4294901760
    %v1098 = vsub.f32 %v826, %v1097
    %v1099 = vand.u32 %v1098, 4294901760
    %v1100 = vsub.f32 %v1098, %v1099
    %v1101 = vand.u32 %v1100, 4294901760
    %1102 = vmatprep.mubr.f32.mxu0 %v1101
    %v1103 = vand.u32 %v825, 4294901760
    %v1104 = vsub.f32 %v825, %v1103
    %v1105 = vand.u32 %v1104, 4294901760
    %v1106 = vsub.f32 %v1104, %v1105
    %v1107 = vand.u32 %v1106, 4294901760
    %1108 = vmatmul.mubr.f32.gmra.mrb[0].mxu0 %v1107
    %v1109 = vpop.f32.mrb[0].mxu0
    %v1110 = vadd.f32 0.0, %v1109
    %v1111 = vpop.f32.mrb[0].mxu0
    %v1112 = vadd.f32 0.0, %v1111
    %v1113 = vand.u32 %v828, 4294901760
    %v1114 = vsub.f32 %v828, %v1113
    %v1115 = vand.u32 %v1114, 4294901760
    %v1116 = vsub.f32 %v1114, %v1115
    %v1117 = vand.u32 %v1116, 4294901760
    %1118 = vmatprep.mubr.f32.mxu0 %v1117
    %v1119 = vand.u32 %v827, 4294901760
    %v1120 = vsub.f32 %v827, %v1119
    %v1121 = vand.u32 %v1120, 4294901760
    %v1122 = vsub.f32 %v1120, %v1121
    %v1123 = vand.u32 %v1122, 4294901760
    %1124 = vmatmul.mubr.f32.gmra.mrb[0].mxu0 %v1123
    %v1125 = vpop.f32.mrb[0].mxu0
    %v1126 = vadd.f32 0.0, %v1125
    %v1127 = vpop.f32.mrb[0].mxu0
    %v1128 = vadd.f32 0.0, %v1127
    %v1129 = vand.u32 %v830, 4294901760
    %v1130 = vsub.f32 %v830, %v1129
    %v1131 = vand.u32 %v1130, 4294901760
    %v1132 = vsub.f32 %v1130, %v1131
    %v1133 = vand.u32 %v1132, 4294901760
    %1134 = vmatprep.mubr.f32.mxu0 %v1133
    %v1135 = vand.u32 %v829, 4294901760
    %v1136 = vsub.f32 %v829, %v1135
    %v1137 = vand.u32 %v1136, 4294901760
    %v1138 = vsub.f32 %v1136, %v1137
    %v1139 = vand.u32 %v1138, 4294901760
    %1140 = vmatmul.mubr.f32.gmra.mrb[0].mxu0 %v1139
    %v1141 = vpop.f32.mrb[0].mxu0
    %v1142 = vadd.f32 0.0, %v1141
    %v1143 = vpop.f32.mrb[0].mxu0
    %v1144 = vadd.f32 0.0, %v1143
    %v1145 = vand.u32 %v832, 4294901760
    %v1146 = vsub.f32 %v832, %v1145
    %v1147 = vand.u32 %v1146, 4294901760
    %v1148 = vsub.f32 %v1146, %v1147
    %v1149 = vand.u32 %v1148, 4294901760
    %1150 = vmatprep.mubr.f32.mxu0 %v1149
    %v1151 = vand.u32 %v831, 4294901760
    %v1152 = vsub.f32 %v831, %v1151
    %v1153 = vand.u32 %v1152, 4294901760
    %v1154 = vsub.f32 %v1152, %v1153
    %v1155 = vand.u32 %v1154, 4294901760
    %1156 = vmatmul.mubr.f32.gmra.mrb[0].mxu0 %v1155
    %v1157 = vpop.f32.mrb[0].mxu0
    %v1158 = vadd.f32 0.0, %v1157
    %v1159 = vpop.f32.mrb[0].mxu0
    %v1160 = vadd.f32 0.0, %v1159
    %v1161 = vand.u32 %v834, 4294901760
    %v1162 = vsub.f32 %v834, %v1161
    %v1163 = vand.u32 %v1162, 4294901760
    %v1164 = vsub.f32 %v1162, %v1163
    %v1165 = vand.u32 %v1164, 4294901760
    %1166 = vmatprep.mubr.f32.mxu0 %v1165
    %v1167 = vand.u32 %v833, 4294901760
    %v1168 = vsub.f32 %v833, %v1167
    %v1169 = vand.u32 %v1168, 4294901760
    %v1170 = vsub.f32 %v1168, %v1169
    %v1171 = vand.u32 %v1170, 4294901760
    %1172 = vmatmul.mubr.f32.gmra.mrb[0].mxu0 %v1171
    %v1173 = vpop.f32.mrb[0].mxu0
    %v1174 = vadd.f32 0.0, %v1173
    %v1175 = vpop.f32.mrb[0].mxu0
    %v1176 = vadd.f32 0.0, %v1175
    %v1177 = vand.u32 %v836, 4294901760
    %v1178 = vsub.f32 %v836, %v1177
    %v1179 = vand.u32 %v1178, 4294901760
    %v1180 = vsub.f32 %v1178, %v1179
    %v1181 = vand.u32 %v1180, 4294901760
    %1182 = vmatprep.mubr.f32.mxu0 %v1181
    %v1183 = vand.u32 %v835, 4294901760
    %v1184 = vsub.f32 %v835, %v1183
    %v1185 = vand.u32 %v1184, 4294901760
    %v1186 = vsub.f32 %v1184, %v1185
    %v1187 = vand.u32 %v1186, 4294901760
    %1188 = vmatmul.mubr.f32.gmra.mrb[0].mxu0 %v1187
    %v1189 = vpop.f32.mrb[0].mxu0
    %v1190 = vadd.f32 0.0, %v1189
    %v1191 = vpop.f32.mrb[0].mxu0
    %v1192 = vadd.f32 0.0, %v1191
    %v1193 = vand.u32 %v838, 4294901760
    %v1194 = vsub.f32 %v838, %v1193
    %v1195 = vand.u32 %v1194, 4294901760
    %v1196 = vsub.f32 %v1194, %v1195
    %v1197 = vand.u32 %v1196, 4294901760
    %1198 = vmatprep.mubr.f32.mxu0 %v1197
    %v1199 = vand.u32 %v837, 4294901760
    %v1200 = vsub.f32 %v837, %v1199
    %v1201 = vand.u32 %v1200, 4294901760
    %v1202 = vsub.f32 %v1200, %v1201
    %v1203 = vand.u32 %v1202, 4294901760
    %1204 = vmatmul.mubr.f32.gmra.mrb[0].mxu0 %v1203
    %v1205 = vpop.f32.mrb[0].mxu0
    %v1206 = vadd.f32 0.0, %v1205
    %v1207 = vpop.f32.mrb[0].mxu0
    %v1208 = vadd.f32 0.0, %v1207
    %v1209 = vand.u32 %v840, 4294901760
    %v1210 = vsub.f32 %v840, %v1209
    %v1211 = vand.u32 %v1210, 4294901760
    %v1212 = vsub.f32 %v1210, %v1211
    %v1213 = vand.u32 %v1212, 4294901760
    %1214 = vmatprep.mubr.f32.mxu0 %v1213
    %v1215 = vand.u32 %v839, 4294901760
    %v1216 = vsub.f32 %v839, %v1215
    %v1217 = vand.u32 %v1216, 4294901760
    %v1218 = vsub.f32 %v1216, %v1217
    %v1219 = vand.u32 %v1218, 4294901760
    %1220 = vmatmul.mubr.f32.gmra.mrb[0].mxu0 %v1219
    %v1221 = vpop.f32.mrb[0].mxu0
    %v1222 = vadd.f32 0.0, %v1221
    %v1223 = vpop.f32.mrb[0].mxu0
    %v1224 = vadd.f32 0.0, %v1223
    %1225 = vdwg.mxu0
    %v1226 = vand.u32 %v746, 4294901760
    %v1227 = vsub.f32 %v746, %v1226
    %v1228 = vand.u32 %v1227, 4294901760
    %v1229 = vsub.f32 %v1227, %v1228
    %v1230 = vand.u32 %v1229, 4294901760
    %1231 = vmatprep.subr.mxu0 %v1230
    %v1232 = vand.u32 %v745, 4294901760
    %v1233 = vsub.f32 %v745, %v1232
    %v1234 = vand.u32 %v1233, 4294901760
    %v1235 = vsub.f32 %v1233, %v1234
    %v1236 = vand.u32 %v1235, 4294901760
    %1237 = vmatpush1.msra.mxu0 %v1236
    %v1238 = vand.u32 %v748, 4294901760
    %v1239 = vsub.f32 %v748, %v1238
    %v1240 = vand.u32 %v1239, 4294901760
    %v1241 = vsub.f32 %v1239, %v1240
    %v1242 = vand.u32 %v1241, 4294901760
    %1243 = vmatprep.subr.mxu0 %v1242
    %v1244 = vand.u32 %v747, 4294901760
    %v1245 = vsub.f32 %v747, %v1244
    %v1246 = vand.u32 %v1245, 4294901760
    %v1247 = vsub.f32 %v1245, %v1246
    %v1248 = vand.u32 %v1247, 4294901760
    %1249 = vmatpush1.msra.mxu0 %v1248
    %v1250 = vand.u32 %v750, 4294901760
    %v1251 = vsub.f32 %v750, %v1250
    %v1252 = vand.u32 %v1251, 4294901760
    %v1253 = vsub.f32 %v1251, %v1252
    %v1254 = vand.u32 %v1253, 4294901760
    %1255 = vmatprep.subr.mxu0 %v1254
    %v1256 = vand.u32 %v749, 4294901760
    %v1257 = vsub.f32 %v749, %v1256
    %v1258 = vand.u32 %v1257, 4294901760
    %v1259 = vsub.f32 %v1257, %v1258
    %v1260 = vand.u32 %v1259, 4294901760
    %1261 = vmatpush1.msra.mxu0 %v1260
    %v1262 = vand.u32 %v752, 4294901760
    %v1263 = vsub.f32 %v752, %v1262
    %v1264 = vand.u32 %v1263, 4294901760
    %v1265 = vsub.f32 %v1263, %v1264
    %v1266 = vand.u32 %v1265, 4294901760
    %1267 = vmatprep.subr.mxu0 %v1266
    %v1268 = vand.u32 %v751, 4294901760
    %v1269 = vsub.f32 %v751, %v1268
    %v1270 = vand.u32 %v1269, 4294901760
    %v1271 = vsub.f32 %v1269, %v1270
    %v1272 = vand.u32 %v1271, 4294901760
    %1273 = vmatpush1.msra.mxu0 %v1272
    %v1274 = vand.u32 %v754, 4294901760
    %v1275 = vsub.f32 %v754, %v1274
    %v1276 = vand.u32 %v1275, 4294901760
    %v1277 = vsub.f32 %v1275, %v1276
    %v1278 = vand.u32 %v1277, 4294901760
    %1279 = vmatprep.subr.mxu0 %v1278
    %v1280 = vand.u32 %v753, 4294901760
    %v1281 = vsub.f32 %v753, %v1280
    %v1282 = vand.u32 %v1281, 4294901760
    %v1283 = vsub.f32 %v1281, %v1282
    %v1284 = vand.u32 %v1283, 4294901760
    %1285 = vmatpush1.msra.mxu0 %v1284
    %v1286 = vand.u32 %v756, 4294901760
    %v1287 = vsub.f32 %v756, %v1286
    %v1288 = vand.u32 %v1287, 4294901760
    %v1289 = vsub.f32 %v1287, %v1288
    %v1290 = vand.u32 %v1289, 4294901760
    %1291 = vmatprep.subr.mxu0 %v1290
    %v1292 = vand.u32 %v755, 4294901760
    %v1293 = vsub.f32 %v755, %v1292
    %v1294 = vand.u32 %v1293, 4294901760
    %v1295 = vsub.f32 %v1293, %v1294
    %v1296 = vand.u32 %v1295, 4294901760
    %1297 = vmatpush1.msra.mxu0 %v1296
    %v1298 = vand.u32 %v758, 4294901760
    %v1299 = vsub.f32 %v758, %v1298
    %v1300 = vand.u32 %v1299, 4294901760
    %v1301 = vsub.f32 %v1299, %v1300
    %v1302 = vand.u32 %v1301, 4294901760
    %1303 = vmatprep.subr.mxu0 %v1302
    %v1304 = vand.u32 %v757, 4294901760
    %v1305 = vsub.f32 %v757, %v1304
    %v1306 = vand.u32 %v1305, 4294901760
    %v1307 = vsub.f32 %v1305, %v1306
    %v1308 = vand.u32 %v1307, 4294901760
    %1309 = vmatpush1.msra.mxu0 %v1308
    %v1310 = vand.u32 %v760, 4294901760
    %v1311 = vsub.f32 %v760, %v1310
    %v1312 = vand.u32 %v1311, 4294901760
    %v1313 = vsub.f32 %v1311, %v1312
    %v1314 = vand.u32 %v1313, 4294901760
    %1315 = vmatprep.subr.mxu0 %v1314
    %v1316 = vand.u32 %v759, 4294901760
    %v1317 = vsub.f32 %v759, %v1316
    %v1318 = vand.u32 %v1317, 4294901760
    %v1319 = vsub.f32 %v1317, %v1318
    %v1320 = vand.u32 %v1319, 4294901760
    %1321 = vmatpush1.msra.mxu0 %v1320
    %v1322 = vand.u32 %v762, 4294901760
    %v1323 = vsub.f32 %v762, %v1322
    %v1324 = vand.u32 %v1323, 4294901760
    %v1325 = vsub.f32 %v1323, %v1324
    %v1326 = vand.u32 %v1325, 4294901760
    %1327 = vmatprep.subr.mxu0 %v1326
    %v1328 = vand.u32 %v761, 4294901760
    %v1329 = vsub.f32 %v761, %v1328
    %v1330 = vand.u32 %v1329, 4294901760
    %v1331 = vsub.f32 %v1329, %v1330
    %v1332 = vand.u32 %v1331, 4294901760
    %1333 = vmatpush1.msra.mxu0 %v1332
    %v1334 = vand.u32 %v764, 4294901760
    %v1335 = vsub.f32 %v764, %v1334
    %v1336 = vand.u32 %v1335, 4294901760
    %v1337 = vsub.f32 %v1335, %v1336
    %v1338 = vand.u32 %v1337, 4294901760
    %1339 = vmatprep.subr.mxu0 %v1338
    %v1340 = vand.u32 %v763, 4294901760
    %v1341 = vsub.f32 %v763, %v1340
    %v1342 = vand.u32 %v1341, 4294901760
    %v1343 = vsub.f32 %v1341, %v1342
    %v1344 = vand.u32 %v1343, 4294901760
    %1345 = vmatpush1.msra.mxu0 %v1344
    %v1346 = vand.u32 %v766, 4294901760
    %v1347 = vsub.f32 %v766, %v1346
    %v1348 = vand.u32 %v1347, 4294901760
    %v1349 = vsub.f32 %v1347, %v1348
    %v1350 = vand.u32 %v1349, 4294901760
    %1351 = vmatprep.subr.mxu0 %v1350
    %v1352 = vand.u32 %v765, 4294901760
    %v1353 = vsub.f32 %v765, %v1352
    %v1354 = vand.u32 %v1353, 4294901760
    %v1355 = vsub.f32 %v1353, %v1354
    %v1356 = vand.u32 %v1355, 4294901760
    %1357 = vmatpush1.msra.mxu0 %v1356
    %v1358 = vand.u32 %v768, 4294901760
    %v1359 = vsub.f32 %v768, %v1358
    %v1360 = vand.u32 %v1359, 4294901760
    %v1361 = vsub.f32 %v1359, %v1360
    %v1362 = vand.u32 %v1361, 4294901760
    %1363 = vmatprep.subr.mxu0 %v1362
    %v1364 = vand.u32 %v767, 4294901760
    %v1365 = vsub.f32 %v767, %v1364
    %v1366 = vand.u32 %v1365, 4294901760
    %v1367 = vsub.f32 %v1365, %v1366
    %v1368 = vand.u32 %v1367, 4294901760
    %1369 = vmatpush1.msra.mxu0 %v1368
    %v1370 = vand.u32 %v770, 4294901760
    %v1371 = vsub.f32 %v770, %v1370
    %v1372 = vand.u32 %v1371, 4294901760
    %v1373 = vsub.f32 %v1371, %v1372
    %v1374 = vand.u32 %v1373, 4294901760
    %1375 = vmatprep.subr.mxu0 %v1374
    %v1376 = vand.u32 %v769, 4294901760
    %v1377 = vsub.f32 %v769, %v1376
    %v1378 = vand.u32 %v1377, 4294901760
    %v1379 = vsub.f32 %v1377, %v1378
    %v1380 = vand.u32 %v1379, 4294901760
    %1381 = vmatpush1.msra.mxu0 %v1380
    %v1382 = vand.u32 %v772, 4294901760
    %v1383 = vsub.f32 %v772, %v1382
    %v1384 = vand.u32 %v1383, 4294901760
    %v1385 = vsub.f32 %v1383, %v1384
    %v1386 = vand.u32 %v1385, 4294901760
    %1387 = vmatprep.subr.mxu0 %v1386
    %v1388 = vand.u32 %v771, 4294901760
    %v1389 = vsub.f32 %v771, %v1388
    %v1390 = vand.u32 %v1389, 4294901760
    %v1391 = vsub.f32 %v1389, %v1390
    %v1392 = vand.u32 %v1391, 4294901760
    %1393 = vmatpush1.msra.mxu0 %v1392
    %v1394 = vand.u32 %v774, 4294901760
    %v1395 = vsub.f32 %v774, %v1394
    %v1396 = vand.u32 %v1395, 4294901760
    %v1397 = vsub.f32 %v1395, %v1396
    %v1398 = vand.u32 %v1397, 4294901760
    %1399 = vmatprep.subr.mxu0 %v1398
    %v1400 = vand.u32 %v773, 4294901760
    %v1401 = vsub.f32 %v773, %v1400
    %v1402 = vand.u32 %v1401, 4294901760
    %v1403 = vsub.f32 %v1401, %v1402
    %v1404 = vand.u32 %v1403, 4294901760
    %1405 = vmatpush1.msra.mxu0 %v1404
    %v1406 = vand.u32 %v776, 4294901760
    %v1407 = vsub.f32 %v776, %v1406
    %v1408 = vand.u32 %v1407, 4294901760
    %v1409 = vsub.f32 %v1407, %v1408
    %v1410 = vand.u32 %v1409, 4294901760
    %1411 = vmatprep.subr.mxu0 %v1410
    %v1412 = vand.u32 %v775, 4294901760
    %v1413 = vsub.f32 %v775, %v1412
    %v1414 = vand.u32 %v1413, 4294901760
    %v1415 = vsub.f32 %v1413, %v1414
    %v1416 = vand.u32 %v1415, 4294901760
    %1417 = vmatpush1.msra.mxu0 %v1416
    %v1418 = vand.u32 %v778, 4294901760
    %v1419 = vsub.f32 %v778, %v1418
    %v1420 = vand.u32 %v1419, 4294901760
    %v1421 = vsub.f32 %v1419, %v1420
    %v1422 = vand.u32 %v1421, 4294901760
    %1423 = vmatprep.subr.mxu0 %v1422
    %v1424 = vand.u32 %v777, 4294901760
    %v1425 = vsub.f32 %v777, %v1424
    %v1426 = vand.u32 %v1425, 4294901760
    %v1427 = vsub.f32 %v1425, %v1426
    %v1428 = vand.u32 %v1427, 4294901760
    %1429 = vmatpush1.msra.mxu0 %v1428
    %v1430 = vand.u32 %v780, 4294901760
    %v1431 = vsub.f32 %v780, %v1430
    %v1432 = vand.u32 %v1431, 4294901760
    %v1433 = vsub.f32 %v1431, %v1432
    %v1434 = vand.u32 %v1433, 4294901760
    %1435 = vmatprep.subr.mxu0 %v1434
    %v1436 = vand.u32 %v779, 4294901760
    %v1437 = vsub.f32 %v779, %v1436
    %v1438 = vand.u32 %v1437, 4294901760
    %v1439 = vsub.f32 %v1437, %v1438
    %v1440 = vand.u32 %v1439, 4294901760
    %1441 = vmatpush1.msra.mxu0 %v1440
    %v1442 = vand.u32 %v782, 4294901760
    %v1443 = vsub.f32 %v782, %v1442
    %v1444 = vand.u32 %v1443, 4294901760
    %v1445 = vsub.f32 %v1443, %v1444
    %v1446 = vand.u32 %v1445, 4294901760
    %1447 = vmatprep.subr.mxu0 %v1446
    %v1448 = vand.u32 %v781, 4294901760
    %v1449 = vsub.f32 %v781, %v1448
    %v1450 = vand.u32 %v1449, 4294901760
    %v1451 = vsub.f32 %v1449, %v1450
    %v1452 = vand.u32 %v1451, 4294901760
    %1453 = vmatpush1.msra.mxu0 %v1452
    %v1454 = vand.u32 %v784, 4294901760
    %v1455 = vsub.f32 %v784, %v1454
    %v1456 = vand.u32 %v1455, 4294901760
    %v1457 = vsub.f32 %v1455, %v1456
    %v1458 = vand.u32 %v1457, 4294901760
    %1459 = vmatprep.subr.mxu0 %v1458
    %v1460 = vand.u32 %v783, 4294901760
    %v1461 = vsub.f32 %v783, %v1460
    %v1462 = vand.u32 %v1461, 4294901760
    %v1463 = vsub.f32 %v1461, %v1462
    %v1464 = vand.u32 %v1463, 4294901760
    %1465 = vmatpush1.msra.mxu0 %v1464
    %v1466 = vand.u32 %v786, 4294901760
    %v1467 = vsub.f32 %v786, %v1466
    %v1468 = vand.u32 %v1467, 4294901760
    %v1469 = vsub.f32 %v1467, %v1468
    %v1470 = vand.u32 %v1469, 4294901760
    %1471 = vmatprep.subr.mxu0 %v1470
    %v1472 = vand.u32 %v785, 4294901760
    %v1473 = vsub.f32 %v785, %v1472
    %v1474 = vand.u32 %v1473, 4294901760
    %v1475 = vsub.f32 %v1473, %v1474
    %v1476 = vand.u32 %v1475, 4294901760
    %1477 = vmatpush1.msra.mxu0 %v1476
    %v1478 = vand.u32 %v788, 4294901760
    %v1479 = vsub.f32 %v788, %v1478
    %v1480 = vand.u32 %v1479, 4294901760
    %v1481 = vsub.f32 %v1479, %v1480
    %v1482 = vand.u32 %v1481, 4294901760
    %1483 = vmatprep.subr.mxu0 %v1482
    %v1484 = vand.u32 %v787, 4294901760
    %v1485 = vsub.f32 %v787, %v1484
    %v1486 = vand.u32 %v1485, 4294901760
    %v1487 = vsub.f32 %v1485, %v1486
    %v1488 = vand.u32 %v1487, 4294901760
    %1489 = vmatpush1.msra.mxu0 %v1488
    %v1490 = vand.u32 %v790, 4294901760
    %v1491 = vsub.f32 %v790, %v1490
    %v1492 = vand.u32 %v1491, 4294901760
    %v1493 = vsub.f32 %v1491, %v1492
    %v1494 = vand.u32 %v1493, 4294901760
    %1495 = vmatprep.subr.mxu0 %v1494
    %v1496 = vand.u32 %v789, 4294901760
    %v1497 = vsub.f32 %v789, %v1496
    %v1498 = vand.u32 %v1497, 4294901760
    %v1499 = vsub.f32 %v1497, %v1498
    %v1500 = vand.u32 %v1499, 4294901760
    %1501 = vmatpush1.msra.mxu0 %v1500
    %v1502 = vand.u32 %v792, 4294901760
    %v1503 = vsub.f32 %v792, %v1502
    %v1504 = vand.u32 %v1503, 4294901760
    %v1505 = vsub.f32 %v1503, %v1504
    %v1506 = vand.u32 %v1505, 4294901760
    %1507 = vmatprep.subr.mxu0 %v1506
    %v1508 = vand.u32 %v791, 4294901760
    %v1509 = vsub.f32 %v791, %v1508
    %v1510 = vand.u32 %v1509, 4294901760
    %v1511 = vsub.f32 %v1509, %v1510
    %v1512 = vand.u32 %v1511, 4294901760
    %1513 = vmatpush1.msra.mxu0 %v1512
    %v1514 = vand.u32 %v794, 4294901760
    %v1515 = vsub.f32 %v794, %v1514
    %v1516 = vand.u32 %v1515, 4294901760
    %v1517 = vsub.f32 %v1515, %v1516
    %v1518 = vand.u32 %v1517, 4294901760
    %1519 = vmatprep.subr.mxu0 %v1518
    %v1520 = vand.u32 %v793, 4294901760
    %v1521 = vsub.f32 %v793, %v1520
    %v1522 = vand.u32 %v1521, 4294901760
    %v1523 = vsub.f32 %v1521, %v1522
    %v1524 = vand.u32 %v1523, 4294901760
    %1525 = vmatpush1.msra.mxu0 %v1524
    %v1526 = vand.u32 %v796, 4294901760
    %v1527 = vsub.f32 %v796, %v1526
    %v1528 = vand.u32 %v1527, 4294901760
    %v1529 = vsub.f32 %v1527, %v1528
    %v1530 = vand.u32 %v1529, 4294901760
    %1531 = vmatprep.subr.mxu0 %v1530
    %v1532 = vand.u32 %v795, 4294901760
    %v1533 = vsub.f32 %v795, %v1532
    %v1534 = vand.u32 %v1533, 4294901760
    %v1535 = vsub.f32 %v1533, %v1534
    %v1536 = vand.u32 %v1535, 4294901760
    %1537 = vmatpush1.msra.mxu0 %v1536
    %v1538 = vand.u32 %v798, 4294901760
    %v1539 = vsub.f32 %v798, %v1538
    %v1540 = vand.u32 %v1539, 4294901760
    %v1541 = vsub.f32 %v1539, %v1540
    %v1542 = vand.u32 %v1541, 4294901760
    %1543 = vmatprep.subr.mxu0 %v1542
    %v1544 = vand.u32 %v797, 4294901760
    %v1545 = vsub.f32 %v797, %v1544
    %v1546 = vand.u32 %v1545, 4294901760
    %v1547 = vsub.f32 %v1545, %v1546
    %v1548 = vand.u32 %v1547, 4294901760
    %1549 = vmatpush1.msra.mxu0 %v1548
    %v1550 = vand.u32 %v800, 4294901760
    %v1551 = vsub.f32 %v800, %v1550
    %v1552 = vand.u32 %v1551, 4294901760
    %v1553 = vsub.f32 %v1551, %v1552
    %v1554 = vand.u32 %v1553, 4294901760
    %1555 = vmatprep.subr.mxu0 %v1554
    %v1556 = vand.u32 %v799, 4294901760
    %v1557 = vsub.f32 %v799, %v1556
    %v1558 = vand.u32 %v1557, 4294901760
    %v1559 = vsub.f32 %v1557, %v1558
    %v1560 = vand.u32 %v1559, 4294901760
    %1561 = vmatpush1.msra.mxu0 %v1560
    %v1562 = vand.u32 %v802, 4294901760
    %v1563 = vsub.f32 %v802, %v1562
    %v1564 = vand.u32 %v1563, 4294901760
    %v1565 = vsub.f32 %v1563, %v1564
    %v1566 = vand.u32 %v1565, 4294901760
    %1567 = vmatprep.subr.mxu0 %v1566
    %v1568 = vand.u32 %v801, 4294901760
    %v1569 = vsub.f32 %v801, %v1568
    %v1570 = vand.u32 %v1569, 4294901760
    %v1571 = vsub.f32 %v1569, %v1570
    %v1572 = vand.u32 %v1571, 4294901760
    %1573 = vmatpush1.msra.mxu0 %v1572
    %v1574 = vand.u32 %v804, 4294901760
    %v1575 = vsub.f32 %v804, %v1574
    %v1576 = vand.u32 %v1575, 4294901760
    %v1577 = vsub.f32 %v1575, %v1576
    %v1578 = vand.u32 %v1577, 4294901760
    %1579 = vmatprep.subr.mxu0 %v1578
    %v1580 = vand.u32 %v803, 4294901760
    %v1581 = vsub.f32 %v803, %v1580
    %v1582 = vand.u32 %v1581, 4294901760
    %v1583 = vsub.f32 %v1581, %v1582
    %v1584 = vand.u32 %v1583, 4294901760
    %1585 = vmatpush1.msra.mxu0 %v1584
    %v1586 = vand.u32 %v806, 4294901760
    %v1587 = vsub.f32 %v806, %v1586
    %v1588 = vand.u32 %v1587, 4294901760
    %v1589 = vsub.f32 %v1587, %v1588
    %v1590 = vand.u32 %v1589, 4294901760
    %1591 = vmatprep.subr.mxu0 %v1590
    %v1592 = vand.u32 %v805, 4294901760
    %v1593 = vsub.f32 %v805, %v1592
    %v1594 = vand.u32 %v1593, 4294901760
    %v1595 = vsub.f32 %v1593, %v1594
    %v1596 = vand.u32 %v1595, 4294901760
    %1597 = vmatpush1.msra.mxu0 %v1596
    %v1598 = vand.u32 %v808, 4294901760
    %v1599 = vsub.f32 %v808, %v1598
    %v1600 = vand.u32 %v1599, 4294901760
    %v1601 = vsub.f32 %v1599, %v1600
    %v1602 = vand.u32 %v1601, 4294901760
    %1603 = vmatprep.subr.mxu0 %v1602
    %v1604 = vand.u32 %v807, 4294901760
    %v1605 = vsub.f32 %v807, %v1604
    %v1606 = vand.u32 %v1605, 4294901760
    %v1607 = vsub.f32 %v1605, %v1606
    %v1608 = vand.u32 %v1607, 4294901760
    %1609 = vmatpush1.msra.mxu0 %v1608
    %v1610 = vand.u32 %v810, 4294901760
    %1611 = vmatprep.mubr.f32.mxu0 %v1610
    %v1612 = vand.u32 %v809, 4294901760
    %1613 = vmatmul.mubr.f32.gmra.mrb[0].mxu0 %v1612
    %v1614 = vpop.f32.mrb[0].mxu0
    %v1615 = vadd.f32 %v982, %v1614
    %v1616 = vpop.f32.mrb[0].mxu0
    %v1617 = vadd.f32 %v984, %v1616
    %v1618 = vand.u32 %v812, 4294901760
    %1619 = vmatprep.mubr.f32.mxu0 %v1618
    %v1620 = vand.u32 %v811, 4294901760
    %1621 = vmatmul.mubr.f32.gmra.mrb[0].mxu0 %v1620
    %v1622 = vpop.f32.mrb[0].mxu0
    %v1623 = vadd.f32 %v998, %v1622
    %v1624 = vpop.f32.mrb[0].mxu0
    %v1625 = vadd.f32 %v1000, %v1624
    %v1626 = vand.u32 %v814, 4294901760
    %1627 = vmatprep.mubr.f32.mxu0 %v1626
    %v1628 = vand.u32 %v813, 4294901760
    %1629 = vmatmul.mubr.f32.gmra.mrb[0].mxu0 %v1628
    %v1630 = vpop.f32.mrb[0].mxu0
    %v1631 = vadd.f32 %v1014, %v1630
    %v1632 = vpop.f32.mrb[0].mxu0
    %v1633 = vadd.f32 %v1016, %v1632
    %v1634 = vand.u32 %v816, 4294901760
    %1635 = vmatprep.mubr.f32.mxu0 %v1634
    %v1636 = vand.u32 %v815, 4294901760
    %1637 = vmatmul.mubr.f32.gmra.mrb[0].mxu0 %v1636
    %v1638 = vpop.f32.mrb[0].mxu0
    %v1639 = vadd.f32 %v1030, %v1638
    %v1640 = vpop.f32.mrb[0].mxu0
    %v1641 = vadd.f32 %v1032, %v1640
    %v1642 = vand.u32 %v818, 4294901760
    %1643 = vmatprep.mubr.f32.mxu0 %v1642
    %v1644 = vand.u32 %v817, 4294901760
    %1645 = vmatmul.mubr.f32.gmra.mrb[0].mxu0 %v1644
    %v1646 = vpop.f32.mrb[0].mxu0
    %v1647 = vadd.f32 %v1046, %v1646
    %v1648 = vpop.f32.mrb[0].mxu0
    %v1649 = vadd.f32 %v1048, %v1648
    %v1650 = vand.u32 %v820, 4294901760
    %1651 = vmatprep.mubr.f32.mxu0 %v1650
    %v1652 = vand.u32 %v819, 4294901760
    %1653 = vmatmul.mubr.f32.gmra.mrb[0].mxu0 %v1652
    %v1654 = vpop.f32.mrb[0].mxu0
    %v1655 = vadd.f32 %v1062, %v1654
    %v1656 = vpop.f32.mrb[0].mxu0
    %v1657 = vadd.f32 %v1064, %v1656
    %v1658 = vand.u32 %v822, 4294901760
    %1659 = vmatprep.mubr.f32.mxu0 %v1658
    %v1660 = vand.u32 %v821, 4294901760
    %1661 = vmatmul.mubr.f32.gmra.mrb[0].mxu0 %v1660
    %v1662 = vpop.f32.mrb[0].mxu0
    %v1663 = vadd.f32 %v1078, %v1662
    %v1664 = vpop.f32.mrb[0].mxu0
    %v1665 = vadd.f32 %v1080, %v1664
    %v1666 = vand.u32 %v824, 4294901760
    %1667 = vmatprep.mubr.f32.mxu0 %v1666
    %v1668 = vand.u32 %v823, 4294901760
    %1669 = vmatmul.mubr.f32.gmra.mrb[0].mxu0 %v1668
    %v1670 = vpop.f32.mrb[0].mxu0
    %v1671 = vadd.f32 %v1094, %v1670
    %v1672 = vpop.f32.mrb[0].mxu0
    %v1673 = vadd.f32 %v1096, %v1672
    %v1674 = vand.u32 %v826, 4294901760
    %1675 = vmatprep.mubr.f32.mxu0 %v1674
    %v1676 = vand.u32 %v825, 4294901760
    %1677 = vmatmul.mubr.f32.gmra.mrb[0].mxu0 %v1676
    %v1678 = vpop.f32.mrb[0].mxu0
    %v1679 = vadd.f32 %v1110, %v1678
    %v1680 = vpop.f32.mrb[0].mxu0
    %v1681 = vadd.f32 %v1112, %v1680
    %v1682 = vand.u32 %v828, 4294901760
    %1683 = vmatprep.mubr.f32.mxu0 %v1682
    %v1684 = vand.u32 %v827, 4294901760
    %1685 = vmatmul.mubr.f32.gmra.mrb[0].mxu0 %v1684
    %v1686 = vpop.f32.mrb[0].mxu0
    %v1687 = vadd.f32 %v1126, %v1686
    %v1688 = vpop.f32.mrb[0].mxu0
    %v1689 = vadd.f32 %v1128, %v1688
    %v1690 = vand.u32 %v830, 4294901760
    %1691 = vmatprep.mubr.f32.mxu0 %v1690
    %v1692 = vand.u32 %v829, 4294901760
    %1693 = vmatmul.mubr.f32.gmra.mrb[0].mxu0 %v1692
    %v1694 = vpop.f32.mrb[0].mxu0
    %v1695 = vadd.f32 %v1142, %v1694
    %v1696 = vpop.f32.mrb[0].mxu0
    %v1697 = vadd.f32 %v1144, %v1696
    %v1698 = vand.u32 %v832, 4294901760
    %1699 = vmatprep.mubr.f32.mxu0 %v1698
    %v1700 = vand.u32 %v831, 4294901760
    %1701 = vmatmul.mubr.f32.gmra.mrb[0].mxu0 %v1700
    %v1702 = vpop.f32.mrb[0].mxu0
    %v1703 = vadd.f32 %v1158, %v1702
    %v1704 = vpop.f32.mrb[0].mxu0
    %v1705 = vadd.f32 %v1160, %v1704
    %v1706 = vand.u32 %v834, 4294901760
    %1707 = vmatprep.mubr.f32.mxu0 %v1706
    %v1708 = vand.u32 %v833, 4294901760
    %1709 = vmatmul.mubr.f32.gmra.mrb[0].mxu0 %v1708
    %v1710 = vpop.f32.mrb[0].mxu0
    %v1711 = vadd.f32 %v1174, %v1710
    %v1712 = vpop.f32.mrb[0].mxu0
    %v1713 = vadd.f32 %v1176, %v1712
    %v1714 = vand.u32 %v836, 4294901760
    %1715 = vmatprep.mubr.f32.mxu0 %v1714
    %v1716 = vand.u32 %v835, 4294901760
    %1717 = vmatmul.mubr.f32.gmra.mrb[0].mxu0 %v1716
    %v1718 = vpop.f32.mrb[0].mxu0
    %v1719 = vadd.f32 %v1190, %v1718
    %v1720 = vpop.f32.mrb[0].mxu0
    %v1721 = vadd.f32 %v1192, %v1720
    %v1722 = vand.u32 %v838, 4294901760
    %1723 = vmatprep.mubr.f32.mxu0 %v1722
    %v1724 = vand.u32 %v837, 4294901760
    %1725 = vmatmul.mubr.f32.gmra.mrb[0].mxu0 %v1724
    %v1726 = vpop.f32.mrb[0].mxu0
    %v1727 = vadd.f32 %v1206, %v1726
    %v1728 = vpop.f32.mrb[0].mxu0
    %v1729 = vadd.f32 %v1208, %v1728
    %v1730 = vand.u32 %v840, 4294901760
    %1731 = vmatprep.mubr.f32.mxu0 %v1730
    %v1732 = vand.u32 %v839, 4294901760
    %1733 = vmatmul.mubr.f32.gmra.mrb[0].mxu0 %v1732
    %v1734 = vpop.f32.mrb[0].mxu0
    %v1735 = vadd.f32 %v1222, %v1734
    %v1736 = vpop.f32.mrb[0].mxu0
    %v1737 = vadd.f32 %v1224, %v1736
    %1738 = vdwg.mxu0
    %v1739 = vand.u32 %v746, 4294901760
    %v1740 = vsub.f32 %v746, %v1739
    %1741 = vmatprep.subr.mxu0 %v1740
    %v1742 = vand.u32 %v745, 4294901760
    %v1743 = vsub.f32 %v745, %v1742
    %1744 = vmatpush1.msra.mxu0 %v1743
    %v1745 = vand.u32 %v748, 4294901760
    %v1746 = vsub.f32 %v748, %v1745
    %1747 = vmatprep.subr.mxu0 %v1746
    %v1748 = vand.u32 %v747, 4294901760
    %v1749 = vsub.f32 %v747, %v1748
    %1750 = vmatpush1.msra.mxu0 %v1749
    %v1751 = vand.u32 %v750, 4294901760
    %v1752 = vsub.f32 %v750, %v1751
    %1753 = vmatprep.subr.mxu0 %v1752
    %v1754 = vand.u32 %v749, 4294901760
    %v1755 = vsub.f32 %v749, %v1754
    %1756 = vmatpush1.msra.mxu0 %v1755
    %v1757 = vand.u32 %v752, 4294901760
    %v1758 = vsub.f32 %v752, %v1757
    %1759 = vmatprep.subr.mxu0 %v1758
    %v1760 = vand.u32 %v751, 4294901760
    %v1761 = vsub.f32 %v751, %v1760
    %1762 = vmatpush1.msra.mxu0 %v1761
    %v1763 = vand.u32 %v754, 4294901760
    %v1764 = vsub.f32 %v754, %v1763
    %1765 = vmatprep.subr.mxu0 %v1764
    %v1766 = vand.u32 %v753, 4294901760
    %v1767 = vsub.f32 %v753, %v1766
    %1768 = vmatpush1.msra.mxu0 %v1767
    %v1769 = vand.u32 %v756, 4294901760
    %v1770 = vsub.f32 %v756, %v1769
    %1771 = vmatprep.subr.mxu0 %v1770
    %v1772 = vand.u32 %v755, 4294901760
    %v1773 = vsub.f32 %v755, %v1772
    %1774 = vmatpush1.msra.mxu0 %v1773
    %v1775 = vand.u32 %v758, 4294901760
    %v1776 = vsub.f32 %v758, %v1775
    %1777 = vmatprep.subr.mxu0 %v1776
    %v1778 = vand.u32 %v757, 4294901760
    %v1779 = vsub.f32 %v757, %v1778
    %1780 = vmatpush1.msra.mxu0 %v1779
    %v1781 = vand.u32 %v760, 4294901760
    %v1782 = vsub.f32 %v760, %v1781
    %1783 = vmatprep.subr.mxu0 %v1782
    %v1784 = vand.u32 %v759, 4294901760
    %v1785 = vsub.f32 %v759, %v1784
    %1786 = vmatpush1.msra.mxu0 %v1785
    %v1787 = vand.u32 %v762, 4294901760
    %v1788 = vsub.f32 %v762, %v1787
    %1789 = vmatprep.subr.mxu0 %v1788
    %v1790 = vand.u32 %v761, 4294901760
    %v1791 = vsub.f32 %v761, %v1790
    %1792 = vmatpush1.msra.mxu0 %v1791
    %v1793 = vand.u32 %v764, 4294901760
    %v1794 = vsub.f32 %v764, %v1793
    %1795 = vmatprep.subr.mxu0 %v1794
    %v1796 = vand.u32 %v763, 4294901760
    %v1797 = vsub.f32 %v763, %v1796
    %1798 = vmatpush1.msra.mxu0 %v1797
    %v1799 = vand.u32 %v766, 4294901760
    %v1800 = vsub.f32 %v766, %v1799
    %1801 = vmatprep.subr.mxu0 %v1800
    %v1802 = vand.u32 %v765, 4294901760
    %v1803 = vsub.f32 %v765, %v1802
    %1804 = vmatpush1.msra.mxu0 %v1803
    %v1805 = vand.u32 %v768, 4294901760
    %v1806 = vsub.f32 %v768, %v1805
    %1807 = vmatprep.subr.mxu0 %v1806
    %v1808 = vand.u32 %v767, 4294901760
    %v1809 = vsub.f32 %v767, %v1808
    %1810 = vmatpush1.msra.mxu0 %v1809
    %v1811 = vand.u32 %v770, 4294901760
    %v1812 = vsub.f32 %v770, %v1811
    %1813 = vmatprep.subr.mxu0 %v1812
    %v1814 = vand.u32 %v769, 4294901760
    %v1815 = vsub.f32 %v769, %v1814
    %1816 = vmatpush1.msra.mxu0 %v1815
    %v1817 = vand.u32 %v772, 4294901760
    %v1818 = vsub.f32 %v772, %v1817
    %1819 = vmatprep.subr.mxu0 %v1818
    %v1820 = vand.u32 %v771, 4294901760
    %v1821 = vsub.f32 %v771, %v1820
    %1822 = vmatpush1.msra.mxu0 %v1821
    %v1823 = vand.u32 %v774, 4294901760
    %v1824 = vsub.f32 %v774, %v1823
    %1825 = vmatprep.subr.mxu0 %v1824
    %v1826 = vand.u32 %v773, 4294901760
    %v1827 = vsub.f32 %v773, %v1826
    %1828 = vmatpush1.msra.mxu0 %v1827
    %v1829 = vand.u32 %v776, 4294901760
    %v1830 = vsub.f32 %v776, %v1829
    %1831 = vmatprep.subr.mxu0 %v1830
    %v1832 = vand.u32 %v775, 4294901760
    %v1833 = vsub.f32 %v775, %v1832
    %1834 = vmatpush1.msra.mxu0 %v1833
    %v1835 = vand.u32 %v778, 4294901760
    %v1836 = vsub.f32 %v778, %v1835
    %1837 = vmatprep.subr.mxu0 %v1836
    %v1838 = vand.u32 %v777, 4294901760
    %v1839 = vsub.f32 %v777, %v1838
    %1840 = vmatpush1.msra.mxu0 %v1839
    %v1841 = vand.u32 %v780, 4294901760
    %v1842 = vsub.f32 %v780, %v1841
    %1843 = vmatprep.subr.mxu0 %v1842
    %v1844 = vand.u32 %v779, 4294901760
    %v1845 = vsub.f32 %v779, %v1844
    %1846 = vmatpush1.msra.mxu0 %v1845
    %v1847 = vand.u32 %v782, 4294901760
    %v1848 = vsub.f32 %v782, %v1847
    %1849 = vmatprep.subr.mxu0 %v1848
    %v1850 = vand.u32 %v781, 4294901760
    %v1851 = vsub.f32 %v781, %v1850
    %1852 = vmatpush1.msra.mxu0 %v1851
    %v1853 = vand.u32 %v784, 4294901760
    %v1854 = vsub.f32 %v784, %v1853
    %1855 = vmatprep.subr.mxu0 %v1854
    %v1856 = vand.u32 %v783, 4294901760
    %v1857 = vsub.f32 %v783, %v1856
    %1858 = vmatpush1.msra.mxu0 %v1857
    %v1859 = vand.u32 %v786, 4294901760
    %v1860 = vsub.f32 %v786, %v1859
    %1861 = vmatprep.subr.mxu0 %v1860
    %v1862 = vand.u32 %v785, 4294901760
    %v1863 = vsub.f32 %v785, %v1862
    %1864 = vmatpush1.msra.mxu0 %v1863
    %v1865 = vand.u32 %v788, 4294901760
    %v1866 = vsub.f32 %v788, %v1865
    %1867 = vmatprep.subr.mxu0 %v1866
    %v1868 = vand.u32 %v787, 4294901760
    %v1869 = vsub.f32 %v787, %v1868
    %1870 = vmatpush1.msra.mxu0 %v1869
    %v1871 = vand.u32 %v790, 4294901760
    %v1872 = vsub.f32 %v790, %v1871
    %1873 = vmatprep.subr.mxu0 %v1872
    %v1874 = vand.u32 %v789, 4294901760
    %v1875 = vsub.f32 %v789, %v1874
    %1876 = vmatpush1.msra.mxu0 %v1875
    %v1877 = vand.u32 %v792, 4294901760
    %v1878 = vsub.f32 %v792, %v1877
    %1879 = vmatprep.subr.mxu0 %v1878
    %v1880 = vand.u32 %v791, 4294901760
    %v1881 = vsub.f32 %v791, %v1880
    %1882 = vmatpush1.msra.mxu0 %v1881
    %v1883 = vand.u32 %v794, 4294901760
    %v1884 = vsub.f32 %v794, %v1883
    %1885 = vmatprep.subr.mxu0 %v1884
    %v1886 = vand.u32 %v793, 4294901760
    %v1887 = vsub.f32 %v793, %v1886
    %1888 = vmatpush1.msra.mxu0 %v1887
    %v1889 = vand.u32 %v796, 4294901760
    %v1890 = vsub.f32 %v796, %v1889
    %1891 = vmatprep.subr.mxu0 %v1890
    %v1892 = vand.u32 %v795, 4294901760
    %v1893 = vsub.f32 %v795, %v1892
    %1894 = vmatpush1.msra.mxu0 %v1893
    %v1895 = vand.u32 %v798, 4294901760
    %v1896 = vsub.f32 %v798, %v1895
    %1897 = vmatprep.subr.mxu0 %v1896
    %v1898 = vand.u32 %v797, 4294901760
    %v1899 = vsub.f32 %v797, %v1898
    %1900 = vmatpush1.msra.mxu0 %v1899
    %v1901 = vand.u32 %v800, 4294901760
    %v1902 = vsub.f32 %v800, %v1901
    %1903 = vmatprep.subr.mxu0 %v1902
    %v1904 = vand.u32 %v799, 4294901760
    %v1905 = vsub.f32 %v799, %v1904
    %1906 = vmatpush1.msra.mxu0 %v1905
    %v1907 = vand.u32 %v802, 4294901760
    %v1908 = vsub.f32 %v802, %v1907
    %1909 = vmatprep.subr.mxu0 %v1908
    %v1910 = vand.u32 %v801, 4294901760
    %v1911 = vsub.f32 %v801, %v1910
    %1912 = vmatpush1.msra.mxu0 %v1911
    %v1913 = vand.u32 %v804, 4294901760
    %v1914 = vsub.f32 %v804, %v1913
    %1915 = vmatprep.subr.mxu0 %v1914
    %v1916 = vand.u32 %v803, 4294901760
    %v1917 = vsub.f32 %v803, %v1916
    %1918 = vmatpush1.msra.mxu0 %v1917
    %v1919 = vand.u32 %v806, 4294901760
    %v1920 = vsub.f32 %v806, %v1919
    %1921 = vmatprep.subr.mxu0 %v1920
    %v1922 = vand.u32 %v805, 4294901760
    %v1923 = vsub.f32 %v805, %v1922
    %1924 = vmatpush1.msra.mxu0 %v1923
    %v1925 = vand.u32 %v808, 4294901760
    %v1926 = vsub.f32 %v808, %v1925
    %1927 = vmatprep.subr.mxu0 %v1926
    %v1928 = vand.u32 %v807, 4294901760
    %v1929 = vsub.f32 %v807, %v1928
    %1930 = vmatpush1.msra.mxu0 %v1929
    %v1931 = vand.u32 %v810, 4294901760
    %v1932 = vsub.f32 %v810, %v1931
    %1933 = vmatprep.mubr.f32.mxu0 %v1932
    %v1934 = vand.u32 %v809, 4294901760
    %v1935 = vsub.f32 %v809, %v1934
    %1936 = vmatmul.mubr.f32.gmra.mrb[0].mxu0 %v1935
    %v1937 = vpop.f32.mrb[0].mxu0
    %v1938 = vadd.f32 %v1615, %v1937
    %v1939 = vpop.f32.mrb[0].mxu0
    %v1940 = vadd.f32 %v1617, %v1939
    %v1941 = vand.u32 %v812, 4294901760
    %v1942 = vsub.f32 %v812, %v1941
    %1943 = vmatprep.mubr.f32.mxu0 %v1942
    %v1944 = vand.u32 %v811, 4294901760
    %v1945 = vsub.f32 %v811, %v1944
    %1946 = vmatmul.mubr.f32.gmra.mrb[0].mxu0 %v1945
    %v1947 = vpop.f32.mrb[0].mxu0
    %v1948 = vadd.f32 %v1623, %v1947
    %v1949 = vpop.f32.mrb[0].mxu0
    %v1950 = vadd.f32 %v1625, %v1949
    %v1951 = vand.u32 %v814, 4294901760
    %v1952 = vsub.f32 %v814, %v1951
    %1953 = vmatprep.mubr.f32.mxu0 %v1952
    %v1954 = vand.u32 %v813, 4294901760
    %v1955 = vsub.f32 %v813, %v1954
    %1956 = vmatmul.mubr.f32.gmra.mrb[0].mxu0 %v1955
    %v1957 = vpop.f32.mrb[0].mxu0
    %v1958 = vadd.f32 %v1631, %v1957
    %v1959 = vpop.f32.mrb[0].mxu0
    %v1960 = vadd.f32 %v1633, %v1959
    %v1961 = vand.u32 %v816, 4294901760
    %v1962 = vsub.f32 %v816, %v1961
    %1963 = vmatprep.mubr.f32.mxu0 %v1962
    %v1964 = vand.u32 %v815, 4294901760
    %v1965 = vsub.f32 %v815, %v1964
    %1966 = vmatmul.mubr.f32.gmra.mrb[0].mxu0 %v1965
    %v1967 = vpop.f32.mrb[0].mxu0
    %v1968 = vadd.f32 %v1639, %v1967
    %v1969 = vpop.f32.mrb[0].mxu0
    %v1970 = vadd.f32 %v1641, %v1969
    %v1971 = vand.u32 %v818, 4294901760
    %v1972 = vsub.f32 %v818, %v1971
    %1973 = vmatprep.mubr.f32.mxu0 %v1972
    %v1974 = vand.u32 %v817, 4294901760
    %v1975 = vsub.f32 %v817, %v1974
    %1976 = vmatmul.mubr.f32.gmra.mrb[0].mxu0 %v1975
    %v1977 = vpop.f32.mrb[0].mxu0
    %v1978 = vadd.f32 %v1647, %v1977
    %v1979 = vpop.f32.mrb[0].mxu0
    %v1980 = vadd.f32 %v1649, %v1979
    %v1981 = vand.u32 %v820, 4294901760
    %v1982 = vsub.f32 %v820, %v1981
    %1983 = vmatprep.mubr.f32.mxu0 %v1982
    %v1984 = vand.u32 %v819, 4294901760
    %v1985 = vsub.f32 %v819, %v1984
    %1986 = vmatmul.mubr.f32.gmra.mrb[0].mxu0 %v1985
    %v1987 = vpop.f32.mrb[0].mxu0
    %v1988 = vadd.f32 %v1655, %v1987
    %v1989 = vpop.f32.mrb[0].mxu0
    %v1990 = vadd.f32 %v1657, %v1989
    %v1991 = vand.u32 %v822, 4294901760
    %v1992 = vsub.f32 %v822, %v1991
    %1993 = vmatprep.mubr.f32.mxu0 %v1992
    %v1994 = vand.u32 %v821, 4294901760
    %v1995 = vsub.f32 %v821, %v1994
    %1996 = vmatmul.mubr.f32.gmra.mrb[0].mxu0 %v1995
    %v1997 = vpop.f32.mrb[0].mxu0
    %v1998 = vadd.f32 %v1663, %v1997
    %v1999 = vpop.f32.mrb[0].mxu0
    %v2000 = vadd.f32 %v1665, %v1999
    %v2001 = vand.u32 %v824, 4294901760
    %v2002 = vsub.f32 %v824, %v2001
    %2003 = vmatprep.mubr.f32.mxu0 %v2002
    %v2004 = vand.u32 %v823, 4294901760
    %v2005 = vsub.f32 %v823, %v2004
    %2006 = vmatmul.mubr.f32.gmra.mrb[0].mxu0 %v2005
    %v2007 = vpop.f32.mrb[0].mxu0
    %v2008 = vadd.f32 %v1671, %v2007
    %v2009 = vpop.f32.mrb[0].mxu0
    %v2010 = vadd.f32 %v1673, %v2009
    %v2011 = vand.u32 %v826, 4294901760
    %v2012 = vsub.f32 %v826, %v2011
    %2013 = vmatprep.mubr.f32.mxu0 %v2012
    %v2014 = vand.u32 %v825, 4294901760
    %v2015 = vsub.f32 %v825, %v2014
    %2016 = vmatmul.mubr.f32.gmra.mrb[0].mxu0 %v2015
    %v2017 = vpop.f32.mrb[0].mxu0
    %v2018 = vadd.f32 %v1679, %v2017
    %v2019 = vpop.f32.mrb[0].mxu0
    %v2020 = vadd.f32 %v1681, %v2019
    %v2021 = vand.u32 %v828, 4294901760
    %v2022 = vsub.f32 %v828, %v2021
    %2023 = vmatprep.mubr.f32.mxu0 %v2022
    %v2024 = vand.u32 %v827, 4294901760
    %v2025 = vsub.f32 %v827, %v2024
    %2026 = vmatmul.mubr.f32.gmra.mrb[0].mxu0 %v2025
    %v2027 = vpop.f32.mrb[0].mxu0
    %v2028 = vadd.f32 %v1687, %v2027
    %v2029 = vpop.f32.mrb[0].mxu0
    %v2030 = vadd.f32 %v1689, %v2029
    %v2031 = vand.u32 %v830, 4294901760
    %v2032 = vsub.f32 %v830, %v2031
    %2033 = vmatprep.mubr.f32.mxu0 %v2032
    %v2034 = vand.u32 %v829, 4294901760
    %v2035 = vsub.f32 %v829, %v2034
    %2036 = vmatmul.mubr.f32.gmra.mrb[0].mxu0 %v2035
    %v2037 = vpop.f32.mrb[0].mxu0
    %v2038 = vadd.f32 %v1695, %v2037
    %v2039 = vpop.f32.mrb[0].mxu0
    %v2040 = vadd.f32 %v1697, %v2039
    %v2041 = vand.u32 %v832, 4294901760
    %v2042 = vsub.f32 %v832, %v2041
    %2043 = vmatprep.mubr.f32.mxu0 %v2042
    %v2044 = vand.u32 %v831, 4294901760
    %v2045 = vsub.f32 %v831, %v2044
    %2046 = vmatmul.mubr.f32.gmra.mrb[0].mxu0 %v2045
    %v2047 = vpop.f32.mrb[0].mxu0
    %v2048 = vadd.f32 %v1703, %v2047
    %v2049 = vpop.f32.mrb[0].mxu0
    %v2050 = vadd.f32 %v1705, %v2049
    %v2051 = vand.u32 %v834, 4294901760
    %v2052 = vsub.f32 %v834, %v2051
    %2053 = vmatprep.mubr.f32.mxu0 %v2052
    %v2054 = vand.u32 %v833, 4294901760
    %v2055 = vsub.f32 %v833, %v2054
    %2056 = vmatmul.mubr.f32.gmra.mrb[0].mxu0 %v2055
    %v2057 = vpop.f32.mrb[0].mxu0
    %v2058 = vadd.f32 %v1711, %v2057
    %v2059 = vpop.f32.mrb[0].mxu0
    %v2060 = vadd.f32 %v1713, %v2059
    %v2061 = vand.u32 %v836, 4294901760
    %v2062 = vsub.f32 %v836, %v2061
    %2063 = vmatprep.mubr.f32.mxu0 %v2062
    %v2064 = vand.u32 %v835, 4294901760
    %v2065 = vsub.f32 %v835, %v2064
    %2066 = vmatmul.mubr.f32.gmra.mrb[0].mxu0 %v2065
    %v2067 = vpop.f32.mrb[0].mxu0
    %v2068 = vadd.f32 %v1719, %v2067
    %v2069 = vpop.f32.mrb[0].mxu0
    %v2070 = vadd.f32 %v1721, %v2069
    %v2071 = vand.u32 %v838, 4294901760
    %v2072 = vsub.f32 %v838, %v2071
    %2073 = vmatprep.mubr.f32.mxu0 %v2072
    %v2074 = vand.u32 %v837, 4294901760
    %v2075 = vsub.f32 %v837, %v2074
    %2076 = vmatmul.mubr.f32.gmra.mrb[0].mxu0 %v2075
    %v2077 = vpop.f32.mrb[0].mxu0
    %v2078 = vadd.f32 %v1727, %v2077
    %v2079 = vpop.f32.mrb[0].mxu0
    %v2080 = vadd.f32 %v1729, %v2079
    %v2081 = vand.u32 %v840, 4294901760
    %v2082 = vsub.f32 %v840, %v2081
    %2083 = vmatprep.mubr.f32.mxu0 %v2082
    %v2084 = vand.u32 %v839, 4294901760
    %v2085 = vsub.f32 %v839, %v2084
    %2086 = vmatmul.mubr.f32.gmra.mrb[0].mxu0 %v2085
    %v2087 = vpop.f32.mrb[0].mxu0
    %v2088 = vadd.f32 %v1735, %v2087
    %v2089 = vpop.f32.mrb[0].mxu0
    %v2090 = vadd.f32 %v1737, %v2089
    %2091 = vdwg.mxu0
    %v2092 = vand.u32 %v746, 4294901760
    %2093 = vmatprep.subr.mxu0 %v2092
    %v2094 = vand.u32 %v745, 4294901760
    %2095 = vmatpush1.msra.mxu0 %v2094
    %v2096 = vand.u32 %v748, 4294901760
    %2097 = vmatprep.subr.mxu0 %v2096
    %v2098 = vand.u32 %v747, 4294901760
    %2099 = vmatpush1.msra.mxu0 %v2098
    %v2100 = vand.u32 %v750, 4294901760
    %2101 = vmatprep.subr.mxu0 %v2100
    %v2102 = vand.u32 %v749, 4294901760
    %2103 = vmatpush1.msra.mxu0 %v2102
    %v2104 = vand.u32 %v752, 4294901760
    %2105 = vmatprep.subr.mxu0 %v2104
    %v2106 = vand.u32 %v751, 4294901760
    %2107 = vmatpush1.msra.mxu0 %v2106
    %v2108 = vand.u32 %v754, 4294901760
    %2109 = vmatprep.subr.mxu0 %v2108
    %v2110 = vand.u32 %v753, 4294901760
    %2111 = vmatpush1.msra.mxu0 %v2110
    %v2112 = vand.u32 %v756, 4294901760
    %2113 = vmatprep.subr.mxu0 %v2112
    %v2114 = vand.u32 %v755, 4294901760
    %2115 = vmatpush1.msra.mxu0 %v2114
    %v2116 = vand.u32 %v758, 4294901760
    %2117 = vmatprep.subr.mxu0 %v2116
    %v2118 = vand.u32 %v757, 4294901760
    %2119 = vmatpush1.msra.mxu0 %v2118
    %v2120 = vand.u32 %v760, 4294901760
    %2121 = vmatprep.subr.mxu0 %v2120
    %v2122 = vand.u32 %v759, 4294901760
    %2123 = vmatpush1.msra.mxu0 %v2122
    %v2124 = vand.u32 %v762, 4294901760
    %2125 = vmatprep.subr.mxu0 %v2124
    %v2126 = vand.u32 %v761, 4294901760
    %2127 = vmatpush1.msra.mxu0 %v2126
    %v2128 = vand.u32 %v764, 4294901760
    %2129 = vmatprep.subr.mxu0 %v2128
    %v2130 = vand.u32 %v763, 4294901760
    %2131 = vmatpush1.msra.mxu0 %v2130
    %v2132 = vand.u32 %v766, 4294901760
    %2133 = vmatprep.subr.mxu0 %v2132
    %v2134 = vand.u32 %v765, 4294901760
    %2135 = vmatpush1.msra.mxu0 %v2134
    %v2136 = vand.u32 %v768, 4294901760
    %2137 = vmatprep.subr.mxu0 %v2136
    %v2138 = vand.u32 %v767, 4294901760
    %2139 = vmatpush1.msra.mxu0 %v2138
    %v2140 = vand.u32 %v770, 4294901760
    %2141 = vmatprep.subr.mxu0 %v2140
    %v2142 = vand.u32 %v769, 4294901760
    %2143 = vmatpush1.msra.mxu0 %v2142
    %v2144 = vand.u32 %v772, 4294901760
    %2145 = vmatprep.subr.mxu0 %v2144
    %v2146 = vand.u32 %v771, 4294901760
    %2147 = vmatpush1.msra.mxu0 %v2146
    %v2148 = vand.u32 %v774, 4294901760
    %2149 = vmatprep.subr.mxu0 %v2148
    %v2150 = vand.u32 %v773, 4294901760
    %2151 = vmatpush1.msra.mxu0 %v2150
    %v2152 = vand.u32 %v776, 4294901760
    %2153 = vmatprep.subr.mxu0 %v2152
    %v2154 = vand.u32 %v775, 4294901760
    %2155 = vmatpush1.msra.mxu0 %v2154
    %v2156 = vand.u32 %v778, 4294901760
    %2157 = vmatprep.subr.mxu0 %v2156
    %v2158 = vand.u32 %v777, 4294901760
    %2159 = vmatpush1.msra.mxu0 %v2158
    %v2160 = vand.u32 %v780, 4294901760
    %2161 = vmatprep.subr.mxu0 %v2160
    %v2162 = vand.u32 %v779, 4294901760
    %2163 = vmatpush1.msra.mxu0 %v2162
    %v2164 = vand.u32 %v782, 4294901760
    %2165 = vmatprep.subr.mxu0 %v2164
    %v2166 = vand.u32 %v781, 4294901760
    %2167 = vmatpush1.msra.mxu0 %v2166
    %v2168 = vand.u32 %v784, 4294901760
    %2169 = vmatprep.subr.mxu0 %v2168
    %v2170 = vand.u32 %v783, 4294901760
    %2171 = vmatpush1.msra.mxu0 %v2170
    %v2172 = vand.u32 %v786, 4294901760
    %2173 = vmatprep.subr.mxu0 %v2172
    %v2174 = vand.u32 %v785, 4294901760
    %2175 = vmatpush1.msra.mxu0 %v2174
    %v2176 = vand.u32 %v788, 4294901760
    %2177 = vmatprep.subr.mxu0 %v2176
    %v2178 = vand.u32 %v787, 4294901760
    %2179 = vmatpush1.msra.mxu0 %v2178
    %v2180 = vand.u32 %v790, 4294901760
    %2181 = vmatprep.subr.mxu0 %v2180
    %v2182 = vand.u32 %v789, 4294901760
    %2183 = vmatpush1.msra.mxu0 %v2182
    %v2184 = vand.u32 %v792, 4294901760
    %2185 = vmatprep.subr.mxu0 %v2184
    %v2186 = vand.u32 %v791, 4294901760
    %2187 = vmatpush1.msra.mxu0 %v2186
    %v2188 = vand.u32 %v794, 4294901760
    %2189 = vmatprep.subr.mxu0 %v2188
    %v2190 = vand.u32 %v793, 4294901760
    %2191 = vmatpush1.msra.mxu0 %v2190
    %v2192 = vand.u32 %v796, 4294901760
    %2193 = vmatprep.subr.mxu0 %v2192
    %v2194 = vand.u32 %v795, 4294901760
    %2195 = vmatpush1.msra.mxu0 %v2194
    %v2196 = vand.u32 %v798, 4294901760
    %2197 = vmatprep.subr.mxu0 %v2196
    %v2198 = vand.u32 %v797, 4294901760
    %2199 = vmatpush1.msra.mxu0 %v2198
    %v2200 = vand.u32 %v800, 4294901760
    %2201 = vmatprep.subr.mxu0 %v2200
    %v2202 = vand.u32 %v799, 4294901760
    %2203 = vmatpush1.msra.mxu0 %v2202
    %v2204 = vand.u32 %v802, 4294901760
    %2205 = vmatprep.subr.mxu0 %v2204
    %v2206 = vand.u32 %v801, 4294901760
    %2207 = vmatpush1.msra.mxu0 %v2206
    %v2208 = vand.u32 %v804, 4294901760
    %2209 = vmatprep.subr.mxu0 %v2208
    %v2210 = vand.u32 %v803, 4294901760
    %2211 = vmatpush1.msra.mxu0 %v2210
    %v2212 = vand.u32 %v806, 4294901760
    %2213 = vmatprep.subr.mxu0 %v2212
    %v2214 = vand.u32 %v805, 4294901760
    %2215 = vmatpush1.msra.mxu0 %v2214
    %v2216 = vand.u32 %v808, 4294901760
    %2217 = vmatprep.subr.mxu0 %v2216
    %v2218 = vand.u32 %v807, 4294901760
    %2219 = vmatpush1.msra.mxu0 %v2218
    %v2220 = vand.u32 %v810, 4294901760
    %v2221 = vsub.f32 %v810, %v2220
    %v2222 = vand.u32 %v2221, 4294901760
    %2223 = vmatprep.mubr.f32.mxu0 %v2222
    %v2224 = vand.u32 %v809, 4294901760
    %v2225 = vsub.f32 %v809, %v2224
    %v2226 = vand.u32 %v2225, 4294901760
    %2227 = vmatmul.mubr.f32.gmra.mrb[0].mxu0 %v2226
    %v2228 = vpop.f32.mrb[0].mxu0
    %v2229 = vadd.f32 %v1938, %v2228
    %v2230 = vpop.f32.mrb[0].mxu0
    %v2231 = vadd.f32 %v1940, %v2230
    %v2232 = vand.u32 %v812, 4294901760
    %v2233 = vsub.f32 %v812, %v2232
    %v2234 = vand.u32 %v2233, 4294901760
    %2235 = vmatprep.mubr.f32.mxu0 %v2234
    %v2236 = vand.u32 %v811, 4294901760
    %v2237 = vsub.f32 %v811, %v2236
    %v2238 = vand.u32 %v2237, 4294901760
    %2239 = vmatmul.mubr.f32.gmra.mrb[0].mxu0 %v2238
    %v2240 = vpop.f32.mrb[0].mxu0
    %v2241 = vadd.f32 %v1948, %v2240
    %v2242 = vpop.f32.mrb[0].mxu0
    %v2243 = vadd.f32 %v1950, %v2242
    %v2244 = vand.u32 %v814, 4294901760
    %v2245 = vsub.f32 %v814, %v2244
    %v2246 = vand.u32 %v2245, 4294901760
    %2247 = vmatprep.mubr.f32.mxu0 %v2246
    %v2248 = vand.u32 %v813, 4294901760
    %v2249 = vsub.f32 %v813, %v2248
    %v2250 = vand.u32 %v2249, 4294901760
    %2251 = vmatmul.mubr.f32.gmra.mrb[0].mxu0 %v2250
    %v2252 = vpop.f32.mrb[0].mxu0
    %v2253 = vadd.f32 %v1958, %v2252
    %v2254 = vpop.f32.mrb[0].mxu0
    %v2255 = vadd.f32 %v1960, %v2254
    %v2256 = vand.u32 %v816, 4294901760
    %v2257 = vsub.f32 %v816, %v2256
    %v2258 = vand.u32 %v2257, 4294901760
    %2259 = vmatprep.mubr.f32.mxu0 %v2258
    %v2260 = vand.u32 %v815, 4294901760
    %v2261 = vsub.f32 %v815, %v2260
    %v2262 = vand.u32 %v2261, 4294901760
    %2263 = vmatmul.mubr.f32.gmra.mrb[0].mxu0 %v2262
    %v2264 = vpop.f32.mrb[0].mxu0
    %v2265 = vadd.f32 %v1968, %v2264
    %v2266 = vpop.f32.mrb[0].mxu0
    %v2267 = vadd.f32 %v1970, %v2266
    %v2268 = vand.u32 %v818, 4294901760
    %v2269 = vsub.f32 %v818, %v2268
    %v2270 = vand.u32 %v2269, 4294901760
    %2271 = vmatprep.mubr.f32.mxu0 %v2270
    %v2272 = vand.u32 %v817, 4294901760
    %v2273 = vsub.f32 %v817, %v2272
    %v2274 = vand.u32 %v2273, 4294901760
    %2275 = vmatmul.mubr.f32.gmra.mrb[0].mxu0 %v2274
    %v2276 = vpop.f32.mrb[0].mxu0
    %v2277 = vadd.f32 %v1978, %v2276
    %v2278 = vpop.f32.mrb[0].mxu0
    %v2279 = vadd.f32 %v1980, %v2278
    %v2280 = vand.u32 %v820, 4294901760
    %v2281 = vsub.f32 %v820, %v2280
    %v2282 = vand.u32 %v2281, 4294901760
    %2283 = vmatprep.mubr.f32.mxu0 %v2282
    %v2284 = vand.u32 %v819, 4294901760
    %v2285 = vsub.f32 %v819, %v2284
    %v2286 = vand.u32 %v2285, 4294901760
    %2287 = vmatmul.mubr.f32.gmra.mrb[0].mxu0 %v2286
    %v2288 = vpop.f32.mrb[0].mxu0
    %v2289 = vadd.f32 %v1988, %v2288
    %v2290 = vpop.f32.mrb[0].mxu0
    %v2291 = vadd.f32 %v1990, %v2290
    %v2292 = vand.u32 %v822, 4294901760
    %v2293 = vsub.f32 %v822, %v2292
    %v2294 = vand.u32 %v2293, 4294901760
    %2295 = vmatprep.mubr.f32.mxu0 %v2294
    %v2296 = vand.u32 %v821, 4294901760
    %v2297 = vsub.f32 %v821, %v2296
    %v2298 = vand.u32 %v2297, 4294901760
    %2299 = vmatmul.mubr.f32.gmra.mrb[0].mxu0 %v2298
    %v2300 = vpop.f32.mrb[0].mxu0
    %v2301 = vadd.f32 %v1998, %v2300
    %v2302 = vpop.f32.mrb[0].mxu0
    %v2303 = vadd.f32 %v2000, %v2302
    %v2304 = vand.u32 %v824, 4294901760
    %v2305 = vsub.f32 %v824, %v2304
    %v2306 = vand.u32 %v2305, 4294901760
    %2307 = vmatprep.mubr.f32.mxu0 %v2306
    %v2308 = vand.u32 %v823, 4294901760
    %v2309 = vsub.f32 %v823, %v2308
    %v2310 = vand.u32 %v2309, 4294901760
    %2311 = vmatmul.mubr.f32.gmra.mrb[0].mxu0 %v2310
    %v2312 = vpop.f32.mrb[0].mxu0
    %v2313 = vadd.f32 %v2008, %v2312
    %v2314 = vpop.f32.mrb[0].mxu0
    %v2315 = vadd.f32 %v2010, %v2314
    %v2316 = vand.u32 %v826, 4294901760
    %v2317 = vsub.f32 %v826, %v2316
    %v2318 = vand.u32 %v2317, 4294901760
    %2319 = vmatprep.mubr.f32.mxu0 %v2318
    %v2320 = vand.u32 %v825, 4294901760
    %v2321 = vsub.f32 %v825, %v2320
    %v2322 = vand.u32 %v2321, 4294901760
    %2323 = vmatmul.mubr.f32.gmra.mrb[0].mxu0 %v2322
    %v2324 = vpop.f32.mrb[0].mxu0
    %v2325 = vadd.f32 %v2018, %v2324
    %v2326 = vpop.f32.mrb[0].mxu0
    %v2327 = vadd.f32 %v2020, %v2326
    %v2328 = vand.u32 %v828, 4294901760
    %v2329 = vsub.f32 %v828, %v2328
    %v2330 = vand.u32 %v2329, 4294901760
    %2331 = vmatprep.mubr.f32.mxu0 %v2330
    %v2332 = vand.u32 %v827, 4294901760
    %v2333 = vsub.f32 %v827, %v2332
    %v2334 = vand.u32 %v2333, 4294901760
    %2335 = vmatmul.mubr.f32.gmra.mrb[0].mxu0 %v2334
    %v2336 = vpop.f32.mrb[0].mxu0
    %v2337 = vadd.f32 %v2028, %v2336
    %v2338 = vpop.f32.mrb[0].mxu0
    %v2339 = vadd.f32 %v2030, %v2338
    %v2340 = vand.u32 %v830, 4294901760
    %v2341 = vsub.f32 %v830, %v2340
    %v2342 = vand.u32 %v2341, 4294901760
    %2343 = vmatprep.mubr.f32.mxu0 %v2342
    %v2344 = vand.u32 %v829, 4294901760
    %v2345 = vsub.f32 %v829, %v2344
    %v2346 = vand.u32 %v2345, 4294901760
    %2347 = vmatmul.mubr.f32.gmra.mrb[0].mxu0 %v2346
    %v2348 = vpop.f32.mrb[0].mxu0
    %v2349 = vadd.f32 %v2038, %v2348
    %v2350 = vpop.f32.mrb[0].mxu0
    %v2351 = vadd.f32 %v2040, %v2350
    %v2352 = vand.u32 %v832, 4294901760
    %v2353 = vsub.f32 %v832, %v2352
    %v2354 = vand.u32 %v2353, 4294901760
    %2355 = vmatprep.mubr.f32.mxu0 %v2354
    %v2356 = vand.u32 %v831, 4294901760
    %v2357 = vsub.f32 %v831, %v2356
    %v2358 = vand.u32 %v2357, 4294901760
    %2359 = vmatmul.mubr.f32.gmra.mrb[0].mxu0 %v2358
    %v2360 = vpop.f32.mrb[0].mxu0
    %v2361 = vadd.f32 %v2048, %v2360
    %v2362 = vpop.f32.mrb[0].mxu0
    %v2363 = vadd.f32 %v2050, %v2362
    %v2364 = vand.u32 %v834, 4294901760
    %v2365 = vsub.f32 %v834, %v2364
    %v2366 = vand.u32 %v2365, 4294901760
    %2367 = vmatprep.mubr.f32.mxu0 %v2366
    %v2368 = vand.u32 %v833, 4294901760
    %v2369 = vsub.f32 %v833, %v2368
    %v2370 = vand.u32 %v2369, 4294901760
    %2371 = vmatmul.mubr.f32.gmra.mrb[0].mxu0 %v2370
    %v2372 = vpop.f32.mrb[0].mxu0
    %v2373 = vadd.f32 %v2058, %v2372
    %v2374 = vpop.f32.mrb[0].mxu0
    %v2375 = vadd.f32 %v2060, %v2374
    %v2376 = vand.u32 %v836, 4294901760
    %v2377 = vsub.f32 %v836, %v2376
    %v2378 = vand.u32 %v2377, 4294901760
    %2379 = vmatprep.mubr.f32.mxu0 %v2378
    %v2380 = vand.u32 %v835, 4294901760
    %v2381 = vsub.f32 %v835, %v2380
    %v2382 = vand.u32 %v2381, 4294901760
    %2383 = vmatmul.mubr.f32.gmra.mrb[0].mxu0 %v2382
    %v2384 = vpop.f32.mrb[0].mxu0
    %v2385 = vadd.f32 %v2068, %v2384
    %v2386 = vpop.f32.mrb[0].mxu0
    %v2387 = vadd.f32 %v2070, %v2386
    %v2388 = vand.u32 %v838, 4294901760
    %v2389 = vsub.f32 %v838, %v2388
    %v2390 = vand.u32 %v2389, 4294901760
    %2391 = vmatprep.mubr.f32.mxu0 %v2390
    %v2392 = vand.u32 %v837, 4294901760
    %v2393 = vsub.f32 %v837, %v2392
    %v2394 = vand.u32 %v2393, 4294901760
    %2395 = vmatmul.mubr.f32.gmra.mrb[0].mxu0 %v2394
    %v2396 = vpop.f32.mrb[0].mxu0
    %v2397 = vadd.f32 %v2078, %v2396
    %v2398 = vpop.f32.mrb[0].mxu0
    %v2399 = vadd.f32 %v2080, %v2398
    %v2400 = vand.u32 %v840, 4294901760
    %v2401 = vsub.f32 %v840, %v2400
    %v2402 = vand.u32 %v2401, 4294901760
    %2403 = vmatprep.mubr.f32.mxu0 %v2402
    %v2404 = vand.u32 %v839, 4294901760
    %v2405 = vsub.f32 %v839, %v2404
    %v2406 = vand.u32 %v2405, 4294901760
    %2407 = vmatmul.mubr.f32.gmra.mrb[0].mxu0 %v2406
    %v2408 = vpop.f32.mrb[0].mxu0
    %v2409 = vadd.f32 %v2088, %v2408
    %v2410 = vpop.f32.mrb[0].mxu0
    %v2411 = vadd.f32 %v2090, %v2410
    %2412 = vdwg.mxu0
    %v2413 = vand.u32 %v746, 4294901760
    %v2414 = vsub.f32 %v746, %v2413
    %v2415 = vand.u32 %v2414, 4294901760
    %2416 = vmatprep.subr.mxu0 %v2415
    %v2417 = vand.u32 %v745, 4294901760
    %v2418 = vsub.f32 %v745, %v2417
    %v2419 = vand.u32 %v2418, 4294901760
    %2420 = vmatpush1.msra.mxu0 %v2419
    %v2421 = vand.u32 %v748, 4294901760
    %v2422 = vsub.f32 %v748, %v2421
    %v2423 = vand.u32 %v2422, 4294901760
    %2424 = vmatprep.subr.mxu0 %v2423
    %v2425 = vand.u32 %v747, 4294901760
    %v2426 = vsub.f32 %v747, %v2425
    %v2427 = vand.u32 %v2426, 4294901760
    %2428 = vmatpush1.msra.mxu0 %v2427
    %v2429 = vand.u32 %v750, 4294901760
    %v2430 = vsub.f32 %v750, %v2429
    %v2431 = vand.u32 %v2430, 4294901760
    %2432 = vmatprep.subr.mxu0 %v2431
    %v2433 = vand.u32 %v749, 4294901760
    %v2434 = vsub.f32 %v749, %v2433
    %v2435 = vand.u32 %v2434, 4294901760
    %2436 = vmatpush1.msra.mxu0 %v2435
    %v2437 = vand.u32 %v752, 4294901760
    %v2438 = vsub.f32 %v752, %v2437
    %v2439 = vand.u32 %v2438, 4294901760
    %2440 = vmatprep.subr.mxu0 %v2439
    %v2441 = vand.u32 %v751, 4294901760
    %v2442 = vsub.f32 %v751, %v2441
    %v2443 = vand.u32 %v2442, 4294901760
    %2444 = vmatpush1.msra.mxu0 %v2443
    %v2445 = vand.u32 %v754, 4294901760
    %v2446 = vsub.f32 %v754, %v2445
    %v2447 = vand.u32 %v2446, 4294901760
    %2448 = vmatprep.subr.mxu0 %v2447
    %v2449 = vand.u32 %v753, 4294901760
    %v2450 = vsub.f32 %v753, %v2449
    %v2451 = vand.u32 %v2450, 4294901760
    %2452 = vmatpush1.msra.mxu0 %v2451
    %v2453 = vand.u32 %v756, 4294901760
    %v2454 = vsub.f32 %v756, %v2453
    %v2455 = vand.u32 %v2454, 4294901760
    %2456 = vmatprep.subr.mxu0 %v2455
    %v2457 = vand.u32 %v755, 4294901760
    %v2458 = vsub.f32 %v755, %v2457
    %v2459 = vand.u32 %v2458, 4294901760
    %2460 = vmatpush1.msra.mxu0 %v2459
    %v2461 = vand.u32 %v758, 4294901760
    %v2462 = vsub.f32 %v758, %v2461
    %v2463 = vand.u32 %v2462, 4294901760
    %2464 = vmatprep.subr.mxu0 %v2463
    %v2465 = vand.u32 %v757, 4294901760
    %v2466 = vsub.f32 %v757, %v2465
    %v2467 = vand.u32 %v2466, 4294901760
    %2468 = vmatpush1.msra.mxu0 %v2467
    %v2469 = vand.u32 %v760, 4294901760
    %v2470 = vsub.f32 %v760, %v2469
    %v2471 = vand.u32 %v2470, 4294901760
    %2472 = vmatprep.subr.mxu0 %v2471
    %v2473 = vand.u32 %v759, 4294901760
    %v2474 = vsub.f32 %v759, %v2473
    %v2475 = vand.u32 %v2474, 4294901760
    %2476 = vmatpush1.msra.mxu0 %v2475
    %v2477 = vand.u32 %v762, 4294901760
    %v2478 = vsub.f32 %v762, %v2477
    %v2479 = vand.u32 %v2478, 4294901760
    %2480 = vmatprep.subr.mxu0 %v2479
    %v2481 = vand.u32 %v761, 4294901760
    %v2482 = vsub.f32 %v761, %v2481
    %v2483 = vand.u32 %v2482, 4294901760
    %2484 = vmatpush1.msra.mxu0 %v2483
    %v2485 = vand.u32 %v764, 4294901760
    %v2486 = vsub.f32 %v764, %v2485
    %v2487 = vand.u32 %v2486, 4294901760
    %2488 = vmatprep.subr.mxu0 %v2487
    %v2489 = vand.u32 %v763, 4294901760
    %v2490 = vsub.f32 %v763, %v2489
    %v2491 = vand.u32 %v2490, 4294901760
    %2492 = vmatpush1.msra.mxu0 %v2491
    %v2493 = vand.u32 %v766, 4294901760
    %v2494 = vsub.f32 %v766, %v2493
    %v2495 = vand.u32 %v2494, 4294901760
    %2496 = vmatprep.subr.mxu0 %v2495
    %v2497 = vand.u32 %v765, 4294901760
    %v2498 = vsub.f32 %v765, %v2497
    %v2499 = vand.u32 %v2498, 4294901760
    %2500 = vmatpush1.msra.mxu0 %v2499
    %v2501 = vand.u32 %v768, 4294901760
    %v2502 = vsub.f32 %v768, %v2501
    %v2503 = vand.u32 %v2502, 4294901760
    %2504 = vmatprep.subr.mxu0 %v2503
    %v2505 = vand.u32 %v767, 4294901760
    %v2506 = vsub.f32 %v767, %v2505
    %v2507 = vand.u32 %v2506, 4294901760
    %2508 = vmatpush1.msra.mxu0 %v2507
    %v2509 = vand.u32 %v770, 4294901760
    %v2510 = vsub.f32 %v770, %v2509
    %v2511 = vand.u32 %v2510, 4294901760
    %2512 = vmatprep.subr.mxu0 %v2511
    %v2513 = vand.u32 %v769, 4294901760
    %v2514 = vsub.f32 %v769, %v2513
    %v2515 = vand.u32 %v2514, 4294901760
    %2516 = vmatpush1.msra.mxu0 %v2515
    %v2517 = vand.u32 %v772, 4294901760
    %v2518 = vsub.f32 %v772, %v2517
    %v2519 = vand.u32 %v2518, 4294901760
    %2520 = vmatprep.subr.mxu0 %v2519
    %v2521 = vand.u32 %v771, 4294901760
    %v2522 = vsub.f32 %v771, %v2521
    %v2523 = vand.u32 %v2522, 4294901760
    %2524 = vmatpush1.msra.mxu0 %v2523
    %v2525 = vand.u32 %v774, 4294901760
    %v2526 = vsub.f32 %v774, %v2525
    %v2527 = vand.u32 %v2526, 4294901760
    %2528 = vmatprep.subr.mxu0 %v2527
    %v2529 = vand.u32 %v773, 4294901760
    %v2530 = vsub.f32 %v773, %v2529
    %v2531 = vand.u32 %v2530, 4294901760
    %2532 = vmatpush1.msra.mxu0 %v2531
    %v2533 = vand.u32 %v776, 4294901760
    %v2534 = vsub.f32 %v776, %v2533
    %v2535 = vand.u32 %v2534, 4294901760
    %2536 = vmatprep.subr.mxu0 %v2535
    %v2537 = vand.u32 %v775, 4294901760
    %v2538 = vsub.f32 %v775, %v2537
    %v2539 = vand.u32 %v2538, 4294901760
    %2540 = vmatpush1.msra.mxu0 %v2539
    %v2541 = vand.u32 %v778, 4294901760
    %v2542 = vsub.f32 %v778, %v2541
    %v2543 = vand.u32 %v2542, 4294901760
    %2544 = vmatprep.subr.mxu0 %v2543
    %v2545 = vand.u32 %v777, 4294901760
    %v2546 = vsub.f32 %v777, %v2545
    %v2547 = vand.u32 %v2546, 4294901760
    %2548 = vmatpush1.msra.mxu0 %v2547
    %v2549 = vand.u32 %v780, 4294901760
    %v2550 = vsub.f32 %v780, %v2549
    %v2551 = vand.u32 %v2550, 4294901760
    %2552 = vmatprep.subr.mxu0 %v2551
    %v2553 = vand.u32 %v779, 4294901760
    %v2554 = vsub.f32 %v779, %v2553
    %v2555 = vand.u32 %v2554, 4294901760
    %2556 = vmatpush1.msra.mxu0 %v2555
    %v2557 = vand.u32 %v782, 4294901760
    %v2558 = vsub.f32 %v782, %v2557
    %v2559 = vand.u32 %v2558, 4294901760
    %2560 = vmatprep.subr.mxu0 %v2559
    %v2561 = vand.u32 %v781, 4294901760
    %v2562 = vsub.f32 %v781, %v2561
    %v2563 = vand.u32 %v2562, 4294901760
    %2564 = vmatpush1.msra.mxu0 %v2563
    %v2565 = vand.u32 %v784, 4294901760
    %v2566 = vsub.f32 %v784, %v2565
    %v2567 = vand.u32 %v2566, 4294901760
    %2568 = vmatprep.subr.mxu0 %v2567
    %v2569 = vand.u32 %v783, 4294901760
    %v2570 = vsub.f32 %v783, %v2569
    %v2571 = vand.u32 %v2570, 4294901760
    %2572 = vmatpush1.msra.mxu0 %v2571
    %v2573 = vand.u32 %v786, 4294901760
    %v2574 = vsub.f32 %v786, %v2573
    %v2575 = vand.u32 %v2574, 4294901760
    %2576 = vmatprep.subr.mxu0 %v2575
    %v2577 = vand.u32 %v785, 4294901760
    %v2578 = vsub.f32 %v785, %v2577
    %v2579 = vand.u32 %v2578, 4294901760
    %2580 = vmatpush1.msra.mxu0 %v2579
    %v2581 = vand.u32 %v788, 4294901760
    %v2582 = vsub.f32 %v788, %v2581
    %v2583 = vand.u32 %v2582, 4294901760
    %2584 = vmatprep.subr.mxu0 %v2583
    %v2585 = vand.u32 %v787, 4294901760
    %v2586 = vsub.f32 %v787, %v2585
    %v2587 = vand.u32 %v2586, 4294901760
    %2588 = vmatpush1.msra.mxu0 %v2587
    %v2589 = vand.u32 %v790, 4294901760
    %v2590 = vsub.f32 %v790, %v2589
    %v2591 = vand.u32 %v2590, 4294901760
    %2592 = vmatprep.subr.mxu0 %v2591
    %v2593 = vand.u32 %v789, 4294901760
    %v2594 = vsub.f32 %v789, %v2593
    %v2595 = vand.u32 %v2594, 4294901760
    %2596 = vmatpush1.msra.mxu0 %v2595
    %v2597 = vand.u32 %v792, 4294901760
    %v2598 = vsub.f32 %v792, %v2597
    %v2599 = vand.u32 %v2598, 4294901760
    %2600 = vmatprep.subr.mxu0 %v2599
    %v2601 = vand.u32 %v791, 4294901760
    %v2602 = vsub.f32 %v791, %v2601
    %v2603 = vand.u32 %v2602, 4294901760
    %2604 = vmatpush1.msra.mxu0 %v2603
    %v2605 = vand.u32 %v794, 4294901760
    %v2606 = vsub.f32 %v794, %v2605
    %v2607 = vand.u32 %v2606, 4294901760
    %2608 = vmatprep.subr.mxu0 %v2607
    %v2609 = vand.u32 %v793, 4294901760
    %v2610 = vsub.f32 %v793, %v2609
    %v2611 = vand.u32 %v2610, 4294901760
    %2612 = vmatpush1.msra.mxu0 %v2611
    %v2613 = vand.u32 %v796, 4294901760
    %v2614 = vsub.f32 %v796, %v2613
    %v2615 = vand.u32 %v2614, 4294901760
    %2616 = vmatprep.subr.mxu0 %v2615
    %v2617 = vand.u32 %v795, 4294901760
    %v2618 = vsub.f32 %v795, %v2617
    %v2619 = vand.u32 %v2618, 4294901760
    %2620 = vmatpush1.msra.mxu0 %v2619
    %v2621 = vand.u32 %v798, 4294901760
    %v2622 = vsub.f32 %v798, %v2621
    %v2623 = vand.u32 %v2622, 4294901760
    %2624 = vmatprep.subr.mxu0 %v2623
    %v2625 = vand.u32 %v797, 4294901760
    %v2626 = vsub.f32 %v797, %v2625
    %v2627 = vand.u32 %v2626, 4294901760
    %2628 = vmatpush1.msra.mxu0 %v2627
    %v2629 = vand.u32 %v800, 4294901760
    %v2630 = vsub.f32 %v800, %v2629
    %v2631 = vand.u32 %v2630, 4294901760
    %2632 = vmatprep.subr.mxu0 %v2631
    %v2633 = vand.u32 %v799, 4294901760
    %v2634 = vsub.f32 %v799, %v2633
    %v2635 = vand.u32 %v2634, 4294901760
    %2636 = vmatpush1.msra.mxu0 %v2635
    %v2637 = vand.u32 %v802, 4294901760
    %v2638 = vsub.f32 %v802, %v2637
    %v2639 = vand.u32 %v2638, 4294901760
    %2640 = vmatprep.subr.mxu0 %v2639
    %v2641 = vand.u32 %v801, 4294901760
    %v2642 = vsub.f32 %v801, %v2641
    %v2643 = vand.u32 %v2642, 4294901760
    %2644 = vmatpush1.msra.mxu0 %v2643
    %v2645 = vand.u32 %v804, 4294901760
    %v2646 = vsub.f32 %v804, %v2645
    %v2647 = vand.u32 %v2646, 4294901760
    %2648 = vmatprep.subr.mxu0 %v2647
    %v2649 = vand.u32 %v803, 4294901760
    %v2650 = vsub.f32 %v803, %v2649
    %v2651 = vand.u32 %v2650, 4294901760
    %2652 = vmatpush1.msra.mxu0 %v2651
    %v2653 = vand.u32 %v806, 4294901760
    %v2654 = vsub.f32 %v806, %v2653
    %v2655 = vand.u32 %v2654, 4294901760
    %2656 = vmatprep.subr.mxu0 %v2655
    %v2657 = vand.u32 %v805, 4294901760
    %v2658 = vsub.f32 %v805, %v2657
    %v2659 = vand.u32 %v2658, 4294901760
    %2660 = vmatpush1.msra.mxu0 %v2659
    %v2661 = vand.u32 %v808, 4294901760
    %v2662 = vsub.f32 %v808, %v2661
    %v2663 = vand.u32 %v2662, 4294901760
    %2664 = vmatprep.subr.mxu0 %v2663
    %v2665 = vand.u32 %v807, 4294901760
    %v2666 = vsub.f32 %v807, %v2665
    %v2667 = vand.u32 %v2666, 4294901760
    %2668 = vmatpush1.msra.mxu0 %v2667
    %v2669 = vand.u32 %v810, 4294901760
    %2670 = vmatprep.mubr.f32.mxu0 %v2669
    %v2671 = vand.u32 %v809, 4294901760
    %2672 = vmatmul.mubr.f32.gmra.mrb[0].mxu0 %v2671
    %v2673 = vpop.f32.mrb[0].mxu0
    %v2674 = vadd.f32 %v2229, %v2673
    %v2675 = vpop.f32.mrb[0].mxu0
    %v2676 = vadd.f32 %v2231, %v2675
    %v2677 = vand.u32 %v812, 4294901760
    %2678 = vmatprep.mubr.f32.mxu0 %v2677
    %v2679 = vand.u32 %v811, 4294901760
    %2680 = vmatmul.mubr.f32.gmra.mrb[0].mxu0 %v2679
    %v2681 = vpop.f32.mrb[0].mxu0
    %v2682 = vadd.f32 %v2241, %v2681
    %v2683 = vpop.f32.mrb[0].mxu0
    %v2684 = vadd.f32 %v2243, %v2683
    %v2685 = vand.u32 %v814, 4294901760
    %2686 = vmatprep.mubr.f32.mxu0 %v2685
    %v2687 = vand.u32 %v813, 4294901760
    %2688 = vmatmul.mubr.f32.gmra.mrb[0].mxu0 %v2687
    %v2689 = vpop.f32.mrb[0].mxu0
    %v2690 = vadd.f32 %v2253, %v2689
    %v2691 = vpop.f32.mrb[0].mxu0
    %v2692 = vadd.f32 %v2255, %v2691
    %v2693 = vand.u32 %v816, 4294901760
    %2694 = vmatprep.mubr.f32.mxu0 %v2693
    %v2695 = vand.u32 %v815, 4294901760
    %2696 = vmatmul.mubr.f32.gmra.mrb[0].mxu0 %v2695
    %v2697 = vpop.f32.mrb[0].mxu0
    %v2698 = vadd.f32 %v2265, %v2697
    %v2699 = vpop.f32.mrb[0].mxu0
    %v2700 = vadd.f32 %v2267, %v2699
    %v2701 = vand.u32 %v818, 4294901760
    %2702 = vmatprep.mubr.f32.mxu0 %v2701
    %v2703 = vand.u32 %v817, 4294901760
    %2704 = vmatmul.mubr.f32.gmra.mrb[0].mxu0 %v2703
    %v2705 = vpop.f32.mrb[0].mxu0
    %v2706 = vadd.f32 %v2277, %v2705
    %v2707 = vpop.f32.mrb[0].mxu0
    %v2708 = vadd.f32 %v2279, %v2707
    %v2709 = vand.u32 %v820, 4294901760
    %2710 = vmatprep.mubr.f32.mxu0 %v2709
    %v2711 = vand.u32 %v819, 4294901760
    %2712 = vmatmul.mubr.f32.gmra.mrb[0].mxu0 %v2711
    %v2713 = vpop.f32.mrb[0].mxu0
    %v2714 = vadd.f32 %v2289, %v2713
    %v2715 = vpop.f32.mrb[0].mxu0
    %v2716 = vadd.f32 %v2291, %v2715
    %v2717 = vand.u32 %v822, 4294901760
    %2718 = vmatprep.mubr.f32.mxu0 %v2717
    %v2719 = vand.u32 %v821, 4294901760
    %2720 = vmatmul.mubr.f32.gmra.mrb[0].mxu0 %v2719
    %v2721 = vpop.f32.mrb[0].mxu0
    %v2722 = vadd.f32 %v2301, %v2721
    %v2723 = vpop.f32.mrb[0].mxu0
    %v2724 = vadd.f32 %v2303, %v2723
    %v2725 = vand.u32 %v824, 4294901760
    %2726 = vmatprep.mubr.f32.mxu0 %v2725
    %v2727 = vand.u32 %v823, 4294901760
    %2728 = vmatmul.mubr.f32.gmra.mrb[0].mxu0 %v2727
    %v2729 = vpop.f32.mrb[0].mxu0
    %v2730 = vadd.f32 %v2313, %v2729
    %v2731 = vpop.f32.mrb[0].mxu0
    %v2732 = vadd.f32 %v2315, %v2731
    %v2733 = vand.u32 %v826, 4294901760
    %2734 = vmatprep.mubr.f32.mxu0 %v2733
    %v2735 = vand.u32 %v825, 4294901760
    %2736 = vmatmul.mubr.f32.gmra.mrb[0].mxu0 %v2735
    %v2737 = vpop.f32.mrb[0].mxu0
    %v2738 = vadd.f32 %v2325, %v2737
    %v2739 = vpop.f32.mrb[0].mxu0
    %v2740 = vadd.f32 %v2327, %v2739
    %v2741 = vand.u32 %v828, 4294901760
    %2742 = vmatprep.mubr.f32.mxu0 %v2741
    %v2743 = vand.u32 %v827, 4294901760
    %2744 = vmatmul.mubr.f32.gmra.mrb[0].mxu0 %v2743
    %v2745 = vpop.f32.mrb[0].mxu0
    %v2746 = vadd.f32 %v2337, %v2745
    %v2747 = vpop.f32.mrb[0].mxu0
    %v2748 = vadd.f32 %v2339, %v2747
    %v2749 = vand.u32 %v830, 4294901760
    %2750 = vmatprep.mubr.f32.mxu0 %v2749
    %v2751 = vand.u32 %v829, 4294901760
    %2752 = vmatmul.mubr.f32.gmra.mrb[0].mxu0 %v2751
    %v2753 = vpop.f32.mrb[0].mxu0
    %v2754 = vadd.f32 %v2349, %v2753
    %v2755 = vpop.f32.mrb[0].mxu0
    %v2756 = vadd.f32 %v2351, %v2755
    %v2757 = vand.u32 %v832, 4294901760
    %2758 = vmatprep.mubr.f32.mxu0 %v2757
    %v2759 = vand.u32 %v831, 4294901760
    %2760 = vmatmul.mubr.f32.gmra.mrb[0].mxu0 %v2759
    %v2761 = vpop.f32.mrb[0].mxu0
    %v2762 = vadd.f32 %v2361, %v2761
    %v2763 = vpop.f32.mrb[0].mxu0
    %v2764 = vadd.f32 %v2363, %v2763
    %v2765 = vand.u32 %v834, 4294901760
    %2766 = vmatprep.mubr.f32.mxu0 %v2765
    %v2767 = vand.u32 %v833, 4294901760
    %2768 = vmatmul.mubr.f32.gmra.mrb[0].mxu0 %v2767
    %v2769 = vpop.f32.mrb[0].mxu0
    %v2770 = vadd.f32 %v2373, %v2769
    %v2771 = vpop.f32.mrb[0].mxu0
    %v2772 = vadd.f32 %v2375, %v2771
    %v2773 = vand.u32 %v836, 4294901760
    %2774 = vmatprep.mubr.f32.mxu0 %v2773
    %v2775 = vand.u32 %v835, 4294901760
    %2776 = vmatmul.mubr.f32.gmra.mrb[0].mxu0 %v2775
    %v2777 = vpop.f32.mrb[0].mxu0
    %v2778 = vadd.f32 %v2385, %v2777
    %v2779 = vpop.f32.mrb[0].mxu0
    %v2780 = vadd.f32 %v2387, %v2779
    %v2781 = vand.u32 %v838, 4294901760
    %2782 = vmatprep.mubr.f32.mxu0 %v2781
    %v2783 = vand.u32 %v837, 4294901760
    %2784 = vmatmul.mubr.f32.gmra.mrb[0].mxu0 %v2783
    %v2785 = vpop.f32.mrb[0].mxu0
    %v2786 = vadd.f32 %v2397, %v2785
    %v2787 = vpop.f32.mrb[0].mxu0
    %v2788 = vadd.f32 %v2399, %v2787
    %v2789 = vand.u32 %v840, 4294901760
    %2790 = vmatprep.mubr.f32.mxu0 %v2789
    %v2791 = vand.u32 %v839, 4294901760
    %2792 = vmatmul.mubr.f32.gmra.mrb[0].mxu0 %v2791
    %v2793 = vpop.f32.mrb[0].mxu0
    %v2794 = vadd.f32 %v2409, %v2793
    %v2795 = vpop.f32.mrb[0].mxu0
    %v2796 = vadd.f32 %v2411, %v2795
    %2797 = vdwg.mxu0
    %v2798 = vand.u32 %v746, 4294901760
    %2799 = vmatprep.subr.mxu0 %v2798
    %v2800 = vand.u32 %v745, 4294901760
    %2801 = vmatpush1.msra.mxu0 %v2800
    %v2802 = vand.u32 %v748, 4294901760
    %2803 = vmatprep.subr.mxu0 %v2802
    %v2804 = vand.u32 %v747, 4294901760
    %2805 = vmatpush1.msra.mxu0 %v2804
    %v2806 = vand.u32 %v750, 4294901760
    %2807 = vmatprep.subr.mxu0 %v2806
    %v2808 = vand.u32 %v749, 4294901760
    %2809 = vmatpush1.msra.mxu0 %v2808
    %v2810 = vand.u32 %v752, 4294901760
    %2811 = vmatprep.subr.mxu0 %v2810
    %v2812 = vand.u32 %v751, 4294901760
    %2813 = vmatpush1.msra.mxu0 %v2812
    %v2814 = vand.u32 %v754, 4294901760
    %2815 = vmatprep.subr.mxu0 %v2814
    %v2816 = vand.u32 %v753, 4294901760
    %2817 = vmatpush1.msra.mxu0 %v2816
    %v2818 = vand.u32 %v756, 4294901760
    %2819 = vmatprep.subr.mxu0 %v2818
    %v2820 = vand.u32 %v755, 4294901760
    %2821 = vmatpush1.msra.mxu0 %v2820
    %v2822 = vand.u32 %v758, 4294901760
    %2823 = vmatprep.subr.mxu0 %v2822
    %v2824 = vand.u32 %v757, 4294901760
    %2825 = vmatpush1.msra.mxu0 %v2824
    %v2826 = vand.u32 %v760, 4294901760
    %2827 = vmatprep.subr.mxu0 %v2826
    %v2828 = vand.u32 %v759, 4294901760
    %2829 = vmatpush1.msra.mxu0 %v2828
    %v2830 = vand.u32 %v762, 4294901760
    %2831 = vmatprep.subr.mxu0 %v2830
    %v2832 = vand.u32 %v761, 4294901760
    %2833 = vmatpush1.msra.mxu0 %v2832
    %v2834 = vand.u32 %v764, 4294901760
    %2835 = vmatprep.subr.mxu0 %v2834
    %v2836 = vand.u32 %v763, 4294901760
    %2837 = vmatpush1.msra.mxu0 %v2836
    %v2838 = vand.u32 %v766, 4294901760
    %2839 = vmatprep.subr.mxu0 %v2838
    %v2840 = vand.u32 %v765, 4294901760
    %2841 = vmatpush1.msra.mxu0 %v2840
    %v2842 = vand.u32 %v768, 4294901760
    %2843 = vmatprep.subr.mxu0 %v2842
    %v2844 = vand.u32 %v767, 4294901760
    %2845 = vmatpush1.msra.mxu0 %v2844
    %v2846 = vand.u32 %v770, 4294901760
    %2847 = vmatprep.subr.mxu0 %v2846
    %v2848 = vand.u32 %v769, 4294901760
    %2849 = vmatpush1.msra.mxu0 %v2848
    %v2850 = vand.u32 %v772, 4294901760
    %2851 = vmatprep.subr.mxu0 %v2850
    %v2852 = vand.u32 %v771, 4294901760
    %2853 = vmatpush1.msra.mxu0 %v2852
    %v2854 = vand.u32 %v774, 4294901760
    %2855 = vmatprep.subr.mxu0 %v2854
    %v2856 = vand.u32 %v773, 4294901760
    %2857 = vmatpush1.msra.mxu0 %v2856
    %v2858 = vand.u32 %v776, 4294901760
    %2859 = vmatprep.subr.mxu0 %v2858
    %v2860 = vand.u32 %v775, 4294901760
    %2861 = vmatpush1.msra.mxu0 %v2860
    %v2862 = vand.u32 %v778, 4294901760
    %2863 = vmatprep.subr.mxu0 %v2862
    %v2864 = vand.u32 %v777, 4294901760
    %2865 = vmatpush1.msra.mxu0 %v2864
    %v2866 = vand.u32 %v780, 4294901760
    %2867 = vmatprep.subr.mxu0 %v2866
    %v2868 = vand.u32 %v779, 4294901760
    %2869 = vmatpush1.msra.mxu0 %v2868
    %v2870 = vand.u32 %v782, 4294901760
    %2871 = vmatprep.subr.mxu0 %v2870
    %v2872 = vand.u32 %v781, 4294901760
    %2873 = vmatpush1.msra.mxu0 %v2872
    %v2874 = vand.u32 %v784, 4294901760
    %2875 = vmatprep.subr.mxu0 %v2874
    %v2876 = vand.u32 %v783, 4294901760
    %2877 = vmatpush1.msra.mxu0 %v2876
    %v2878 = vand.u32 %v786, 4294901760
    %2879 = vmatprep.subr.mxu0 %v2878
    %v2880 = vand.u32 %v785, 4294901760
    %2881 = vmatpush1.msra.mxu0 %v2880
    %v2882 = vand.u32 %v788, 4294901760
    %2883 = vmatprep.subr.mxu0 %v2882
    %v2884 = vand.u32 %v787, 4294901760
    %2885 = vmatpush1.msra.mxu0 %v2884
    %v2886 = vand.u32 %v790, 4294901760
    %2887 = vmatprep.subr.mxu0 %v2886
    %v2888 = vand.u32 %v789, 4294901760
    %2889 = vmatpush1.msra.mxu0 %v2888
    %v2890 = vand.u32 %v792, 4294901760
    %2891 = vmatprep.subr.mxu0 %v2890
    %v2892 = vand.u32 %v791, 4294901760
    %2893 = vmatpush1.msra.mxu0 %v2892
    %v2894 = vand.u32 %v794, 4294901760
    %2895 = vmatprep.subr.mxu0 %v2894
    %v2896 = vand.u32 %v793, 4294901760
    %2897 = vmatpush1.msra.mxu0 %v2896
    %v2898 = vand.u32 %v796, 4294901760
    %2899 = vmatprep.subr.mxu0 %v2898
    %v2900 = vand.u32 %v795, 4294901760
    %2901 = vmatpush1.msra.mxu0 %v2900
    %v2902 = vand.u32 %v798, 4294901760
    %2903 = vmatprep.subr.mxu0 %v2902
    %v2904 = vand.u32 %v797, 4294901760
    %2905 = vmatpush1.msra.mxu0 %v2904
    %v2906 = vand.u32 %v800, 4294901760
    %2907 = vmatprep.subr.mxu0 %v2906
    %v2908 = vand.u32 %v799, 4294901760
    %2909 = vmatpush1.msra.mxu0 %v2908
    %v2910 = vand.u32 %v802, 4294901760
    %2911 = vmatprep.subr.mxu0 %v2910
    %v2912 = vand.u32 %v801, 4294901760
    %2913 = vmatpush1.msra.mxu0 %v2912
    %v2914 = vand.u32 %v804, 4294901760
    %2915 = vmatprep.subr.mxu0 %v2914
    %v2916 = vand.u32 %v803, 4294901760
    %2917 = vmatpush1.msra.mxu0 %v2916
    %v2918 = vand.u32 %v806, 4294901760
    %2919 = vmatprep.subr.mxu0 %v2918
    %v2920 = vand.u32 %v805, 4294901760
    %2921 = vmatpush1.msra.mxu0 %v2920
    %v2922 = vand.u32 %v808, 4294901760
    %2923 = vmatprep.subr.mxu0 %v2922
    %v2924 = vand.u32 %v807, 4294901760
    %2925 = vmatpush1.msra.mxu0 %v2924
    %v2926 = vand.u32 %v810, 4294901760
    %2927 = vmatprep.mubr.f32.mxu0 %v2926
    %v2928 = vand.u32 %v809, 4294901760
    %2929 = vmatmul.mubr.f32.gmra.mrb[0].mxu0 %v2928
    %v2930 = vpop.f32.mrb[0].mxu0
    %v2931 = vadd.f32 %v2674, %v2930
    %v2932 = vpop.f32.mrb[0].mxu0
    %v2933 = vadd.f32 %v2676, %v2932
    %v2934 = vand.u32 %v812, 4294901760
    %2935 = vmatprep.mubr.f32.mxu0 %v2934
    %v2936 = vand.u32 %v811, 4294901760
    %2937 = vmatmul.mubr.f32.gmra.mrb[0].mxu0 %v2936
    %v2938 = vpop.f32.mrb[0].mxu0
    %v2939 = vadd.f32 %v2682, %v2938
    %v2940 = vpop.f32.mrb[0].mxu0
    %v2941 = vadd.f32 %v2684, %v2940
    %v2942 = vand.u32 %v814, 4294901760
    %2943 = vmatprep.mubr.f32.mxu0 %v2942
    %v2944 = vand.u32 %v813, 4294901760
    %2945 = vmatmul.mubr.f32.gmra.mrb[0].mxu0 %v2944
    %v2946 = vpop.f32.mrb[0].mxu0
    %v2947 = vadd.f32 %v2690, %v2946
    %v2948 = vpop.f32.mrb[0].mxu0
    %v2949 = vadd.f32 %v2692, %v2948
    %v2950 = vand.u32 %v816, 4294901760
    %2951 = vmatprep.mubr.f32.mxu0 %v2950
    %v2952 = vand.u32 %v815, 4294901760
    %2953 = vmatmul.mubr.f32.gmra.mrb[0].mxu0 %v2952
    %v2954 = vpop.f32.mrb[0].mxu0
    %v2955 = vadd.f32 %v2698, %v2954
    %v2956 = vpop.f32.mrb[0].mxu0
    %v2957 = vadd.f32 %v2700, %v2956
    %v2958 = vand.u32 %v818, 4294901760
    %2959 = vmatprep.mubr.f32.mxu0 %v2958
    %v2960 = vand.u32 %v817, 4294901760
    %2961 = vmatmul.mubr.f32.gmra.mrb[0].mxu0 %v2960
    %v2962 = vpop.f32.mrb[0].mxu0
    %v2963 = vadd.f32 %v2706, %v2962
    %v2964 = vpop.f32.mrb[0].mxu0
    %v2965 = vadd.f32 %v2708, %v2964
    %v2966 = vand.u32 %v820, 4294901760
    %2967 = vmatprep.mubr.f32.mxu0 %v2966
    %v2968 = vand.u32 %v819, 4294901760
    %2969 = vmatmul.mubr.f32.gmra.mrb[0].mxu0 %v2968
    %v2970 = vpop.f32.mrb[0].mxu0
    %v2971 = vadd.f32 %v2714, %v2970
    %v2972 = vpop.f32.mrb[0].mxu0
    %v2973 = vadd.f32 %v2716, %v2972
    %v2974 = vand.u32 %v822, 4294901760
    %2975 = vmatprep.mubr.f32.mxu0 %v2974
    %v2976 = vand.u32 %v821, 4294901760
    %2977 = vmatmul.mubr.f32.gmra.mrb[0].mxu0 %v2976
    %v2978 = vpop.f32.mrb[0].mxu0
    %v2979 = vadd.f32 %v2722, %v2978
    %v2980 = vpop.f32.mrb[0].mxu0
    %v2981 = vadd.f32 %v2724, %v2980
    %v2982 = vand.u32 %v824, 4294901760
    %2983 = vmatprep.mubr.f32.mxu0 %v2982
    %v2984 = vand.u32 %v823, 4294901760
    %2985 = vmatmul.mubr.f32.gmra.mrb[0].mxu0 %v2984
    %v2986 = vpop.f32.mrb[0].mxu0
    %v2987 = vadd.f32 %v2730, %v2986
    %v2988 = vpop.f32.mrb[0].mxu0
    %v2989 = vadd.f32 %v2732, %v2988
    %v2990 = vand.u32 %v826, 4294901760
    %2991 = vmatprep.mubr.f32.mxu0 %v2990
    %v2992 = vand.u32 %v825, 4294901760
    %2993 = vmatmul.mubr.f32.gmra.mrb[0].mxu0 %v2992
    %v2994 = vpop.f32.mrb[0].mxu0
    %v2995 = vadd.f32 %v2738, %v2994
    %v2996 = vpop.f32.mrb[0].mxu0
    %v2997 = vadd.f32 %v2740, %v2996
    %v2998 = vand.u32 %v828, 4294901760
    %2999 = vmatprep.mubr.f32.mxu0 %v2998
    %v3000 = vand.u32 %v827, 4294901760
    %3001 = vmatmul.mubr.f32.gmra.mrb[0].mxu0 %v3000
    %v3002 = vpop.f32.mrb[0].mxu0
    %v3003 = vadd.f32 %v2746, %v3002
    %v3004 = vpop.f32.mrb[0].mxu0
    %v3005 = vadd.f32 %v2748, %v3004
    %v3006 = vand.u32 %v830, 4294901760
    %3007 = vmatprep.mubr.f32.mxu0 %v3006
    %v3008 = vand.u32 %v829, 4294901760
    %3009 = vmatmul.mubr.f32.gmra.mrb[0].mxu0 %v3008
    %v3010 = vpop.f32.mrb[0].mxu0
    %v3011 = vadd.f32 %v2754, %v3010
    %v3012 = vpop.f32.mrb[0].mxu0
    %v3013 = vadd.f32 %v2756, %v3012
    %v3014 = vand.u32 %v832, 4294901760
    %3015 = vmatprep.mubr.f32.mxu0 %v3014
    %v3016 = vand.u32 %v831, 4294901760
    %3017 = vmatmul.mubr.f32.gmra.mrb[0].mxu0 %v3016
    %v3018 = vpop.f32.mrb[0].mxu0
    %v3019 = vadd.f32 %v2762, %v3018
    %v3020 = vpop.f32.mrb[0].mxu0
    %v3021 = vadd.f32 %v2764, %v3020
    %v3022 = vand.u32 %v834, 4294901760
    %3023 = vmatprep.mubr.f32.mxu0 %v3022
    %v3024 = vand.u32 %v833, 4294901760
    %3025 = vmatmul.mubr.f32.gmra.mrb[0].mxu0 %v3024
    %v3026 = vpop.f32.mrb[0].mxu0
    %v3027 = vadd.f32 %v2770, %v3026
    %v3028 = vpop.f32.mrb[0].mxu0
    %v3029 = vadd.f32 %v2772, %v3028
    %v3030 = vand.u32 %v836, 4294901760
    %3031 = vmatprep.mubr.f32.mxu0 %v3030
    %v3032 = vand.u32 %v835, 4294901760
    %3033 = vmatmul.mubr.f32.gmra.mrb[0].mxu0 %v3032
    %v3034 = vpop.f32.mrb[0].mxu0
    %v3035 = vadd.f32 %v2778, %v3034
    %v3036 = vpop.f32.mrb[0].mxu0
    %v3037 = vadd.f32 %v2780, %v3036
    %v3038 = vand.u32 %v838, 4294901760
    %3039 = vmatprep.mubr.f32.mxu0 %v3038
    %v3040 = vand.u32 %v837, 4294901760
    %3041 = vmatmul.mubr.f32.gmra.mrb[0].mxu0 %v3040
    %v3042 = vpop.f32.mrb[0].mxu0
    %v3043 = vadd.f32 %v2786, %v3042
    %v3044 = vpop.f32.mrb[0].mxu0
    %v3045 = vadd.f32 %v2788, %v3044
    %v3046 = vand.u32 %v840, 4294901760
    %3047 = vmatprep.mubr.f32.mxu0 %v3046
    %v3048 = vand.u32 %v839, 4294901760
    %3049 = vmatmul.mubr.f32.gmra.mrb[0].mxu0 %v3048
    %v3050 = vpop.f32.mrb[0].mxu0
    %v3051 = vadd.f32 %v2794, %v3050
    %v3052 = vpop.f32.mrb[0].mxu0
    %v3053 = vadd.f32 %v2796, %v3052
    %3054 = vdwg.mxu0
    %v3055 = vand.u32 2147483647, %v2931
    %v3056 = vand.u32 2147483647, %v2933
    %v3057 = vand.u32 2147483647, %v2939
    %v3058 = vand.u32 2147483647, %v2941
    %v3059 = vand.u32 2147483647, %v2947
    %v3060 = vand.u32 2147483647, %v2949
    %v3061 = vand.u32 2147483647, %v2955
    %v3062 = vand.u32 2147483647, %v2957
    %v3063 = vand.u32 2147483647, %v2963
    %v3064 = vand.u32 2147483647, %v2965
    %v3065 = vand.u32 2147483647, %v2971
    %v3066 = vand.u32 2147483647, %v2973
    %v3067 = vand.u32 2147483647, %v2979
    %v3068 = vand.u32 2147483647, %v2981
    %v3069 = vand.u32 2147483647, %v2987
    %v3070 = vand.u32 2147483647, %v2989
    %v3071 = vand.u32 2147483647, %v2995
    %v3072 = vand.u32 2147483647, %v2997
    %v3073 = vand.u32 2147483647, %v3003
    %v3074 = vand.u32 2147483647, %v3005
    %v3075 = vand.u32 2147483647, %v3011
    %v3076 = vand.u32 2147483647, %v3013
    %v3077 = vand.u32 2147483647, %v3019
    %v3078 = vand.u32 2147483647, %v3021
    %v3079 = vand.u32 2147483647, %v3027
    %v3080 = vand.u32 2147483647, %v3029
    %v3081 = vand.u32 2147483647, %v3035
    %v3082 = vand.u32 2147483647, %v3037
    %v3083 = vand.u32 2147483647, %v3043
    %v3084 = vand.u32 2147483647, %v3045
    %v3085 = vand.u32 2147483647, %v3051
    %v3086 = vand.u32 2147483647, %v3053
    %v3087 = vadd.f32 %v3055, %v3057
    %v3088 = vadd.f32 %v3087, %v3059
    %v3089 = vadd.f32 %v3088, %v3061
    %v3090 = vadd.f32 %v3089, %v3063
    %v3091 = vadd.f32 %v3090, %v3065
    %v3092 = vadd.f32 %v3091, %v3067
    %v3093 = vadd.f32 %v3092, %v3069
    %v3094 = vadd.f32 %v3093, %v3071
    %v3095 = vadd.f32 %v3094, %v3073
    %v3096 = vadd.f32 %v3095, %v3075
    %v3097 = vadd.f32 %v3096, %v3077
    %v3098 = vadd.f32 %v3097, %v3079
    %v3099 = vadd.f32 %v3098, %v3081
    %v3100 = vadd.f32 %v3099, %v3083
    %v3101 = vadd.f32 %v3100, %v3085
    %v3102 = vrot.slane %v3101, 4
    %v3103 = vadd.f32 %v3101, %v3102
    %v3104 = vrot.slane %v3103, 2
    %v3105 = vadd.f32 %v3103, %v3104
    %v3106 = vrot.slane %v3105, 1
    %v3107 = vadd.f32 %v3105, %v3106
    %v3108 = vadd.f32 %v3056, %v3058
    %v3109 = vadd.f32 %v3108, %v3060
    %v3110 = vadd.f32 %v3109, %v3062
    %v3111 = vadd.f32 %v3110, %v3064
    %v3112 = vadd.f32 %v3111, %v3066
    %v3113 = vadd.f32 %v3112, %v3068
    %v3114 = vadd.f32 %v3113, %v3070
    %v3115 = vadd.f32 %v3114, %v3072
    %v3116 = vadd.f32 %v3115, %v3074
    %v3117 = vadd.f32 %v3116, %v3076
    %v3118 = vadd.f32 %v3117, %v3078
    %v3119 = vadd.f32 %v3118, %v3080
    %v3120 = vadd.f32 %v3119, %v3082
    %v3121 = vadd.f32 %v3120, %v3084
    %v3122 = vadd.f32 %v3121, %v3086
    %v3123 = vrot.slane %v3122, 4
    %v3124 = vadd.f32 %v3122, %v3123
    %v3125 = vrot.slane %v3124, 2
    %v3126 = vadd.f32 %v3124, %v3125
    %v3127 = vrot.slane %v3126, 1
    %v3128 = vadd.f32 %v3126, %v3127
    %v3131 = vcombine.low %v3107, %v3128
    %v3133 = vunpack.c.l.s4 1966171168
    %v3134 = vunpack.c.0.s8 %v3133
    %v3135 = vlaneseq
    %v3136 = vshrl.u32 %v3135, 7
    %v3137 = vsub.s32 %v3134, %v3136
    %v3138 = vrot.slane %v3131, %v3137
    %v3140 = vunpack.c.l.s4 1966171168
    %v3141 = vunpack.c.0.s8 %v3140
    %v3142 = vlaneseq
    %v3143 = vshrl.u32 %v3142, 7
    %v3144 = vsub.s32 %v3141, %v3143
    %v3145 = vrot.slane %v3138, %v3144
    %v3147 = vlaneseq
    %vm3148 = vcmp.ge.s32.totalorder %v3147, 0
    %vm3149 = vcmp.lt.s32.totalorder %v3147, 256
    %vm3150 = vmand %vm3148, %vm3149
    %3151 = vst.msk [vmem:[#allocation7] sm:$0x3] %vm3150, %v3145
    // Predicated region
    $region26: #{tpu_custom_call.1} parent=1 // pred_check
      _
    $region27: #{tpu_custom_call.1} parent=1 // pred_check_branch
      %3153 = sbr.rel (0) target = $region29
    $region28: #{tpu_custom_call.1} parent=1 // pred_region
      %s3155 = ssub.s32 32, 32
      %3156 = vsyncadd [#allocation4], %s3155
      %s3158 = sshll.u32 [#allocation7], 4
      %s3159 = int_to_ptr.vmem [resolvable:$true] %s3158
      %3161 = dma.vmem_to_hbm [thread:$0]  %s3159, 32, %s4, [#allocation4]
    $region29: #{tpu_custom_call.1} parent=1 // pred_fallthru
      _
    // Predicated region
    $region30: #{tpu_custom_call.1} parent=1 // pred_check
      _
    $region31: #{tpu_custom_call.1} parent=1 // pred_check_branch
      %3163 = sbr.rel (0) target = $region33
    $region32: #{tpu_custom_call.1} parent=1 // pred_region
      %3164 = dma.done [#allocation4], 32
    $region33: #{tpu_custom_call.1} parent=1 // pred_fallthru
      _
    %3165 = vsyncpa [#allocation3], 1
    %3166 = vsyncpa [#allocation6], 1
    %3167 = vsyncpa [#allocation4], 1

</llo_original>
